<compile_context>
chip_gen: v6e
topology: v6e:2x2x1
jax: 0.10.0
libtpu: 0.0.40
codegen_flags: <defaults>
</compile_context>

<pallas_src>
import functools

import jax
import jax.numpy as jnp
from jax.experimental import pallas as pl
from jax.experimental.pallas import tpu as pltpu

ALPHA = 50.0   # crf "self" weight
BETA = 1.0     # crf "neighbor" weight

# Safe on all generations: > v5e's 16 MiB / v6e-v7x's 32 MiB scoped defaults,
# < v7x's 64 MiB physical VMEM.
DEFAULT_VMEM_LIMIT = 48 * 1024 * 1024


def _pick_tile(dim, target, quantum):
    """Largest tile <= target that divides dim and is a multiple of quantum.
    Falls back to the full dim (always a legal block extent)."""
    if dim <= target:
        return dim
    start = target - (target % quantum)
    for t in range(start, 0, -quantum):
        if dim % t == 0:
            return t
    return dim


def _row_quantum(dtype):
    """Sublane quantum matched to the packed HBM storage dtype."""
    size = jnp.dtype(dtype).itemsize
    if size >= 4:
        return 8
    if size == 2:
        return 16
    return 32


# ---------------------------------------------------------------------------
# Stage 1: XW[s] = inputs @ weight[s]       ([M, D] @ [D, Os] per support)
# Contraction (D) kept fully resident by default -> no reduction axis/scratch.
# ---------------------------------------------------------------------------
def _xw_kernel_resident(x_ref, w_ref, xw_ref):
    # Per-tile casts in VMEM (inputs/weight stay f32 in HBM; both are small).
    xw_ref[0] = jnp.dot(x_ref[...].astype(jnp.bfloat16),
                        w_ref[0].astype(jnp.bfloat16),
                        preferred_element_type=jnp.float32).astype(xw_ref.dtype)


def _xw_kernel_acc(x_ref, w_ref, xw_ref, acc_ref):
    d = pl.program_id(2)

    @pl.when(d == 0)
    def _():
        acc_ref[...] = jnp.zeros_like(acc_ref)

    acc_ref[...] += jnp.dot(x_ref[...].astype(jnp.bfloat16),
                            w_ref[0].astype(jnp.bfloat16),
                            preferred_element_type=jnp.float32)

    @pl.when(d == pl.num_programs(2) - 1)
    def _():
        xw_ref[0] = acc_ref[...].astype(xw_ref.dtype)


def _xw(x, weight, *, tile_m_target=512, tile_d_target=4096,
        out_dtype=jnp.bfloat16, vmem_limit_bytes=DEFAULT_VMEM_LIMIT):
    M, D = x.shape
    S, D2, Os = weight.shape
    assert D == D2
    tile_m = _pick_tile(M, tile_m_target, _row_quantum(x.dtype))
    tile_d = D if D <= tile_d_target else _pick_tile(D, tile_d_target, 128)
    resident = (tile_d == D)

    if resident:
        grid = (S, M // tile_m)
        in_specs = [
            pl.BlockSpec((tile_m, D), lambda s, m: (m, 0)),
            pl.BlockSpec((1, D, Os), lambda s, m: (s, 0, 0)),
        ]
        out_specs = pl.BlockSpec((1, tile_m, Os), lambda s, m: (s, m, 0))
        kernel = _xw_kernel_resident
        scratch = []
        semantics = ("parallel", "parallel")
    else:
        grid = (S, M // tile_m, D // tile_d)
        in_specs = [
            pl.BlockSpec((tile_m, tile_d), lambda s, m, d: (m, d)),
            pl.BlockSpec((1, tile_d, Os), lambda s, m, d: (s, d, 0)),
        ]
        out_specs = pl.BlockSpec((1, tile_m, Os), lambda s, m, d: (s, m, 0))
        kernel = _xw_kernel_acc
        scratch = [pltpu.VMEM((tile_m, Os), jnp.float32)]
        semantics = ("parallel", "parallel", "arbitrary")

    return pl.pallas_call(
        kernel,
        out_shape=jax.ShapeDtypeStruct((S, M, Os), out_dtype),
        grid=grid,
        in_specs=in_specs,
        out_specs=out_specs,
        scratch_shapes=scratch,
        compiler_params=pltpu.CompilerParams(
            dimension_semantics=semantics,
            vmem_limit_bytes=vmem_limit_bytes,
        ),
    )(x, weight)


# ---------------------------------------------------------------------------
# Stage 2: H[:, s*Os:(s+1)*Os] = supports[s] @ XW[s]   (lane-dense output slab)
# The supports tile is cast to bf16 *inside* the kernel, so whatever dtype the
# caller stores them in (f32 / bf16 / int8 / float8) is read from HBM exactly
# once.  A second lane-dense output carries per-row-tile partial column sums
# (for the CRF epilogue) so H never has to be re-read from HBM for the colsum.
# ---------------------------------------------------------------------------
def _spmm_kernel_resident(a_ref, xw_ref, h_ref, csum_ref):
    acc = jnp.dot(a_ref[0].astype(jnp.bfloat16), xw_ref[0],
                  preferred_element_type=jnp.float32)
    h_ref[...] = acc.astype(h_ref.dtype)
    csum_ref[...] = jnp.broadcast_to(
        jnp.sum(acc, axis=0, keepdims=True), csum_ref.shape)


def _spmm_kernel_acc(a_ref, xw_ref, h_ref, csum_ref, acc_ref):
    k = pl.program_id(2)

    @pl.when(k == 0)
    def _():
        acc_ref[...] = jnp.zeros_like(acc_ref)

    acc_ref[...] += jnp.dot(a_ref[0].astype(jnp.bfloat16), xw_ref[0],
                            preferred_element_type=jnp.float32)

    @pl.when(k == pl.num_programs(2) - 1)
    def _():
        acc = acc_ref[...]
        h_ref[...] = acc.astype(h_ref.dtype)
        csum_ref[...] = jnp.broadcast_to(
            jnp.sum(acc, axis=0, keepdims=True), csum_ref.shape)


def _spmm(supports, xw, *, tile_r_target=512, tile_c_target=4096,
          vmem_limit_bytes=DEFAULT_VMEM_LIMIT):
    S, R, C = supports.shape
    S2, C2, Os = xw.shape
    assert S == S2 and C == C2
    assert Os % 128 == 0, "pad output_dim // num_support to a multiple of 128"
    tile_r = _pick_tile(R, tile_r_target, _row_quantum(supports.dtype))
    tile_c = C if C <= tile_c_target else _pick_tile(C, tile_c_target, 128)
    resident = (tile_c == C)
    n_row_tiles = R // tile_r

    h_shape = jax.ShapeDtypeStruct((R, S * Os), jnp.float32)
    csum_shape = jax.ShapeDtypeStruct((n_row_tiles * 8, S * Os), jnp.float32)

    if resident:
        grid = (S, n_row_tiles)
        in_specs = [
            pl.BlockSpec((1, tile_r, C), lambda s, i: (s, i, 0)),
            pl.BlockSpec((1, C, Os), lambda s, i: (s, 0, 0)),
        ]
        out_specs = (pl.BlockSpec((tile_r, Os), lambda s, i: (i, s)),
                     pl.BlockSpec((8, Os), lambda s, i: (i, s)))
        kernel = _spmm_kernel_resident
        scratch = []
        semantics = ("parallel", "parallel")
    else:
        grid = (S, n_row_tiles, C // tile_c)
        in_specs = [
            pl.BlockSpec((1, tile_r, tile_c), lambda s, i, k: (s, i, k)),
            pl.BlockSpec((1, tile_c, Os), lambda s, i, k: (s, k, 0)),
        ]
        out_specs = (pl.BlockSpec((tile_r, Os), lambda s, i, k: (i, s)),
                     pl.BlockSpec((8, Os), lambda s, i, k: (i, s)))
        kernel = _spmm_kernel_acc
        scratch = [pltpu.VMEM((tile_r, Os), jnp.float32)]
        semantics = ("parallel", "parallel", "arbitrary")

    h, csum_partial = pl.pallas_call(
        kernel,
        out_shape=(h_shape, csum_shape),
        grid=grid,
        in_specs=in_specs,
        out_specs=out_specs,
        scratch_shapes=scratch,
        compiler_params=pltpu.CompilerParams(
            dimension_semantics=semantics,
            vmem_limit_bytes=vmem_limit_bytes,
        ),
    )(supports, xw)

    # All 8 rows of each row-tile group carry the same partial; pick row 0 of
    # each group and reduce the (tiny) stack of partials.
    colsum = jnp.sum(
        csum_partial.reshape(n_row_tiles, 8, S * Os)[:, 0, :],
        axis=0, keepdims=True)
    return h, colsum


# ---------------------------------------------------------------------------
# Stage 3: fused CRF closed form + ReLU epilogue over the lane-dense slab
#   out = relu((beta * colsum(H) + alpha * H) / (beta * N + alpha))
# ---------------------------------------------------------------------------
def _crf_relu_kernel(h_ref, colsum_ref, o_ref, *, alpha, beta, inv_const):
    crf = (beta * colsum_ref[...] + alpha * h_ref[...]) * inv_const
    o_ref[...] = jnp.maximum(crf, 0.0).astype(o_ref.dtype)


def _crf_relu(h, colsum, *, alpha, beta, tile_r_target=512,
              out_dtype=jnp.float32, vmem_limit_bytes=DEFAULT_VMEM_LIMIT):
    R, O = h.shape
    tile_r = _pick_tile(R, tile_r_target, 8)
    inv_const = 1.0 / (float(beta) * R + float(alpha))   # compile-time constant
    kernel = functools.partial(_crf_relu_kernel, alpha=float(alpha),
                               beta=float(beta), inv_const=inv_const)
    return pl.pallas_call(
        kernel,
        out_shape=jax.ShapeDtypeStruct((R, O), out_dtype),
        grid=(R // tile_r,),
        in_specs=[
            pl.BlockSpec((tile_r, O), lambda i: (i, 0)),
            pl.BlockSpec((1, O), lambda i: (0, 0)),
        ],
        out_specs=pl.BlockSpec((tile_r, O), lambda i: (i, 0)),
        compiler_params=pltpu.CompilerParams(
            dimension_semantics=("parallel",),
            vmem_limit_bytes=vmem_limit_bytes,
        ),
    )(h, colsum)


# ---------------------------------------------------------------------------
# Full forward (matches StackGCNEncoder.forward; use_bias handled via kwargs)
# ---------------------------------------------------------------------------
def stack_gcn_encoder_forward(user_supports, item_supports, user_inputs,
                              item_inputs, weight,
                              user_bias=None, item_bias=None,
                              alpha=ALPHA, beta=BETA,
                              vmem_limit_bytes=DEFAULT_VMEM_LIMIT):
    S, D, Os = weight.shape

    # Guarantee the lane-dense Stage-2 output (unmasked vst): pad the per-
    # support output width up to a multiple of 128; slice padding off at end.
    os_pad = max(128, ((Os + 127) // 128) * 128)
    if os_pad != Os:
        weight = jnp.pad(weight, ((0, 0), (0, 0), (0, os_pad - Os)))

    # Stage 1 (FLOP-cheap, right-associated order); bf16 outputs feed Stage 2.
    xw_user = _xw(user_inputs, weight, vmem_limit_bytes=vmem_limit_bytes)
    xw_item = _xw(item_inputs, weight, vmem_limit_bytes=vmem_limit_bytes)

    # Stage 2: the dominant, HBM-bound matmuls.  Supports are consumed at their
    # HBM storage dtype (f32 / bf16 / int8 on v5e-v6e / float8_e4m3 on v7x) and
    # cast to bf16 per tile inside the kernel; partial colsums come out fused.
    h_user, colsum_user = _spmm(user_supports, xw_item,
                                vmem_limit_bytes=vmem_limit_bytes)
    h_item, colsum_item = _spmm(item_supports, xw_user,
                                vmem_limit_bytes=vmem_limit_bytes)

    # Stage 3: fused CRF closed form + ReLU.
    user_out = _crf_relu(h_user, colsum_user, alpha=alpha, beta=beta,
                         vmem_limit_bytes=vmem_limit_bytes)
    item_out = _crf_relu(h_item, colsum_item, alpha=alpha, beta=beta,
                         vmem_limit_bytes=vmem_limit_bytes)

    if os_pad != Os:
        U = user_out.shape[0]
        M = item_out.shape[0]
        user_out = user_out.reshape(U, S, os_pad)[:, :, :Os].reshape(U, S * Os)
        item_out = item_out.reshape(M, S, os_pad)[:, :, :Os].reshape(M, S * Os)

    # Module adds bias *after* the activation (use_bias=False by default).
    if user_bias is not None:
        user_out = user_out + user_bias
    if item_bias is not None:
        item_out = item_out + item_bias
    return user_out, item_out


# ---------------------------------------------------------------------------
# Pure-JAX reference (same bf16 operands, f32 accumulation) for self-check.
# ---------------------------------------------------------------------------
def _reference_forward(user_supports, item_supports, user_inputs, item_inputs,
                       weight, alpha=ALPHA, beta=BETA):
    cd = jnp.bfloat16
    w = weight.astype(cd)
    xw_u = jnp.einsum("ud,sdo->suo", user_inputs.astype(cd), w,
                      preferred_element_type=jnp.float32).astype(cd)
    xw_i = jnp.einsum("md,sdo->smo", item_inputs.astype(cd), w,
                      preferred_element_type=jnp.float32).astype(cd)
    h_u = jnp.einsum("sum,smo->suo", user_supports.astype(cd), xw_i,
                     preferred_element_type=jnp.float32)
    h_i = jnp.einsum("smu,suo->smo", item_supports.astype(cd), xw_u,
                     preferred_element_type=jnp.float32)

    def crf_cat_relu(h):                          # h: [S, N, Os]
        n = h.shape[1]
        colsum = jnp.sum(h, axis=1, keepdims=True)
        out = (beta * colsum + alpha * h) / (beta * n + alpha)
        out = jnp.transpose(out, (1, 0, 2)).reshape(n, -1)  # cat over supports
        return jnp.maximum(out, 0.0)

    return crf_cat_relu(h_u), crf_cat_relu(h_i)


if __name__ == "__main__":
    key = jax.random.PRNGKey(0)
    k0, k1, k2, k3, k4 = jax.random.split(key, 5)

    num_user, num_movie, input_dim, num_support = 256, 384, 128, 2

    user_inputs = jax.random.normal(k0, (num_user, input_dim), jnp.float32)
    item_inputs = jax.random.normal(k1, (num_movie, input_dim), jnp.float32)
    # Dense 0/1 stand-in for the per-rating sparse adjacency supports.
    support_mask = (jax.random.uniform(
        k3, (num_support, num_user, num_movie)) < 0.05)

    fwd = jax.jit(stack_gcn_encoder_forward)

    # --- Config A: f32 supports (module dtype), output_dim=256 (Os=128) -----
    out_dim_a = 256
    weight_a = 0.05 * jax.random.normal(
        k2, (num_support, input_dim, out_dim_a // num_support), jnp.float32)
    user_supports_a = support_mask.astype(jnp.float32)
    item_supports_a = jnp.transpose(user_supports_a, (0, 2, 1))

    uo_a, io_a = fwd(user_supports_a, item_supports_a,
                     user_inputs, item_inputs, weight_a)
    jax.block_until_ready((uo_a, io_a))
    ref_u, ref_i = _reference_forward(user_supports_a, item_supports_a,
                                      user_inputs, item_inputs, weight_a)
    err_a = max(float(jnp.max(jnp.abs(uo_a - ref_u))),
                float(jnp.max(jnp.abs(io_a - ref_i))))
    assert uo_a.shape == (num_user, out_dim_a)
    assert io_a.shape == (num_movie, out_dim_a)
    assert err_a < 1e-2, err_a

    # --- Config B: narrow-dtype (bf16) support storage + non-128 Os padding --
    # (0/1 values are exact in bf16; halves the dominant HBM read vs f32.
    #  int8 on v5e/v6e or float8_e4m3 on v7x plug into the same in-kernel cast.)
    out_dim_b = 192   # Os = 96 -> padded to 128 inside the wrapper
    weight_b = 0.05 * jax.random.normal(
        k4, (num_support, input_dim, out_dim_b // num_support), jnp.float32)
    user_supports_b = support_mask.astype(jnp.bfloat16)
    item_supports_b = jnp.transpose(user_supports_b, (0, 2, 1))

    uo_b, io_b = fwd(user_supports_b, item_supports_b,
                     user_inputs, item_inputs, weight_b)
    jax.block_until_ready((uo_b, io_b))
    ref_ub, ref_ib = _reference_forward(user_supports_b, item_supports_b,
                                        user_inputs, item_inputs, weight_b)
    err_b = max(float(jnp.max(jnp.abs(uo_b - ref_ub))),
                float(jnp.max(jnp.abs(io_b - ref_ib))))
    assert uo_b.shape == (num_user, out_dim_b)
    assert io_b.shape == (num_movie, out_dim_b)
    assert err_b < 1e-2, err_b

    print("KERNEL_OK")
</pallas_src>

<mosaic_0001>
module attributes {stable_mosaic.version = 11 : i64} {
  func.func @_spmm_kernel_resident(%arg0: i32, %arg1: i32, %arg2: memref<1x384x256xf32, #tpu.memory_space<vmem>>, %arg3: memref<1x256x128xbf16, #tpu.memory_space<vmem>>, %arg4: memref<384x128xf32, #tpu.memory_space<vmem>>, %arg5: memref<8x128xf32, #tpu.memory_space<vmem>>) attributes {dimension_semantics = [#tpu.dimension_semantics<parallel>, #tpu.dimension_semantics<parallel>], iteration_bounds = array<i64: 2, 1>, scalar_prefetch = 0 : i64, scratch_operands = 0 : i64, tpu.core_type = #tpu.core_type<tc>, window_params = [{transform_indices = @transform_0, window_bounds = array<i64: 1, 384, 256>}, {transform_indices = @transform_1, window_bounds = array<i64: 1, 256, 128>}, {transform_indices = @transform_2, window_bounds = array<i64: 384, 128>}, {transform_indices = @transform_3, window_bounds = array<i64: 8, 128>}]} {
    %c0 = arith.constant 0 : index
    %c0_0 = arith.constant 0 : index
    %c0_1 = arith.constant 0 : index
    %0 = vector.load %arg2[%c0, %c0_0, %c0_1] : memref<1x384x256xf32, #tpu.memory_space<vmem>>, vector<1x384x256xf32>
    %1 = vector.shape_cast %0 : vector<1x384x256xf32> to vector<384x256xf32>
    %2 = arith.truncf %1 : vector<384x256xf32> to vector<384x256xbf16>
    %c0_2 = arith.constant 0 : index
    %c0_3 = arith.constant 0 : index
    %c0_4 = arith.constant 0 : index
    %3 = vector.load %arg3[%c0_2, %c0_3, %c0_4] : memref<1x256x128xbf16, #tpu.memory_space<vmem>>, vector<1x256x128xbf16>
    %4 = vector.shape_cast %3 : vector<1x256x128xbf16> to vector<256x128xbf16>
    %cst = arith.constant dense<0.000000e+00> : vector<384x128xf32>
    %5 = tpu.matmul %2, %4, %cst {dimension_numbers = #tpu.dot_dimension_numbers<[1], [0], [0], [1], [0, 0, 1, 1], [], []>} : vector<384x256xbf16>, vector<256x128xbf16>, vector<384x128xf32> -> vector<384x128xf32>
    %c0_5 = arith.constant 0 : index
    %c0_6 = arith.constant 0 : index
    %6 = vector.load %arg4[%c0_5, %c0_6] : memref<384x128xf32, #tpu.memory_space<vmem>>, vector<384x128xf32>
    tpu.vector_store %arg4[%c0_5, %c0_6], %5 {strides = array<i32>} : memref<384x128xf32, #tpu.memory_space<vmem>>, vector<384x128xf32>,
    %cst_7 = arith.constant dense<0.000000e+00> : vector<128xf32>
    %7 = vector.multi_reduction <add>, %5, %cst_7 [0] : vector<384x128xf32> to vector<128xf32>
    %8 = vector.shape_cast %7 : vector<128xf32> to vector<1x128xf32>
    %9 = vector.shape_cast %8 : vector<1x128xf32> to vector<1x128xf32>
    %10 = vector.broadcast %9 : vector<1x128xf32> to vector<8x128xf32>
    %c0_8 = arith.constant 0 : index
    %c0_9 = arith.constant 0 : index
    %11 = vector.load %arg5[%c0_8, %c0_9] : memref<8x128xf32, #tpu.memory_space<vmem>>, vector<8x128xf32>
    tpu.vector_store %arg5[%c0_8, %c0_9], %10 {strides = array<i32>} : memref<8x128xf32, #tpu.memory_space<vmem>>, vector<8x128xf32>,
    return
  }
  func.func @transform_0(%arg0: i32, %arg1: i32) -> (i32, i32, i32) {
    %c0_i32 = arith.constant 0 : i32
    %c0_i32_0 = arith.constant 0 : i32
    return %arg0, %arg1, %c0_i32 : i32, i32, i32
  }
  func.func @transform_1(%arg0: i32, %arg1: i32) -> (i32, i32, i32) {
    %c0_i32 = arith.constant 0 : i32
    %c0_i32_0 = arith.constant 0 : i32
    %c0_i32_1 = arith.constant 0 : i32
    return %arg0, %c0_i32, %c0_i32_0 : i32, i32, i32
  }
  func.func @transform_2(%arg0: i32, %arg1: i32) -> (i32, i32) {
    %c0_i32 = arith.constant 0 : i32
    return %arg1, %arg0 : i32, i32
  }
  func.func @transform_3(%arg0: i32, %arg1: i32) -> (i32, i32) {
    %c0_i32 = arith.constant 0 : i32
    return %arg1, %arg0 : i32, i32
  }
}

module attributes {stable_mosaic.version = 11 : i64} {
  func.func @_xw_kernel_resident(%arg0: i32, %arg1: i32, %arg2: memref<256x128xf32, #tpu.memory_space<vmem>>, %arg3: memref<1x128x128xf32, #tpu.memory_space<vmem>>, %arg4: memref<1x256x128xbf16, #tpu.memory_space<vmem>>) attributes {dimension_semantics = [#tpu.dimension_semantics<parallel>, #tpu.dimension_semantics<parallel>], iteration_bounds = array<i64: 2, 1>, scalar_prefetch = 0 : i64, scratch_operands = 0 : i64, tpu.core_type = #tpu.core_type<tc>, window_params = [{transform_indices = @transform_0, window_bounds = array<i64: 256, 128>}, {transform_indices = @transform_1, window_bounds = array<i64: 1, 128, 128>}, {transform_indices = @transform_2, window_bounds = array<i64: 1, 256, 128>}]} {
    %c0 = arith.constant 0 : index
    %c0_0 = arith.constant 0 : index
    %0 = vector.load %arg2[%c0, %c0_0] : memref<256x128xf32, #tpu.memory_space<vmem>>, vector<256x128xf32>
    %1 = arith.truncf %0 : vector<256x128xf32> to vector<256x128xbf16>
    %c0_1 = arith.constant 0 : index
    %c0_2 = arith.constant 0 : index
    %c0_3 = arith.constant 0 : index
    %2 = vector.load %arg3[%c0_1, %c0_2, %c0_3] : memref<1x128x128xf32, #tpu.memory_space<vmem>>, vector<1x128x128xf32>
    %3 = vector.shape_cast %2 : vector<1x128x128xf32> to vector<128x128xf32>
    %4 = arith.truncf %3 : vector<128x128xf32> to vector<128x128xbf16>
    %cst = arith.constant dense<0.000000e+00> : vector<256x128xf32>
    %5 = tpu.matmul %1, %4, %cst {dimension_numbers = #tpu.dot_dimension_numbers<[1], [0], [0], [1], [0, 0, 1, 1], [], []>} : vector<256x128xbf16>, vector<128x128xbf16>, vector<256x128xf32> -> vector<256x128xf32>
    %6 = arith.truncf %5 : vector<256x128xf32> to vector<256x128xbf16>
    %c0_4 = arith.constant 0 : index
    %c0_5 = arith.constant 0 : index
    %c0_6 = arith.constant 0 : index
    %7 = vector.load %arg4[%c0_4, %c0_5, %c0_6] : memref<1x256x128xbf16, #tpu.memory_space<vmem>>, vector<1x256x128xbf16>
    %8 = vector.shape_cast %7 : vector<1x256x128xbf16> to vector<256x128xbf16>
    %9 = vector.shape_cast %6 : vector<256x128xbf16> to vector<1x256x128xbf16>
    tpu.vector_store %arg4[%c0_4, %c0_5, %c0_6], %9 {strides = array<i32>} : memref<1x256x128xbf16, #tpu.memory_space<vmem>>, vector<1x256x128xbf16>,
    return
  }
  func.func @transform_0(%arg0: i32, %arg1: i32) -> (i32, i32) {
    %c0_i32 = arith.constant 0 : i32
    %c0_i32_0 = arith.constant 0 : i32
    return %arg1, %c0_i32 : i32, i32
  }
  func.func @transform_1(%arg0: i32, %arg1: i32) -> (i32, i32, i32) {
    %c0_i32 = arith.constant 0 : i32
    %c0_i32_0 = arith.constant 0 : i32
    %c0_i32_1 = arith.constant 0 : i32
    return %arg0, %c0_i32, %c0_i32_0 : i32, i32, i32
  }
  func.func @transform_2(%arg0: i32, %arg1: i32) -> (i32, i32, i32) {
    %c0_i32 = arith.constant 0 : i32
    %c0_i32_0 = arith.constant 0 : i32
    return %arg0, %arg1, %c0_i32 : i32, i32, i32
  }
}

module attributes {stable_mosaic.version = 11 : i64} {
  func.func @_crf_relu_kernel(%arg0: i32, %arg1: memref<384x256xf32, #tpu.memory_space<vmem>>, %arg2: memref<1x256xf32, #tpu.memory_space<vmem>>, %arg3: memref<384x256xf32, #tpu.memory_space<vmem>>) attributes {dimension_semantics = [#tpu.dimension_semantics<parallel>], iteration_bounds = array<i64: 1>, scalar_prefetch = 0 : i64, scratch_operands = 0 : i64, tpu.core_type = #tpu.core_type<tc>, window_params = [{transform_indices = @transform_0, window_bounds = array<i64: 384, 256>}, {pipeline_mode = #tpu.pipeline_mode<synchronous>, transform_indices = @transform_1, window_bounds = array<i64: 1, 256>}, {transform_indices = @transform_2, window_bounds = array<i64: 384, 256>}]} {
    %c0 = arith.constant 0 : index
    %c0_0 = arith.constant 0 : index
    %0 = vector.load %arg2[%c0, %c0_0] : memref<1x256xf32, #tpu.memory_space<vmem>>, vector<1x256xf32>
    %cst = arith.constant 1.000000e+00 : f32
    %1 = vector.broadcast %cst : f32 to vector<1x256xf32>
    %2 = arith.mulf %1, %0 : vector<1x256xf32>
    %c0_1 = arith.constant 0 : index
    %c0_2 = arith.constant 0 : index
    %3 = vector.load %arg1[%c0_1, %c0_2] : memref<384x256xf32, #tpu.memory_space<vmem>>, vector<384x256xf32>
    %cst_3 = arith.constant 5.000000e+01 : f32
    %4 = vector.broadcast %cst_3 : f32 to vector<384x256xf32>
    %5 = arith.mulf %4, %3 : vector<384x256xf32>
    %6 = vector.broadcast %2 : vector<1x256xf32> to vector<384x256xf32>
    %7 = arith.addf %6, %5 : vector<384x256xf32>
    %cst_4 = arith.constant 0.00230414746 : f32
    %8 = vector.broadcast %cst_4 : f32 to vector<384x256xf32>
    %9 = arith.mulf %7, %8 : vector<384x256xf32>
    %cst_5 = arith.constant 0.000000e+00 : f32
    %10 = vector.broadcast %cst_5 : f32 to vector<384x256xf32>
    %11 = arith.maximumf %9, %10 : vector<384x256xf32>
    %c0_6 = arith.constant 0 : index
    %c0_7 = arith.constant 0 : index
    %12 = vector.load %arg3[%c0_6, %c0_7] : memref<384x256xf32, #tpu.memory_space<vmem>>, vector<384x256xf32>
    tpu.vector_store %arg3[%c0_6, %c0_7], %11 {strides = array<i32>} : memref<384x256xf32, #tpu.memory_space<vmem>>, vector<384x256xf32>,
    return
  }
  func.func @transform_0(%arg0: i32) -> (i32, i32) {
    %c0_i32 = arith.constant 0 : i32
    %c0_i32_0 = arith.constant 0 : i32
    return %arg0, %c0_i32 : i32, i32
  }
  func.func @transform_1(%arg0: i32) -> (i32, i32) {
    %c0_i32 = arith.constant 0 : i32
    %c0_i32_0 = arith.constant 0 : i32
    %c0_i32_1 = arith.constant 0 : i32
    return %c0_i32, %c0_i32_0 : i32, i32
  }
  func.func @transform_2(%arg0: i32) -> (i32, i32) {
    %c0_i32 = arith.constant 0 : i32
    %c0_i32_0 = arith.constant 0 : i32
    return %arg0, %c0_i32 : i32, i32
  }
}

module attributes {stable_mosaic.version = 11 : i64} {
  func.func @_xw_kernel_resident(%arg0: i32, %arg1: i32, %arg2: memref<384x128xf32, #tpu.memory_space<vmem>>, %arg3: memref<1x128x128xf32, #tpu.memory_space<vmem>>, %arg4: memref<1x384x128xbf16, #tpu.memory_space<vmem>>) attributes {dimension_semantics = [#tpu.dimension_semantics<parallel>, #tpu.dimension_semantics<parallel>], iteration_bounds = array<i64: 2, 1>, scalar_prefetch = 0 : i64, scratch_operands = 0 : i64, tpu.core_type = #tpu.core_type<tc>, window_params = [{transform_indices = @transform_0, window_bounds = array<i64: 384, 128>}, {transform_indices = @transform_1, window_bounds = array<i64: 1, 128, 128>}, {transform_indices = @transform_2, window_bounds = array<i64: 1, 384, 128>}]} {
    %c0 = arith.constant 0 : index
    %c0_0 = arith.constant 0 : index
    %0 = vector.load %arg2[%c0, %c0_0] : memref<384x128xf32, #tpu.memory_space<vmem>>, vector<384x128xf32>
    %1 = arith.truncf %0 : vector<384x128xf32> to vector<384x128xbf16>
    %c0_1 = arith.constant 0 : index
    %c0_2 = arith.constant 0 : index
    %c0_3 = arith.constant 0 : index
    %2 = vector.load %arg3[%c0_1, %c0_2, %c0_3] : memref<1x128x128xf32, #tpu.memory_space<vmem>>, vector<1x128x128xf32>
    %3 = vector.shape_cast %2 : vector<1x128x128xf32> to vector<128x128xf32>
    %4 = arith.truncf %3 : vector<128x128xf32> to vector<128x128xbf16>
    %cst = arith.constant dense<0.000000e+00> : vector<384x128xf32>
    %5 = tpu.matmul %1, %4, %cst {dimension_numbers = #tpu.dot_dimension_numbers<[1], [0], [0], [1], [0, 0, 1, 1], [], []>} : vector<384x128xbf16>, vector<128x128xbf16>, vector<384x128xf32> -> vector<384x128xf32>
    %6 = arith.truncf %5 : vector<384x128xf32> to vector<384x128xbf16>
    %c0_4 = arith.constant 0 : index
    %c0_5 = arith.constant 0 : index
    %c0_6 = arith.constant 0 : index
    %7 = vector.load %arg4[%c0_4, %c0_5, %c0_6] : memref<1x384x128xbf16, #tpu.memory_space<vmem>>, vector<1x384x128xbf16>
    %8 = vector.shape_cast %7 : vector<1x384x128xbf16> to vector<384x128xbf16>
    %9 = vector.shape_cast %6 : vector<384x128xbf16> to vector<1x384x128xbf16>
    tpu.vector_store %arg4[%c0_4, %c0_5, %c0_6], %9 {strides = array<i32>} : memref<1x384x128xbf16, #tpu.memory_space<vmem>>, vector<1x384x128xbf16>,
    return
  }
  func.func @transform_0(%arg0: i32, %arg1: i32) -> (i32, i32) {
    %c0_i32 = arith.constant 0 : i32
    %c0_i32_0 = arith.constant 0 : i32
    return %arg1, %c0_i32 : i32, i32
  }
  func.func @transform_1(%arg0: i32, %arg1: i32) -> (i32, i32, i32) {
    %c0_i32 = arith.constant 0 : i32
    %c0_i32_0 = arith.constant 0 : i32
    %c0_i32_1 = arith.constant 0 : i32
    return %arg0, %c0_i32, %c0_i32_0 : i32, i32, i32
  }
  func.func @transform_2(%arg0: i32, %arg1: i32) -> (i32, i32, i32) {
    %c0_i32 = arith.constant 0 : i32
    %c0_i32_0 = arith.constant 0 : i32
    return %arg0, %arg1, %c0_i32 : i32, i32, i32
  }
}

module attributes {stable_mosaic.version = 11 : i64} {
  func.func @_spmm_kernel_resident(%arg0: i32, %arg1: i32, %arg2: memref<1x256x384xf32, #tpu.memory_space<vmem>>, %arg3: memref<1x384x128xbf16, #tpu.memory_space<vmem>>, %arg4: memref<256x128xf32, #tpu.memory_space<vmem>>, %arg5: memref<8x128xf32, #tpu.memory_space<vmem>>) attributes {dimension_semantics = [#tpu.dimension_semantics<parallel>, #tpu.dimension_semantics<parallel>], iteration_bounds = array<i64: 2, 1>, scalar_prefetch = 0 : i64, scratch_operands = 0 : i64, tpu.core_type = #tpu.core_type<tc>, window_params = [{transform_indices = @transform_0, window_bounds = array<i64: 1, 256, 384>}, {transform_indices = @transform_1, window_bounds = array<i64: 1, 384, 128>}, {transform_indices = @transform_2, window_bounds = array<i64: 256, 128>}, {transform_indices = @transform_3, window_bounds = array<i64: 8, 128>}]} {
    %c0 = arith.constant 0 : index
    %c0_0 = arith.constant 0 : index
    %c0_1 = arith.constant 0 : index
    %0 = vector.load %arg2[%c0, %c0_0, %c0_1] : memref<1x256x384xf32, #tpu.memory_space<vmem>>, vector<1x256x384xf32>
    %1 = vector.shape_cast %0 : vector<1x256x384xf32> to vector<256x384xf32>
    %2 = arith.truncf %1 : vector<256x384xf32> to vector<256x384xbf16>
    %c0_2 = arith.constant 0 : index
    %c0_3 = arith.constant 0 : index
    %c0_4 = arith.constant 0 : index
    %3 = vector.load %arg3[%c0_2, %c0_3, %c0_4] : memref<1x384x128xbf16, #tpu.memory_space<vmem>>, vector<1x384x128xbf16>
    %4 = vector.shape_cast %3 : vector<1x384x128xbf16> to vector<384x128xbf16>
    %cst = arith.constant dense<0.000000e+00> : vector<256x128xf32>
    %5 = tpu.matmul %2, %4, %cst {dimension_numbers = #tpu.dot_dimension_numbers<[1], [0], [0], [1], [0, 0, 1, 1], [], []>} : vector<256x384xbf16>, vector<384x128xbf16>, vector<256x128xf32> -> vector<256x128xf32>
    %c0_5 = arith.constant 0 : index
    %c0_6 = arith.constant 0 : index
    %6 = vector.load %arg4[%c0_5, %c0_6] : memref<256x128xf32, #tpu.memory_space<vmem>>, vector<256x128xf32>
    tpu.vector_store %arg4[%c0_5, %c0_6], %5 {strides = array<i32>} : memref<256x128xf32, #tpu.memory_space<vmem>>, vector<256x128xf32>,
    %cst_7 = arith.constant dense<0.000000e+00> : vector<128xf32>
    %7 = vector.multi_reduction <add>, %5, %cst_7 [0] : vector<256x128xf32> to vector<128xf32>
    %8 = vector.shape_cast %7 : vector<128xf32> to vector<1x128xf32>
    %9 = vector.shape_cast %8 : vector<1x128xf32> to vector<1x128xf32>
    %10 = vector.broadcast %9 : vector<1x128xf32> to vector<8x128xf32>
    %c0_8 = arith.constant 0 : index
    %c0_9 = arith.constant 0 : index
    %11 = vector.load %arg5[%c0_8, %c0_9] : memref<8x128xf32, #tpu.memory_space<vmem>>, vector<8x128xf32>
    tpu.vector_store %arg5[%c0_8, %c0_9], %10 {strides = array<i32>} : memref<8x128xf32, #tpu.memory_space<vmem>>, vector<8x128xf32>,
    return
  }
  func.func @transform_0(%arg0: i32, %arg1: i32) -> (i32, i32, i32) {
    %c0_i32 = arith.constant 0 : i32
    %c0_i32_0 = arith.constant 0 : i32
    return %arg0, %arg1, %c0_i32 : i32, i32, i32
  }
  func.func @transform_1(%arg0: i32, %arg1: i32) -> (i32, i32, i32) {
    %c0_i32 = arith.constant 0 : i32
    %c0_i32_0 = arith.constant 0 : i32
    %c0_i32_1 = arith.constant 0 : i32
    return %arg0, %c0_i32, %c0_i32_0 : i32, i32, i32
  }
  func.func @transform_2(%arg0: i32, %arg1: i32) -> (i32, i32) {
    %c0_i32 = arith.constant 0 : i32
    return %arg1, %arg0 : i32, i32
  }
  func.func @transform_3(%arg0: i32, %arg1: i32) -> (i32, i32) {
    %c0_i32 = arith.constant 0 : i32
    return %arg1, %arg0 : i32, i32
  }
}

module attributes {stable_mosaic.version = 11 : i64} {
  func.func @_crf_relu_kernel(%arg0: i32, %arg1: memref<256x256xf32, #tpu.memory_space<vmem>>, %arg2: memref<1x256xf32, #tpu.memory_space<vmem>>, %arg3: memref<256x256xf32, #tpu.memory_space<vmem>>) attributes {dimension_semantics = [#tpu.dimension_semantics<parallel>], iteration_bounds = array<i64: 1>, scalar_prefetch = 0 : i64, scratch_operands = 0 : i64, tpu.core_type = #tpu.core_type<tc>, window_params = [{transform_indices = @transform_0, window_bounds = array<i64: 256, 256>}, {pipeline_mode = #tpu.pipeline_mode<synchronous>, transform_indices = @transform_1, window_bounds = array<i64: 1, 256>}, {transform_indices = @transform_2, window_bounds = array<i64: 256, 256>}]} {
    %c0 = arith.constant 0 : index
    %c0_0 = arith.constant 0 : index
    %0 = vector.load %arg2[%c0, %c0_0] : memref<1x256xf32, #tpu.memory_space<vmem>>, vector<1x256xf32>
    %cst = arith.constant 1.000000e+00 : f32
    %1 = vector.broadcast %cst : f32 to vector<1x256xf32>
    %2 = arith.mulf %1, %0 : vector<1x256xf32>
    %c0_1 = arith.constant 0 : index
    %c0_2 = arith.constant 0 : index
    %3 = vector.load %arg1[%c0_1, %c0_2] : memref<256x256xf32, #tpu.memory_space<vmem>>, vector<256x256xf32>
    %cst_3 = arith.constant 5.000000e+01 : f32
    %4 = vector.broadcast %cst_3 : f32 to vector<256x256xf32>
    %5 = arith.mulf %4, %3 : vector<256x256xf32>
    %6 = vector.broadcast %2 : vector<1x256xf32> to vector<256x256xf32>
    %7 = arith.addf %6, %5 : vector<256x256xf32>
    %cst_4 = arith.constant 0.00326797389 : f32
    %8 = vector.broadcast %cst_4 : f32 to vector<256x256xf32>
    %9 = arith.mulf %7, %8 : vector<256x256xf32>
    %cst_5 = arith.constant 0.000000e+00 : f32
    %10 = vector.broadcast %cst_5 : f32 to vector<256x256xf32>
    %11 = arith.maximumf %9, %10 : vector<256x256xf32>
    %c0_6 = arith.constant 0 : index
    %c0_7 = arith.constant 0 : index
    %12 = vector.load %arg3[%c0_6, %c0_7] : memref<256x256xf32, #tpu.memory_space<vmem>>, vector<256x256xf32>
    tpu.vector_store %arg3[%c0_6, %c0_7], %11 {strides = array<i32>} : memref<256x256xf32, #tpu.memory_space<vmem>>, vector<256x256xf32>,
    return
  }
  func.func @transform_0(%arg0: i32) -> (i32, i32) {
    %c0_i32 = arith.constant 0 : i32
    %c0_i32_0 = arith.constant 0 : i32
    return %arg0, %c0_i32 : i32, i32
  }
  func.func @transform_1(%arg0: i32) -> (i32, i32) {
    %c0_i32 = arith.constant 0 : i32
    %c0_i32_0 = arith.constant 0 : i32
    %c0_i32_1 = arith.constant 0 : i32
    return %c0_i32, %c0_i32_0 : i32, i32
  }
  func.func @transform_2(%arg0: i32) -> (i32, i32) {
    %c0_i32 = arith.constant 0 : i32
    %c0_i32_0 = arith.constant 0 : i32
    return %arg0, %c0_i32 : i32, i32
  }
}

</mosaic_0001>

<llo_original>
// kernel: stack_gcn_encoder_forward.6
$region0: #{stack_gcn_encoder_forward.6}
  #allocation0 [shape = 'u32[]', space=smem, size = 0x4, offset = 0x4, fixed_abs, tag = 'smem constant byte address 0x4 - core index']
  #allocation1 [shape = 'u32[144,128]{1,0:T(1,128)}', space=vmem, size = 0x12000, scoped, tag = 'internal scratch']
  %s0 = inlined_call_operand.hbm [shape: f32[256,128], index: 0, kind: input, shape index: {}]
  %s1 = inlined_call_operand.hbm [shape: f32[2,128,128], index: 1, kind: input, shape index: {}]
  %s2 = inlined_call_operand.vmem [shape: bf16[2,256,128], index: 2, kind: output, shape index: {}]
  %s3 = sld [smem:[#allocation0]]
  $region49: #{stack_gcn_encoder_forward.6} parent=0
    _
  %s5 = ssub.s32 1, %s3
  %s6 = scalar_select 0, %s5, %s3
  $region1: #{stack_gcn_encoder_forward.6} parent=0
    #allocation2 [shape = 'u8[131072]{0}', space=vmem, size = 0x20000, scoped, tag = 'input window, operand 0, single buffered']
    #allocation3 [shape = 's32[2]{0}', space=sflag, size = 0x8, scoped, tag = 'scoped memory for stack_gcn_encoder_forward.6']
    #allocation4 [shape = 'u8[131072]{0}', space=vmem, size = 0x20000, scoped, tag = 'input window, operand 1']
    #allocation5 [shape = 's32[2]{0}', space=sflag, size = 0x8, scoped, tag = 'scoped memory for stack_gcn_encoder_forward.6']
    %7 = vsyncpa [#allocation3], 0
    %8 = vsyncpa [#allocation5], 0
    %s9 = scalar_lea.sflag [#allocation5], 1
    %10 = vsyncpa %s9, 0
    loop: start=0, step=1, limit=4
    $region2: #{stack_gcn_encoder_forward.6} parent=1 // loop_pre_header
      _
    $region3: #{stack_gcn_encoder_forward.6} parent=1 // loop_header
      %s12 = sphi 0, %s16
      %p13 = scmp.ge.s32.totalorder %s12, 4
      %s19 = sphi 0, %s31
      %s20 = sphi 0, %s27
      %s21 = sphi 0, %s19
      %s22 = sphi 0, %s20
      %s23 = sphi 0, %s21
      %s24 = sphi 0, %s22
      %s34 = sphi 0, %s36
      %s37 = sphi 0, %s34
      %s38 = sphi 0, %s37
      %s54 = sphi 0, %s38
      %s60 = sphi 0, %s62
      %s63 = sphi 0, %s60
      %s64 = sphi 0, %s63
      %s80 = sphi 0, %s64
      %s88 = sphi 0, %s90
      %s91 = sphi 0, %s88
      %s92 = sphi 0, %s91
      %s108 = sphi 0, %s92
    $region4: #{stack_gcn_encoder_forward.6} parent=1 // loop_header_branch
      %15 = sbr.rel (%p13) target = $region8
    $region5: #{stack_gcn_encoder_forward.6} parent=1 // loop_body
      %s17 = ssub.s32 %s12, 1
      %s18 = ssub.s32 %s12, 2
      %s25 = sadd.s32 1, %s20
      %p26 = scmp.ge.s32.totalorder %s25, 1
      %s27 = scalar_select %p26, 0, %s25
      %s28 = sadd.s32 1, %s19
      %s29 = scalar_select %p26, %s28, %s19
      %p30 = scmp.ge.s32.totalorder %s29, 2
      %s31 = scalar_select %p30, 0, %s29
      %s32 = ssub.s32 %s20, %s27
      %p33 = scmp.eq.s32.totalorder %s32, 0
      %s35 = sadd.s32 %s34, 1
      %s36 = scalar_select %p33, %s34, %s35
      %p39 = pneg %p33
      %p40 = scmp.eq.s32.totalorder %s12, 1
      %p41 = por %p39, %p40
      %p42 = scmp.ne.s32.totalorder %s34, %s37
      %p43 = scmp.eq.s32.totalorder %s12, 0
      %p44 = por %p42, %p43
      %p45 = scmp.ne.s32.totalorder %s34, %s37
      %p46 = scmp.eq.s32.totalorder %s17, 1
      %p47 = por %p45, %p46
      %p48 = scmp.ne.s32.totalorder %s37, %s38
      %p49 = scmp.eq.s32.totalorder %s17, 0
      %p50 = por %p48, %p49
      %p51 = scmp.ne.s32.totalorder %s37, %s38
      %p52 = scmp.eq.s32.totalorder %s18, 1
      %p53 = por %p51, %p52
      %p55 = scmp.ne.s32.totalorder %s38, %s54
      %p56 = scmp.eq.s32.totalorder %s18, 0
      %p57 = por %p55, %p56
      %s58 = ssub.s32 %s19, %s31
      %p59 = scmp.eq.s32.totalorder %s58, 0
      %s61 = sadd.s32 %s60, 1
      %s62 = scalar_select %p59, %s60, %s61
      %p65 = pneg %p59
      %p66 = scmp.eq.s32.totalorder %s12, 1
      %p67 = por %p65, %p66
      %p68 = scmp.ne.s32.totalorder %s60, %s63
      %p69 = scmp.eq.s32.totalorder %s12, 0
      %p70 = por %p68, %p69
      %p71 = scmp.ne.s32.totalorder %s60, %s63
      %p72 = scmp.eq.s32.totalorder %s17, 1
      %p73 = por %p71, %p72
      %p74 = scmp.ne.s32.totalorder %s63, %s64
      %p75 = scmp.eq.s32.totalorder %s17, 0
      %p76 = por %p74, %p75
      %p77 = scmp.ne.s32.totalorder %s63, %s64
      %p78 = scmp.eq.s32.totalorder %s18, 1
      %p79 = por %p77, %p78
      %p81 = scmp.ne.s32.totalorder %s64, %s80
      %p82 = scmp.eq.s32.totalorder %s18, 0
      %p83 = por %p81, %p82
      %s84 = ssub.s32 %s19, %s31
      %s85 = ssub.s32 %s20, %s27
      %s86 = sor.u32 %s84, %s85
      %p87 = scmp.eq.s32.totalorder %s86, 0
      %s89 = sadd.s32 %s88, 1
      %s90 = scalar_select %p87, %s88, %s89
      %p93 = pneg %p87
      %p94 = scmp.eq.s32.totalorder %s12, 1
      %p95 = por %p93, %p94
      %p96 = scmp.ne.s32.totalorder %s88, %s91
      %p97 = scmp.eq.s32.totalorder %s12, 0
      %p98 = por %p96, %p97
      %p99 = scmp.ne.s32.totalorder %s88, %s91
      %p100 = scmp.eq.s32.totalorder %s17, 1
      %p101 = por %p99, %p100
      %p102 = scmp.ne.s32.totalorder %s91, %s92
      %p103 = scmp.eq.s32.totalorder %s17, 0
      %p104 = por %p102, %p103
      %p105 = scmp.ne.s32.totalorder %s91, %s92
      %p106 = scmp.eq.s32.totalorder %s18, 1
      %p107 = por %p105, %p106
      %p109 = scmp.ne.s32.totalorder %s92, %s108
      %p110 = scmp.eq.s32.totalorder %s18, 0
      %p111 = por %p109, %p110
      %p112 = scmp.le.s32.totalorder 1, %s12
      %p113 = scmp.lt.s32.totalorder %s12, 3
      %p114 = pnand %p112, %p113
      %p115 = pneg %p114
      // Predicated region
      $region9: #{stack_gcn_encoder_forward.6} parent=5 // pred_check
        _
      $region10: #{stack_gcn_encoder_forward.6} parent=5 // pred_check_branch
        %117 = sbr.rel (%p114) target = $region12
      $region11: #{stack_gcn_encoder_forward.6} parent=5 // pred_region
        %s118 = ssub.s32 %s12, 1
        // Predicated region
        $region13: #{stack_gcn_encoder_forward.6} parent=11 // pred_check
          %p119 = pneg %p50
        $region14: #{stack_gcn_encoder_forward.6} parent=11 // pred_check_branch
          %121 = sbr.rel (%p119) target = $region16
        $region15: #{stack_gcn_encoder_forward.6} parent=11 // pred_region
          %s122 = smul.u32 32, %s22
          %s124 = ssub.s32 4096, 4096
          %125 = vsyncadd [#allocation3], %s124
          %s126 = smul.addr %s122, 128
          %s127 = scalar_lea.hbm %s0, %s126
          %s128 = sshll.u32 [#allocation2], 4
          %s129 = int_to_ptr.vmem [resolvable:$true] %s128
          %134 = dma.hbm_to_vmem [thread:$0]  %s127, 4096, %s129, [#allocation3], 128, 128, 8
        $region16: #{stack_gcn_encoder_forward.6} parent=11 // pred_fallthru
          _
      $region12: #{stack_gcn_encoder_forward.6} parent=5 // pred_fallthru
        _
      %p135 = scmp.lt.s32.totalorder %s12, 2
      // Predicated region
      $region17: #{stack_gcn_encoder_forward.6} parent=5 // pred_check
        %p136 = pneg %p135
      $region18: #{stack_gcn_encoder_forward.6} parent=5 // pred_check_branch
        %138 = sbr.rel (%p136) target = $region20
      $region19: #{stack_gcn_encoder_forward.6} parent=5 // pred_region
        // Predicated region
        $region21: #{stack_gcn_encoder_forward.6} parent=19 // pred_check
          %p139 = pneg %p70
        $region22: #{stack_gcn_encoder_forward.6} parent=19 // pred_check_branch
          %141 = sbr.rel (%p139) target = $region24
        $region23: #{stack_gcn_encoder_forward.6} parent=19 // pred_region
          %s142 = sand.u32 %s60, 1
          %s143 = scalar_lea.sflag [#allocation5], %s142
          %s144 = sand.u32 %s60, 1
          %s145 = smul.addr %s144, 128
          %s146 = scalar_lea.vmem [#allocation4], %s145
          %s148 = ssub.s32 2048, 2048
          %149 = vsyncadd %s143, %s148
          %s150 = smul.addr %s19, 16
          %s151 = smul.addr %s150, 128
          %s152 = scalar_lea.hbm %s1, %s151
          %s153 = sshll.u32 %s146, 4
          %s154 = int_to_ptr.vmem [resolvable:$true] %s153
          %159 = dma.hbm_to_vmem [thread:$0]  %s152, 2048, %s154, %s143, 128, 128, 8
        $region24: #{stack_gcn_encoder_forward.6} parent=19 // pred_fallthru
          _
      $region20: #{stack_gcn_encoder_forward.6} parent=5 // pred_fallthru
        _
      %p160 = scmp.le.s32.totalorder 1, %s12
      %p161 = scmp.lt.s32.totalorder %s12, 3
      %p162 = pnand %p160, %p161
      %p163 = pneg %p162
      // Predicated region
      $region25: #{stack_gcn_encoder_forward.6} parent=5 // pred_check
        _
      $region26: #{stack_gcn_encoder_forward.6} parent=5 // pred_check_branch
        %165 = sbr.rel (%p162) target = $region28
      $region27: #{stack_gcn_encoder_forward.6} parent=5 // pred_region
        %s166 = ssub.s32 %s12, 1
        // Predicated region
        $region29: #{stack_gcn_encoder_forward.6} parent=27 // pred_check
          %p167 = pneg %p50
        $region30: #{stack_gcn_encoder_forward.6} parent=27 // pred_check_branch
          %169 = sbr.rel (%p167) target = $region32
        $region31: #{stack_gcn_encoder_forward.6} parent=27 // pred_region
          %170 = dma.done [#allocation3], 4096
        $region32: #{stack_gcn_encoder_forward.6} parent=27 // pred_fallthru
          _
        %s171 = sand.u32 %s63, 1
        %s172 = scalar_lea.sflag [#allocation5], %s171
        %s173 = sand.u32 %s63, 1
        %s174 = smul.addr %s173, 128
        %s175 = scalar_lea.vmem [#allocation4], %s174
        // Predicated region
        $region33: #{stack_gcn_encoder_forward.6} parent=27 // pred_check
          %p176 = pneg %p76
        $region34: #{stack_gcn_encoder_forward.6} parent=27 // pred_check_branch
          %178 = sbr.rel (%p176) target = $region36
        $region35: #{stack_gcn_encoder_forward.6} parent=27 // pred_region
          %179 = dma.done %s172, 2048
        $region36: #{stack_gcn_encoder_forward.6} parent=27 // pred_fallthru
          _
        %p180 = pneg %p50
        %p181 = pneg %p47
        %s182 = sand.u32 %s63, 1
        %s183 = scalar_lea.sflag [#allocation5], %s182
        %s184 = sand.u32 %s63, 1
        %s185 = smul.addr %s184, 128
        %s186 = scalar_lea.vmem [#allocation4], %s185
        %p187 = pneg %p76
        %p188 = pneg %p73
        %p189 = pneg %p104
        %p190 = pneg %p101
        %s191 = smul.u32 32, %s22
        %p192 = scmp.lt.s32.totalorder %s21, 1
        %s193 = scalar_select %p192, %s21, 1
        %p194 = scmp.lt.s32.totalorder %s191, 31
        %s195 = scalar_select %p194, %s191, 31
        %s196 = smul.addr %s193, 32
        %s197 = sadd.s32 %s195, %s196
        %s198 = smul.addr %s197, 4
        %s199 = scalar_lea.vmem %s2, %s198
        %s200 = smul.u32 32, %s22
        %s201 = smul.u32 32, %s22
        %p202 = scmp.lt.s32.totalorder %s21, 1
        %s203 = scalar_select %p202, %s21, 1
        %p204 = scmp.lt.s32.totalorder %s201, 31
        %s205 = scalar_select %p204, %s201, 31
        %s206 = smul.addr %s203, 32
        %s207 = sadd.s32 %s205, %s206
        %s208 = smul.addr %s207, 4
        %s209 = scalar_lea.vmem %s2, %s208
        %s210 = smul.u32 32, %s22
        %v212 = vld [vmem:[#allocation2] sm:$0xff]
        %v213 = vld [vmem:[#allocation2 + $0x8] sm:$0xff]
        %v214 = vld [vmem:[#allocation2 + $0x10] sm:$0xff]
        %v215 = vld [vmem:[#allocation2 + $0x18] sm:$0xff]
        %v216 = vld [vmem:[#allocation2 + $0x20] sm:$0xff]
        %v217 = vld [vmem:[#allocation2 + $0x28] sm:$0xff]
        %v218 = vld [vmem:[#allocation2 + $0x30] sm:$0xff]
        %v219 = vld [vmem:[#allocation2 + $0x38] sm:$0xff]
        %v220 = vld [vmem:[#allocation2 + $0x40] sm:$0xff]
        %v221 = vld [vmem:[#allocation2 + $0x48] sm:$0xff]
        %v222 = vld [vmem:[#allocation2 + $0x50] sm:$0xff]
        %v223 = vld [vmem:[#allocation2 + $0x58] sm:$0xff]
        %v224 = vld [vmem:[#allocation2 + $0x60] sm:$0xff]
        %v225 = vld [vmem:[#allocation2 + $0x68] sm:$0xff]
        %v226 = vld [vmem:[#allocation2 + $0x70] sm:$0xff]
        %v227 = vld [vmem:[#allocation2 + $0x78] sm:$0xff]
        %v228 = vld [vmem:[#allocation2 + $0x80] sm:$0xff]
        %v229 = vld [vmem:[#allocation2 + $0x88] sm:$0xff]
        %v230 = vld [vmem:[#allocation2 + $0x90] sm:$0xff]
        %v231 = vld [vmem:[#allocation2 + $0x98] sm:$0xff]
        %v232 = vld [vmem:[#allocation2 + $0xa0] sm:$0xff]
        %v233 = vld [vmem:[#allocation2 + $0xa8] sm:$0xff]
        %v234 = vld [vmem:[#allocation2 + $0xb0] sm:$0xff]
        %v235 = vld [vmem:[#allocation2 + $0xb8] sm:$0xff]
        %v236 = vld [vmem:[#allocation2 + $0xc0] sm:$0xff]
        %v237 = vld [vmem:[#allocation2 + $0xc8] sm:$0xff]
        %v238 = vld [vmem:[#allocation2 + $0xd0] sm:$0xff]
        %v239 = vld [vmem:[#allocation2 + $0xd8] sm:$0xff]
        %v240 = vld [vmem:[#allocation2 + $0xe0] sm:$0xff]
        %v241 = vld [vmem:[#allocation2 + $0xe8] sm:$0xff]
        %v242 = vld [vmem:[#allocation2 + $0xf0] sm:$0xff]
        %v243 = vld [vmem:[#allocation2 + $0xf8] sm:$0xff]
        %v244 = vpack.c.bf16 %v213, %v212
        %v245 = vpack.c.bf16 %v215, %v214
        %v246 = vpack.c.bf16 %v217, %v216
        %v247 = vpack.c.bf16 %v219, %v218
        %v248 = vpack.c.bf16 %v221, %v220
        %v249 = vpack.c.bf16 %v223, %v222
        %v250 = vpack.c.bf16 %v225, %v224
        %v251 = vpack.c.bf16 %v227, %v226
        %v252 = vpack.c.bf16 %v229, %v228
        %v253 = vpack.c.bf16 %v231, %v230
        %v254 = vpack.c.bf16 %v233, %v232
        %v255 = vpack.c.bf16 %v235, %v234
        %v256 = vpack.c.bf16 %v237, %v236
        %v257 = vpack.c.bf16 %v239, %v238
        %v258 = vpack.c.bf16 %v241, %v240
        %v259 = vpack.c.bf16 %v243, %v242
        %v260 = vld [vmem:[%s175] sm:$0xff]
        %v261 = vld [vmem:[%s175 + $0x8] sm:$0xff]
        %v262 = vld [vmem:[%s175 + $0x10] sm:$0xff]
        %v263 = vld [vmem:[%s175 + $0x18] sm:$0xff]
        %v264 = vld [vmem:[%s175 + $0x20] sm:$0xff]
        %v265 = vld [vmem:[%s175 + $0x28] sm:$0xff]
        %v266 = vld [vmem:[%s175 + $0x30] sm:$0xff]
        %v267 = vld [vmem:[%s175 + $0x38] sm:$0xff]
        %v268 = vld [vmem:[%s175 + $0x40] sm:$0xff]
        %v269 = vld [vmem:[%s175 + $0x48] sm:$0xff]
        %v270 = vld [vmem:[%s175 + $0x50] sm:$0xff]
        %v271 = vld [vmem:[%s175 + $0x58] sm:$0xff]
        %v272 = vld [vmem:[%s175 + $0x60] sm:$0xff]
        %v273 = vld [vmem:[%s175 + $0x68] sm:$0xff]
        %v274 = vld [vmem:[%s175 + $0x70] sm:$0xff]
        %v275 = vld [vmem:[%s175 + $0x78] sm:$0xff]
        %v276 = vpack.c.bf16 %v261, %v260
        %v277 = vpack.c.bf16 %v263, %v262
        %v278 = vpack.c.bf16 %v265, %v264
        %v279 = vpack.c.bf16 %v267, %v266
        %v280 = vpack.c.bf16 %v269, %v268
        %v281 = vpack.c.bf16 %v271, %v270
        %v282 = vpack.c.bf16 %v273, %v272
        %v283 = vpack.c.bf16 %v275, %v274
        %284 = vmatprep.subr.bf16.mxu0 0
        %285 = vmatpush1.bf16.msra.mxu0 %v283
        %286 = vmatprep.subr.bf16.mxu0 0
        %287 = vmatpush1.bf16.msra.mxu0 %v282
        %288 = vmatprep.subr.bf16.mxu0 0
        %289 = vmatpush1.bf16.msra.mxu0 %v281
        %290 = vmatprep.subr.bf16.mxu0 0
        %291 = vmatpush1.bf16.msra.mxu0 %v280
        %292 = vmatprep.subr.bf16.mxu0 0
        %293 = vmatpush1.bf16.msra.mxu0 %v279
        %294 = vmatprep.subr.bf16.mxu0 0
        %295 = vmatpush1.bf16.msra.mxu0 %v278
        %296 = vmatprep.subr.bf16.mxu0 0
        %297 = vmatpush1.bf16.msra.mxu0 %v277
        %298 = vmatprep.subr.bf16.mxu0 0
        %299 = vmatpush1.bf16.msra.mxu0 %v276
        %300 = vmatprep.subr.bf16.mxu0 0
        %301 = vmatpush2.bf16.msra.mxu0 0
        %302 = vmatprep.subr.bf16.mxu0 0
        %303 = vmatpush2.bf16.msra.mxu0 0
        %304 = vmatprep.subr.bf16.mxu0 0
        %305 = vmatpush2.bf16.msra.mxu0 0
        %306 = vmatprep.subr.bf16.mxu0 0
        %307 = vmatpush2.bf16.msra.mxu0 0
        %308 = vmatprep.subr.bf16.mxu0 0
        %309 = vmatpush2.bf16.msra.mxu0 0
        %310 = vmatprep.subr.bf16.mxu0 0
        %311 = vmatpush2.bf16.msra.mxu0 0
        %312 = vmatprep.subr.bf16.mxu0 0
        %313 = vmatpush2.bf16.msra.mxu0 0
        %314 = vmatprep.subr.bf16.mxu0 0
        %315 = vmatpush2.bf16.msra.mxu0 0
        %316 = vmatprep.mubr.bf16.mxu0 0
        %317 = vmatmul.mubr.bf16.gmra.mxu0 %v244
        %v318 = vpop.f32.mrf.mxu0
        %v319 = vadd.f32 0.0, %v318
        %v320 = vpop.f32.mrf.mxu0
        %v321 = vpop.f32.mrf.mxu0
        %v322 = vadd.f32 0.0, %v321
        %v323 = vpop.f32.mrf.mxu0
        %324 = vmatprep.mubr.bf16.mxu0 0
        %325 = vmatmul.mubr.bf16.gmra.mxu0 %v245
        %v326 = vpop.f32.mrf.mxu0
        %v327 = vadd.f32 0.0, %v326
        %v328 = vpop.f32.mrf.mxu0
        %v329 = vpop.f32.mrf.mxu0
        %v330 = vadd.f32 0.0, %v329
        %v331 = vpop.f32.mrf.mxu0
        %332 = vmatprep.mubr.bf16.mxu0 0
        %333 = vmatmul.mubr.bf16.gmra.mxu0 %v246
        %v334 = vpop.f32.mrf.mxu0
        %v335 = vadd.f32 0.0, %v334
        %v336 = vpop.f32.mrf.mxu0
        %v337 = vpop.f32.mrf.mxu0
        %v338 = vadd.f32 0.0, %v337
        %v339 = vpop.f32.mrf.mxu0
        %340 = vmatprep.mubr.bf16.mxu0 0
        %341 = vmatmul.mubr.bf16.gmra.mxu0 %v247
        %v342 = vpop.f32.mrf.mxu0
        %v343 = vadd.f32 0.0, %v342
        %v344 = vpop.f32.mrf.mxu0
        %v345 = vpop.f32.mrf.mxu0
        %v346 = vadd.f32 0.0, %v345
        %v347 = vpop.f32.mrf.mxu0
        %348 = vmatprep.mubr.bf16.mxu0 0
        %349 = vmatmul.mubr.bf16.gmra.mxu0 %v248
        %v350 = vpop.f32.mrf.mxu0
        %v351 = vadd.f32 0.0, %v350
        %v352 = vpop.f32.mrf.mxu0
        %v353 = vpop.f32.mrf.mxu0
        %v354 = vadd.f32 0.0, %v353
        %v355 = vpop.f32.mrf.mxu0
        %356 = vmatprep.mubr.bf16.mxu0 0
        %357 = vmatmul.mubr.bf16.gmra.mxu0 %v249
        %v358 = vpop.f32.mrf.mxu0
        %v359 = vadd.f32 0.0, %v358
        %v360 = vpop.f32.mrf.mxu0
        %v361 = vpop.f32.mrf.mxu0
        %v362 = vadd.f32 0.0, %v361
        %v363 = vpop.f32.mrf.mxu0
        %364 = vmatprep.mubr.bf16.mxu0 0
        %365 = vmatmul.mubr.bf16.gmra.mxu0 %v250
        %v366 = vpop.f32.mrf.mxu0
        %v367 = vadd.f32 0.0, %v366
        %v368 = vpop.f32.mrf.mxu0
        %v369 = vpop.f32.mrf.mxu0
        %v370 = vadd.f32 0.0, %v369
        %v371 = vpop.f32.mrf.mxu0
        %372 = vmatprep.mubr.bf16.mxu0 0
        %373 = vmatmul.mubr.bf16.gmra.mxu0 %v251
        %v374 = vpop.f32.mrf.mxu0
        %v375 = vadd.f32 0.0, %v374
        %v376 = vpop.f32.mrf.mxu0
        %v377 = vpop.f32.mrf.mxu0
        %v378 = vadd.f32 0.0, %v377
        %v379 = vpop.f32.mrf.mxu0
        %380 = vmatprep.mubr.bf16.mxu0 0
        %381 = vmatmul.mubr.bf16.gmra.mxu0 %v252
        %v382 = vpop.f32.mrf.mxu0
        %v383 = vadd.f32 0.0, %v382
        %v384 = vpop.f32.mrf.mxu0
        %v385 = vpop.f32.mrf.mxu0
        %v386 = vadd.f32 0.0, %v385
        %v387 = vpop.f32.mrf.mxu0
        %388 = vmatprep.mubr.bf16.mxu0 0
        %389 = vmatmul.mubr.bf16.gmra.mxu0 %v253
        %v390 = vpop.f32.mrf.mxu0
        %v391 = vadd.f32 0.0, %v390
        %v392 = vpop.f32.mrf.mxu0
        %v393 = vpop.f32.mrf.mxu0
        %v394 = vadd.f32 0.0, %v393
        %v395 = vpop.f32.mrf.mxu0
        %396 = vmatprep.mubr.bf16.mxu0 0
        %397 = vmatmul.mubr.bf16.gmra.mxu0 %v254
        %v398 = vpop.f32.mrf.mxu0
        %v399 = vadd.f32 0.0, %v398
        %v400 = vpop.f32.mrf.mxu0
        %v401 = vpop.f32.mrf.mxu0
        %v402 = vadd.f32 0.0, %v401
        %v403 = vpop.f32.mrf.mxu0
        %404 = vmatprep.mubr.bf16.mxu0 0
        %405 = vmatmul.mubr.bf16.gmra.mxu0 %v255
        %v406 = vpop.f32.mrf.mxu0
        %v407 = vadd.f32 0.0, %v406
        %v408 = vpop.f32.mrf.mxu0
        %v409 = vpop.f32.mrf.mxu0
        %v410 = vadd.f32 0.0, %v409
        %v411 = vpop.f32.mrf.mxu0
        %412 = vmatprep.mubr.bf16.mxu0 0
        %413 = vmatmul.mubr.bf16.gmra.mxu0 %v256
        %v414 = vpop.f32.mrf.mxu0
        %v415 = vadd.f32 0.0, %v414
        %v416 = vpop.f32.mrf.mxu0
        %v417 = vpop.f32.mrf.mxu0
        %v418 = vadd.f32 0.0, %v417
        %v419 = vpop.f32.mrf.mxu0
        %420 = vmatprep.mubr.bf16.mxu0 0
        %421 = vmatmul.mubr.bf16.gmra.mxu0 %v257
        %v422 = vpop.f32.mrf.mxu0
        %v423 = vadd.f32 0.0, %v422
        %v424 = vpop.f32.mrf.mxu0
        %v425 = vpop.f32.mrf.mxu0
        %v426 = vadd.f32 0.0, %v425
        %v427 = vpop.f32.mrf.mxu0
        %428 = vmatprep.mubr.bf16.mxu0 0
        %429 = vmatmul.mubr.bf16.gmra.mxu0 %v258
        %v430 = vpop.f32.mrf.mxu0
        %v431 = vadd.f32 0.0, %v430
        %v432 = vpop.f32.mrf.mxu0
        %v433 = vpop.f32.mrf.mxu0
        %v434 = vadd.f32 0.0, %v433
        %v435 = vpop.f32.mrf.mxu0
        %436 = vmatprep.mubr.bf16.mxu0 0
        %437 = vmatmul.mubr.bf16.gmra.mxu0 %v259
        %v438 = vpop.f32.mrf.mxu0
        %v439 = vadd.f32 0.0, %v438
        %v440 = vpop.f32.mrf.mxu0
        %v441 = vpop.f32.mrf.mxu0
        %v442 = vadd.f32 0.0, %v441
        %v443 = vpop.f32.mrf.mxu0
        %444 = vdwg.mxu0
        %v445 = vpack.c.bf16 %v322, %v319
        %v446 = vpack.c.bf16 %v330, %v327
        %v447 = vpack.c.bf16 %v338, %v335
        %v448 = vpack.c.bf16 %v346, %v343
        %v449 = vpack.c.bf16 %v354, %v351
        %v450 = vpack.c.bf16 %v362, %v359
        %v451 = vpack.c.bf16 %v370, %v367
        %v452 = vpack.c.bf16 %v378, %v375
        %v453 = vpack.c.bf16 %v386, %v383
        %v454 = vpack.c.bf16 %v394, %v391
        %v455 = vpack.c.bf16 %v402, %v399
        %v456 = vpack.c.bf16 %v410, %v407
        %v457 = vpack.c.bf16 %v418, %v415
        %v458 = vpack.c.bf16 %v426, %v423
        %v459 = vpack.c.bf16 %v434, %v431
        %v460 = vpack.c.bf16 %v442, %v439
        %v477 = vunpack.c.l.b16 %v445
        %v478 = vunpack.c.h.b16 %v445
        %v479 = vunpack.c.l.b16 %v446
        %v480 = vunpack.c.h.b16 %v446
        %v481 = vunpack.c.l.b16 %v447
        %v482 = vunpack.c.h.b16 %v447
        %v483 = vunpack.c.l.b16 %v448
        %v484 = vunpack.c.h.b16 %v448
        %v485 = vunpack.c.l.b16 %v449
        %v486 = vunpack.c.h.b16 %v449
        %v487 = vunpack.c.l.b16 %v450
        %v488 = vunpack.c.h.b16 %v450
        %v489 = vunpack.c.l.b16 %v451
        %v490 = vunpack.c.h.b16 %v451
        %v491 = vunpack.c.l.b16 %v452
        %v492 = vunpack.c.h.b16 %v452
        %v493 = vunpack.c.l.b16 %v453
        %v494 = vunpack.c.h.b16 %v453
        %v495 = vunpack.c.l.b16 %v454
        %v496 = vunpack.c.h.b16 %v454
        %v497 = vunpack.c.l.b16 %v455
        %v498 = vunpack.c.h.b16 %v455
        %v499 = vunpack.c.l.b16 %v456
        %v500 = vunpack.c.h.b16 %v456
        %v501 = vunpack.c.l.b16 %v457
        %v502 = vunpack.c.h.b16 %v457
        %v503 = vunpack.c.l.b16 %v458
        %v504 = vunpack.c.h.b16 %v458
        %v505 = vunpack.c.l.b16 %v459
        %v506 = vunpack.c.h.b16 %v459
        %v507 = vunpack.c.l.b16 %v460
        %v508 = vunpack.c.h.b16 %v460
        %v509 = vpack.c.b16 %v477, %v477
        %v510 = vpack.c.b16 %v478, %v478
        %v511 = vpack.c.b16 %v479, %v479
        %v512 = vpack.c.b16 %v480, %v480
        %v513 = vpack.c.b16 %v481, %v481
        %v514 = vpack.c.b16 %v482, %v482
        %v515 = vpack.c.b16 %v483, %v483
        %v516 = vpack.c.b16 %v484, %v484
        %v517 = vpack.c.b16 %v485, %v485
        %v518 = vpack.c.b16 %v486, %v486
        %v519 = vpack.c.b16 %v487, %v487
        %v520 = vpack.c.b16 %v488, %v488
        %v521 = vpack.c.b16 %v489, %v489
        %v522 = vpack.c.b16 %v490, %v490
        %v523 = vpack.c.b16 %v491, %v491
        %v524 = vpack.c.b16 %v492, %v492
        %v525 = vpack.c.b16 %v493, %v493
        %v526 = vpack.c.b16 %v494, %v494
        %v527 = vpack.c.b16 %v495, %v495
        %v528 = vpack.c.b16 %v496, %v496
        %v529 = vpack.c.b16 %v497, %v497
        %v530 = vpack.c.b16 %v498, %v498
        %v531 = vpack.c.b16 %v499, %v499
        %v532 = vpack.c.b16 %v500, %v500
        %v533 = vpack.c.b16 %v501, %v501
        %v534 = vpack.c.b16 %v502, %v502
        %v535 = vpack.c.b16 %v503, %v503
        %v536 = vpack.c.b16 %v504, %v504
        %v537 = vpack.c.b16 %v505, %v505
        %v538 = vpack.c.b16 %v506, %v506
        %v539 = vpack.c.b16 %v507, %v507
        %v540 = vpack.c.b16 %v508, %v508
        %573 = vst [vmem:[%s209] sm:$0xf] %v509
        %574 = vst [vmem:[%s209 + $0x4] sm:$0xf] %v510
        %575 = vst [vmem:[%s209 + $0x8] sm:$0xf] %v511
        %576 = vst [vmem:[%s209 + $0xc] sm:$0xf] %v512
        %577 = vst [vmem:[%s209 + $0x10] sm:$0xf] %v513
        %578 = vst [vmem:[%s209 + $0x14] sm:$0xf] %v514
        %579 = vst [vmem:[%s209 + $0x18] sm:$0xf] %v515
        %580 = vst [vmem:[%s209 + $0x1c] sm:$0xf] %v516
        %581 = vst [vmem:[%s209 + $0x20] sm:$0xf] %v517
        %582 = vst [vmem:[%s209 + $0x24] sm:$0xf] %v518
        %583 = vst [vmem:[%s209 + $0x28] sm:$0xf] %v519
        %584 = vst [vmem:[%s209 + $0x2c] sm:$0xf] %v520
        %585 = vst [vmem:[%s209 + $0x30] sm:$0xf] %v521
        %586 = vst [vmem:[%s209 + $0x34] sm:$0xf] %v522
        %587 = vst [vmem:[%s209 + $0x38] sm:$0xf] %v523
        %588 = vst [vmem:[%s209 + $0x3c] sm:$0xf] %v524
        %589 = vst [vmem:[%s209 + $0x40] sm:$0xf] %v525
        %590 = vst [vmem:[%s209 + $0x44] sm:$0xf] %v526
        %591 = vst [vmem:[%s209 + $0x48] sm:$0xf] %v527
        %592 = vst [vmem:[%s209 + $0x4c] sm:$0xf] %v528
        %593 = vst [vmem:[%s209 + $0x50] sm:$0xf] %v529
        %594 = vst [vmem:[%s209 + $0x54] sm:$0xf] %v530
        %595 = vst [vmem:[%s209 + $0x58] sm:$0xf] %v531
        %596 = vst [vmem:[%s209 + $0x5c] sm:$0xf] %v532
        %597 = vst [vmem:[%s209 + $0x60] sm:$0xf] %v533
        %598 = vst [vmem:[%s209 + $0x64] sm:$0xf] %v534
        %599 = vst [vmem:[%s209 + $0x68] sm:$0xf] %v535
        %600 = vst [vmem:[%s209 + $0x6c] sm:$0xf] %v536
        %601 = vst [vmem:[%s209 + $0x70] sm:$0xf] %v537
        %602 = vst [vmem:[%s209 + $0x74] sm:$0xf] %v538
        %603 = vst [vmem:[%s209 + $0x78] sm:$0xf] %v539
        %604 = vst [vmem:[%s209 + $0x7c] sm:$0xf] %v540
        %s605 = smul.u32 32, %s22
        %p606 = scmp.lt.s32.totalorder %s21, 1
        %s607 = scalar_select %p606, %s21, 1
        %p608 = scmp.lt.s32.totalorder %s605, 31
        %s609 = scalar_select %p608, %s605, 31
        %s610 = smul.addr %s607, 32
        %s611 = sadd.s32 %s609, %s610
        %s612 = smul.addr %s611, 4
        %s613 = scalar_lea.vmem %s2, %s612
        // Predicated region
        $region37: #{stack_gcn_encoder_forward.6} parent=27 // pred_check
          %p614 = pneg %p101
        $region38: #{stack_gcn_encoder_forward.6} parent=27 // pred_check_branch
          %616 = sbr.rel (%p614) target = $region40
        $region39: #{stack_gcn_encoder_forward.6} parent=27 // pred_region
          %s617 = smul.u32 32, %s22
        $region40: #{stack_gcn_encoder_forward.6} parent=27 // pred_fallthru
          _
      $region28: #{stack_gcn_encoder_forward.6} parent=5 // pred_fallthru
        _
      %p618 = scmp.le.s32.totalorder 2, %s12
      // Predicated region
      $region41: #{stack_gcn_encoder_forward.6} parent=5 // pred_check
        %p619 = pneg %p618
      $region42: #{stack_gcn_encoder_forward.6} parent=5 // pred_check_branch
        %621 = sbr.rel (%p619) target = $region44
      $region43: #{stack_gcn_encoder_forward.6} parent=5 // pred_region
        %s622 = ssub.s32 %s12, 2
        // Predicated region
        $region45: #{stack_gcn_encoder_forward.6} parent=43 // pred_check
          %p623 = pneg %p107
        $region46: #{stack_gcn_encoder_forward.6} parent=43 // pred_check_branch
          %625 = sbr.rel (%p623) target = $region48
        $region47: #{stack_gcn_encoder_forward.6} parent=43 // pred_region
          %s626 = smul.u32 32, %s24
          %p627 = scmp.lt.s32.totalorder %s23, 1
          %s628 = scalar_select %p627, %s23, 1
          %p629 = scmp.lt.s32.totalorder %s626, 31
          %s630 = scalar_select %p629, %s626, 31
          %s631 = smul.addr %s628, 32
          %s632 = sadd.s32 %s630, %s631
          %s633 = smul.addr %s632, 4
          %s634 = scalar_lea.vmem %s2, %s633
        $region48: #{stack_gcn_encoder_forward.6} parent=43 // pred_fallthru
          _
      $region44: #{stack_gcn_encoder_forward.6} parent=5 // pred_fallthru
        _
    $region6: #{stack_gcn_encoder_forward.6} parent=1 // loop_footer
      %s16 = sadd.s32 1, %s12
    $region7: #{stack_gcn_encoder_forward.6} parent=1 // loop_footer_branch
      %11 = sbr.rel target = $region3
    $region8: #{stack_gcn_encoder_forward.6} parent=1 // loop_exit
      _
    %635 = vsyncpa [#allocation3], 1
    %s636 = scalar_lea.sflag [#allocation3], 1
    %637 = vsyncpa %s636, 1
    %638 = vsyncpa [#allocation5], 1
    %s639 = scalar_lea.sflag [#allocation5], 1
    %640 = vsyncpa %s639, 1

// kernel: stack_gcn_encoder_forward.11
$region0: #{stack_gcn_encoder_forward.11}
  #allocation0 [shape = 'u32[]', space=smem, size = 0x4, offset = 0x4, fixed_abs, tag = 'smem constant byte address 0x4 - core index']
  #allocation1 [shape = 'u32[144,128]{1,0:T(1,128)}', space=vmem, size = 0x12000, scoped, tag = 'internal scratch']
  %s0 = inlined_call_operand.vmem [shape: f32[384,256], index: 0, kind: input, shape index: {}]
  %s1 = inlined_call_operand.vmem [shape: f32[1,256], index: 1, kind: input, shape index: {}]
  %s2 = inlined_call_operand.hbm [shape: f32[384,256], index: 2, kind: output, shape index: {}]
  %s3 = sld [smem:[#allocation0]]
  $region18: #{stack_gcn_encoder_forward.11} parent=0
    _
  %s5 = ssub.s32 1, %s3
  %s6 = scalar_select 0, %s5, %s3
  $region1: #{stack_gcn_encoder_forward.11} parent=0
    #allocation2 [shape = 'u8[393216]{0}', space=vmem, size = 0x60000, scoped, tag = 'output window, operand 0, single buffered']
    #allocation3 [shape = 's32[1]{0}', space=sflag, size = 0x4, scoped, tag = 'scoped memory for stack_gcn_encoder_forward.11']
    %7 = vsyncpa [#allocation3], 0
    // Predicated region
    $region2: #{stack_gcn_encoder_forward.11} parent=1 // pred_check
      _
    $region3: #{stack_gcn_encoder_forward.11} parent=1 // pred_check_branch
      %9 = sbr.rel (0) target = $region5
    $region4: #{stack_gcn_encoder_forward.11} parent=1 // pred_region
      _
    $region5: #{stack_gcn_encoder_forward.11} parent=1 // pred_fallthru
      _
    // Predicated region
    $region6: #{stack_gcn_encoder_forward.11} parent=1 // pred_check
      _
    $region7: #{stack_gcn_encoder_forward.11} parent=1 // pred_check_branch
      %11 = sbr.rel (0) target = $region9
    $region8: #{stack_gcn_encoder_forward.11} parent=1 // pred_region
      _
    $region9: #{stack_gcn_encoder_forward.11} parent=1 // pred_fallthru
      _
    %v12 = vld [vmem:[%s1] sm:$0x3]
    %v13 = vld [vmem:[%s0] sm:$0xff]
    %v14 = vld [vmem:[%s0 + $0x8] sm:$0xff]
    %v15 = vld [vmem:[%s0 + $0x10] sm:$0xff]
    %v16 = vld [vmem:[%s0 + $0x18] sm:$0xff]
    %v17 = vld [vmem:[%s0 + $0x20] sm:$0xff]
    %v18 = vld [vmem:[%s0 + $0x28] sm:$0xff]
    %v19 = vld [vmem:[%s0 + $0x30] sm:$0xff]
    %v20 = vld [vmem:[%s0 + $0x38] sm:$0xff]
    %v21 = vld [vmem:[%s0 + $0x40] sm:$0xff]
    %v22 = vld [vmem:[%s0 + $0x48] sm:$0xff]
    %v23 = vld [vmem:[%s0 + $0x50] sm:$0xff]
    %v24 = vld [vmem:[%s0 + $0x58] sm:$0xff]
    %v25 = vld [vmem:[%s0 + $0x60] sm:$0xff]
    %v26 = vld [vmem:[%s0 + $0x68] sm:$0xff]
    %v27 = vld [vmem:[%s0 + $0x70] sm:$0xff]
    %v28 = vld [vmem:[%s0 + $0x78] sm:$0xff]
    %v29 = vld [vmem:[%s0 + $0x80] sm:$0xff]
    %v30 = vld [vmem:[%s0 + $0x88] sm:$0xff]
    %v31 = vld [vmem:[%s0 + $0x90] sm:$0xff]
    %v32 = vld [vmem:[%s0 + $0x98] sm:$0xff]
    %v33 = vld [vmem:[%s0 + $0xa0] sm:$0xff]
    %v34 = vld [vmem:[%s0 + $0xa8] sm:$0xff]
    %v35 = vld [vmem:[%s0 + $0xb0] sm:$0xff]
    %v36 = vld [vmem:[%s0 + $0xb8] sm:$0xff]
    %v37 = vld [vmem:[%s0 + $0xc0] sm:$0xff]
    %v38 = vld [vmem:[%s0 + $0xc8] sm:$0xff]
    %v39 = vld [vmem:[%s0 + $0xd0] sm:$0xff]
    %v40 = vld [vmem:[%s0 + $0xd8] sm:$0xff]
    %v41 = vld [vmem:[%s0 + $0xe0] sm:$0xff]
    %v42 = vld [vmem:[%s0 + $0xe8] sm:$0xff]
    %v43 = vld [vmem:[%s0 + $0xf0] sm:$0xff]
    %v44 = vld [vmem:[%s0 + $0xf8] sm:$0xff]
    %v45 = vld [vmem:[%s0 + $0x100] sm:$0xff]
    %v46 = vld [vmem:[%s0 + $0x108] sm:$0xff]
    %v47 = vld [vmem:[%s0 + $0x110] sm:$0xff]
    %v48 = vld [vmem:[%s0 + $0x118] sm:$0xff]
    %v49 = vld [vmem:[%s0 + $0x120] sm:$0xff]
    %v50 = vld [vmem:[%s0 + $0x128] sm:$0xff]
    %v51 = vld [vmem:[%s0 + $0x130] sm:$0xff]
    %v52 = vld [vmem:[%s0 + $0x138] sm:$0xff]
    %v53 = vld [vmem:[%s0 + $0x140] sm:$0xff]
    %v54 = vld [vmem:[%s0 + $0x148] sm:$0xff]
    %v55 = vld [vmem:[%s0 + $0x150] sm:$0xff]
    %v56 = vld [vmem:[%s0 + $0x158] sm:$0xff]
    %v57 = vld [vmem:[%s0 + $0x160] sm:$0xff]
    %v58 = vld [vmem:[%s0 + $0x168] sm:$0xff]
    %v59 = vld [vmem:[%s0 + $0x170] sm:$0xff]
    %v60 = vld [vmem:[%s0 + $0x178] sm:$0xff]
    %v61 = vld [vmem:[%s0 + $0x180] sm:$0xff]
    %v62 = vld [vmem:[%s0 + $0x188] sm:$0xff]
    %v63 = vld [vmem:[%s0 + $0x190] sm:$0xff]
    %v64 = vld [vmem:[%s0 + $0x198] sm:$0xff]
    %v65 = vld [vmem:[%s0 + $0x1a0] sm:$0xff]
    %v66 = vld [vmem:[%s0 + $0x1a8] sm:$0xff]
    %v67 = vld [vmem:[%s0 + $0x1b0] sm:$0xff]
    %v68 = vld [vmem:[%s0 + $0x1b8] sm:$0xff]
    %v69 = vld [vmem:[%s0 + $0x1c0] sm:$0xff]
    %v70 = vld [vmem:[%s0 + $0x1c8] sm:$0xff]
    %v71 = vld [vmem:[%s0 + $0x1d0] sm:$0xff]
    %v72 = vld [vmem:[%s0 + $0x1d8] sm:$0xff]
    %v73 = vld [vmem:[%s0 + $0x1e0] sm:$0xff]
    %v74 = vld [vmem:[%s0 + $0x1e8] sm:$0xff]
    %v75 = vld [vmem:[%s0 + $0x1f0] sm:$0xff]
    %v76 = vld [vmem:[%s0 + $0x1f8] sm:$0xff]
    %v77 = vld [vmem:[%s0 + $0x200] sm:$0xff]
    %v78 = vld [vmem:[%s0 + $0x208] sm:$0xff]
    %v79 = vld [vmem:[%s0 + $0x210] sm:$0xff]
    %v80 = vld [vmem:[%s0 + $0x218] sm:$0xff]
    %v81 = vld [vmem:[%s0 + $0x220] sm:$0xff]
    %v82 = vld [vmem:[%s0 + $0x228] sm:$0xff]
    %v83 = vld [vmem:[%s0 + $0x230] sm:$0xff]
    %v84 = vld [vmem:[%s0 + $0x238] sm:$0xff]
    %v85 = vld [vmem:[%s0 + $0x240] sm:$0xff]
    %v86 = vld [vmem:[%s0 + $0x248] sm:$0xff]
    %v87 = vld [vmem:[%s0 + $0x250] sm:$0xff]
    %v88 = vld [vmem:[%s0 + $0x258] sm:$0xff]
    %v89 = vld [vmem:[%s0 + $0x260] sm:$0xff]
    %v90 = vld [vmem:[%s0 + $0x268] sm:$0xff]
    %v91 = vld [vmem:[%s0 + $0x270] sm:$0xff]
    %v92 = vld [vmem:[%s0 + $0x278] sm:$0xff]
    %v93 = vld [vmem:[%s0 + $0x280] sm:$0xff]
    %v94 = vld [vmem:[%s0 + $0x288] sm:$0xff]
    %v95 = vld [vmem:[%s0 + $0x290] sm:$0xff]
    %v96 = vld [vmem:[%s0 + $0x298] sm:$0xff]
    %v97 = vld [vmem:[%s0 + $0x2a0] sm:$0xff]
    %v98 = vld [vmem:[%s0 + $0x2a8] sm:$0xff]
    %v99 = vld [vmem:[%s0 + $0x2b0] sm:$0xff]
    %v100 = vld [vmem:[%s0 + $0x2b8] sm:$0xff]
    %v101 = vld [vmem:[%s0 + $0x2c0] sm:$0xff]
    %v102 = vld [vmem:[%s0 + $0x2c8] sm:$0xff]
    %v103 = vld [vmem:[%s0 + $0x2d0] sm:$0xff]
    %v104 = vld [vmem:[%s0 + $0x2d8] sm:$0xff]
    %v105 = vld [vmem:[%s0 + $0x2e0] sm:$0xff]
    %v106 = vld [vmem:[%s0 + $0x2e8] sm:$0xff]
    %v107 = vld [vmem:[%s0 + $0x2f0] sm:$0xff]
    %v108 = vld [vmem:[%s0 + $0x2f8] sm:$0xff]
    %v109 = vmul.f32 %v13, 50.0
    %v110 = vmul.f32 %v14, 50.0
    %v111 = vmul.f32 %v15, 50.0
    %v112 = vmul.f32 %v16, 50.0
    %v113 = vmul.f32 %v17, 50.0
    %v114 = vmul.f32 %v18, 50.0
    %v115 = vmul.f32 %v19, 50.0
    %v116 = vmul.f32 %v20, 50.0
    %v117 = vmul.f32 %v21, 50.0
    %v118 = vmul.f32 %v22, 50.0
    %v119 = vmul.f32 %v23, 50.0
    %v120 = vmul.f32 %v24, 50.0
    %v121 = vmul.f32 %v25, 50.0
    %v122 = vmul.f32 %v26, 50.0
    %v123 = vmul.f32 %v27, 50.0
    %v124 = vmul.f32 %v28, 50.0
    %v125 = vmul.f32 %v29, 50.0
    %v126 = vmul.f32 %v30, 50.0
    %v127 = vmul.f32 %v31, 50.0
    %v128 = vmul.f32 %v32, 50.0
    %v129 = vmul.f32 %v33, 50.0
    %v130 = vmul.f32 %v34, 50.0
    %v131 = vmul.f32 %v35, 50.0
    %v132 = vmul.f32 %v36, 50.0
    %v133 = vmul.f32 %v37, 50.0
    %v134 = vmul.f32 %v38, 50.0
    %v135 = vmul.f32 %v39, 50.0
    %v136 = vmul.f32 %v40, 50.0
    %v137 = vmul.f32 %v41, 50.0
    %v138 = vmul.f32 %v42, 50.0
    %v139 = vmul.f32 %v43, 50.0
    %v140 = vmul.f32 %v44, 50.0
    %v141 = vmul.f32 %v45, 50.0
    %v142 = vmul.f32 %v46, 50.0
    %v143 = vmul.f32 %v47, 50.0
    %v144 = vmul.f32 %v48, 50.0
    %v145 = vmul.f32 %v49, 50.0
    %v146 = vmul.f32 %v50, 50.0
    %v147 = vmul.f32 %v51, 50.0
    %v148 = vmul.f32 %v52, 50.0
    %v149 = vmul.f32 %v53, 50.0
    %v150 = vmul.f32 %v54, 50.0
    %v151 = vmul.f32 %v55, 50.0
    %v152 = vmul.f32 %v56, 50.0
    %v153 = vmul.f32 %v57, 50.0
    %v154 = vmul.f32 %v58, 50.0
    %v155 = vmul.f32 %v59, 50.0
    %v156 = vmul.f32 %v60, 50.0
    %v157 = vmul.f32 %v61, 50.0
    %v158 = vmul.f32 %v62, 50.0
    %v159 = vmul.f32 %v63, 50.0
    %v160 = vmul.f32 %v64, 50.0
    %v161 = vmul.f32 %v65, 50.0
    %v162 = vmul.f32 %v66, 50.0
    %v163 = vmul.f32 %v67, 50.0
    %v164 = vmul.f32 %v68, 50.0
    %v165 = vmul.f32 %v69, 50.0
    %v166 = vmul.f32 %v70, 50.0
    %v167 = vmul.f32 %v71, 50.0
    %v168 = vmul.f32 %v72, 50.0
    %v169 = vmul.f32 %v73, 50.0
    %v170 = vmul.f32 %v74, 50.0
    %v171 = vmul.f32 %v75, 50.0
    %v172 = vmul.f32 %v76, 50.0
    %v173 = vmul.f32 %v77, 50.0
    %v174 = vmul.f32 %v78, 50.0
    %v175 = vmul.f32 %v79, 50.0
    %v176 = vmul.f32 %v80, 50.0
    %v177 = vmul.f32 %v81, 50.0
    %v178 = vmul.f32 %v82, 50.0
    %v179 = vmul.f32 %v83, 50.0
    %v180 = vmul.f32 %v84, 50.0
    %v181 = vmul.f32 %v85, 50.0
    %v182 = vmul.f32 %v86, 50.0
    %v183 = vmul.f32 %v87, 50.0
    %v184 = vmul.f32 %v88, 50.0
    %v185 = vmul.f32 %v89, 50.0
    %v186 = vmul.f32 %v90, 50.0
    %v187 = vmul.f32 %v91, 50.0
    %v188 = vmul.f32 %v92, 50.0
    %v189 = vmul.f32 %v93, 50.0
    %v190 = vmul.f32 %v94, 50.0
    %v191 = vmul.f32 %v95, 50.0
    %v192 = vmul.f32 %v96, 50.0
    %v193 = vmul.f32 %v97, 50.0
    %v194 = vmul.f32 %v98, 50.0
    %v195 = vmul.f32 %v99, 50.0
    %v196 = vmul.f32 %v100, 50.0
    %v197 = vmul.f32 %v101, 50.0
    %v198 = vmul.f32 %v102, 50.0
    %v199 = vmul.f32 %v103, 50.0
    %v200 = vmul.f32 %v104, 50.0
    %v201 = vmul.f32 %v105, 50.0
    %v202 = vmul.f32 %v106, 50.0
    %v203 = vmul.f32 %v107, 50.0
    %v204 = vmul.f32 %v108, 50.0
    %v206 = vlaneseq
    %v207 = vshrl.u32 %v206, 7
    %v208 = vsub.s32 0, %v207
    %v209 = vrot.slane %v12, %v208
    %v210 = vlaneseq
    %v211 = vshrl.u32 %v210, 7
    %v212 = vsub.s32 1, %v211
    %v213 = vrot.slane %v12, %v212
    %v216 = vadd.f32 %v209, %v109
    %v217 = vadd.f32 %v213, %v110
    %v218 = vadd.f32 %v209, %v111
    %v219 = vadd.f32 %v213, %v112
    %v220 = vadd.f32 %v209, %v113
    %v221 = vadd.f32 %v213, %v114
    %v222 = vadd.f32 %v209, %v115
    %v223 = vadd.f32 %v213, %v116
    %v224 = vadd.f32 %v209, %v117
    %v225 = vadd.f32 %v213, %v118
    %v226 = vadd.f32 %v209, %v119
    %v227 = vadd.f32 %v213, %v120
    %v228 = vadd.f32 %v209, %v121
    %v229 = vadd.f32 %v213, %v122
    %v230 = vadd.f32 %v209, %v123
    %v231 = vadd.f32 %v213, %v124
    %v232 = vadd.f32 %v209, %v125
    %v233 = vadd.f32 %v213, %v126
    %v234 = vadd.f32 %v209, %v127
    %v235 = vadd.f32 %v213, %v128
    %v236 = vadd.f32 %v209, %v129
    %v237 = vadd.f32 %v213, %v130
    %v238 = vadd.f32 %v209, %v131
    %v239 = vadd.f32 %v213, %v132
    %v240 = vadd.f32 %v209, %v133
    %v241 = vadd.f32 %v213, %v134
    %v242 = vadd.f32 %v209, %v135
    %v243 = vadd.f32 %v213, %v136
    %v244 = vadd.f32 %v209, %v137
    %v245 = vadd.f32 %v213, %v138
    %v246 = vadd.f32 %v209, %v139
    %v247 = vadd.f32 %v213, %v140
    %v248 = vadd.f32 %v209, %v141
    %v249 = vadd.f32 %v213, %v142
    %v250 = vadd.f32 %v209, %v143
    %v251 = vadd.f32 %v213, %v144
    %v252 = vadd.f32 %v209, %v145
    %v253 = vadd.f32 %v213, %v146
    %v254 = vadd.f32 %v209, %v147
    %v255 = vadd.f32 %v213, %v148
    %v256 = vadd.f32 %v209, %v149
    %v257 = vadd.f32 %v213, %v150
    %v258 = vadd.f32 %v209, %v151
    %v259 = vadd.f32 %v213, %v152
    %v260 = vadd.f32 %v209, %v153
    %v261 = vadd.f32 %v213, %v154
    %v262 = vadd.f32 %v209, %v155
    %v263 = vadd.f32 %v213, %v156
    %v264 = vadd.f32 %v209, %v157
    %v265 = vadd.f32 %v213, %v158
    %v266 = vadd.f32 %v209, %v159
    %v267 = vadd.f32 %v213, %v160
    %v268 = vadd.f32 %v209, %v161
    %v269 = vadd.f32 %v213, %v162
    %v270 = vadd.f32 %v209, %v163
    %v271 = vadd.f32 %v213, %v164
    %v272 = vadd.f32 %v209, %v165
    %v273 = vadd.f32 %v213, %v166
    %v274 = vadd.f32 %v209, %v167
    %v275 = vadd.f32 %v213, %v168
    %v276 = vadd.f32 %v209, %v169
    %v277 = vadd.f32 %v213, %v170
    %v278 = vadd.f32 %v209, %v171
    %v279 = vadd.f32 %v213, %v172
    %v280 = vadd.f32 %v209, %v173
    %v281 = vadd.f32 %v213, %v174
    %v282 = vadd.f32 %v209, %v175
    %v283 = vadd.f32 %v213, %v176
    %v284 = vadd.f32 %v209, %v177
    %v285 = vadd.f32 %v213, %v178
    %v286 = vadd.f32 %v209, %v179
    %v287 = vadd.f32 %v213, %v180
    %v288 = vadd.f32 %v209, %v181
    %v289 = vadd.f32 %v213, %v182
    %v290 = vadd.f32 %v209, %v183
    %v291 = vadd.f32 %v213, %v184
    %v292 = vadd.f32 %v209, %v185
    %v293 = vadd.f32 %v213, %v186
    %v294 = vadd.f32 %v209, %v187
    %v295 = vadd.f32 %v213, %v188
    %v296 = vadd.f32 %v209, %v189
    %v297 = vadd.f32 %v213, %v190
    %v298 = vadd.f32 %v209, %v191
    %v299 = vadd.f32 %v213, %v192
    %v300 = vadd.f32 %v209, %v193
    %v301 = vadd.f32 %v213, %v194
    %v302 = vadd.f32 %v209, %v195
    %v303 = vadd.f32 %v213, %v196
    %v304 = vadd.f32 %v209, %v197
    %v305 = vadd.f32 %v213, %v198
    %v306 = vadd.f32 %v209, %v199
    %v307 = vadd.f32 %v213, %v200
    %v308 = vadd.f32 %v209, %v201
    %v309 = vadd.f32 %v213, %v202
    %v310 = vadd.f32 %v209, %v203
    %v311 = vadd.f32 %v213, %v204
    %v312 = vmul.f32 %v216, 0.0023041475
    %v313 = vmul.f32 %v217, 0.0023041475
    %v314 = vmul.f32 %v218, 0.0023041475
    %v315 = vmul.f32 %v219, 0.0023041475
    %v316 = vmul.f32 %v220, 0.0023041475
    %v317 = vmul.f32 %v221, 0.0023041475
    %v318 = vmul.f32 %v222, 0.0023041475
    %v319 = vmul.f32 %v223, 0.0023041475
    %v320 = vmul.f32 %v224, 0.0023041475
    %v321 = vmul.f32 %v225, 0.0023041475
    %v322 = vmul.f32 %v226, 0.0023041475
    %v323 = vmul.f32 %v227, 0.0023041475
    %v324 = vmul.f32 %v228, 0.0023041475
    %v325 = vmul.f32 %v229, 0.0023041475
    %v326 = vmul.f32 %v230, 0.0023041475
    %v327 = vmul.f32 %v231, 0.0023041475
    %v328 = vmul.f32 %v232, 0.0023041475
    %v329 = vmul.f32 %v233, 0.0023041475
    %v330 = vmul.f32 %v234, 0.0023041475
    %v331 = vmul.f32 %v235, 0.0023041475
    %v332 = vmul.f32 %v236, 0.0023041475
    %v333 = vmul.f32 %v237, 0.0023041475
    %v334 = vmul.f32 %v238, 0.0023041475
    %v335 = vmul.f32 %v239, 0.0023041475
    %v336 = vmul.f32 %v240, 0.0023041475
    %v337 = vmul.f32 %v241, 0.0023041475
    %v338 = vmul.f32 %v242, 0.0023041475
    %v339 = vmul.f32 %v243, 0.0023041475
    %v340 = vmul.f32 %v244, 0.0023041475
    %v341 = vmul.f32 %v245, 0.0023041475
    %v342 = vmul.f32 %v246, 0.0023041475
    %v343 = vmul.f32 %v247, 0.0023041475
    %v344 = vmul.f32 %v248, 0.0023041475
    %v345 = vmul.f32 %v249, 0.0023041475
    %v346 = vmul.f32 %v250, 0.0023041475
    %v347 = vmul.f32 %v251, 0.0023041475
    %v348 = vmul.f32 %v252, 0.0023041475
    %v349 = vmul.f32 %v253, 0.0023041475
    %v350 = vmul.f32 %v254, 0.0023041475
    %v351 = vmul.f32 %v255, 0.0023041475
    %v352 = vmul.f32 %v256, 0.0023041475
    %v353 = vmul.f32 %v257, 0.0023041475
    %v354 = vmul.f32 %v258, 0.0023041475
    %v355 = vmul.f32 %v259, 0.0023041475
    %v356 = vmul.f32 %v260, 0.0023041475
    %v357 = vmul.f32 %v261, 0.0023041475
    %v358 = vmul.f32 %v262, 0.0023041475
    %v359 = vmul.f32 %v263, 0.0023041475
    %v360 = vmul.f32 %v264, 0.0023041475
    %v361 = vmul.f32 %v265, 0.0023041475
    %v362 = vmul.f32 %v266, 0.0023041475
    %v363 = vmul.f32 %v267, 0.0023041475
    %v364 = vmul.f32 %v268, 0.0023041475
    %v365 = vmul.f32 %v269, 0.0023041475
    %v366 = vmul.f32 %v270, 0.0023041475
    %v367 = vmul.f32 %v271, 0.0023041475
    %v368 = vmul.f32 %v272, 0.0023041475
    %v369 = vmul.f32 %v273, 0.0023041475
    %v370 = vmul.f32 %v274, 0.0023041475
    %v371 = vmul.f32 %v275, 0.0023041475
    %v372 = vmul.f32 %v276, 0.0023041475
    %v373 = vmul.f32 %v277, 0.0023041475
    %v374 = vmul.f32 %v278, 0.0023041475
    %v375 = vmul.f32 %v279, 0.0023041475
    %v376 = vmul.f32 %v280, 0.0023041475
    %v377 = vmul.f32 %v281, 0.0023041475
    %v378 = vmul.f32 %v282, 0.0023041475
    %v379 = vmul.f32 %v283, 0.0023041475
    %v380 = vmul.f32 %v284, 0.0023041475
    %v381 = vmul.f32 %v285, 0.0023041475
    %v382 = vmul.f32 %v286, 0.0023041475
    %v383 = vmul.f32 %v287, 0.0023041475
    %v384 = vmul.f32 %v288, 0.0023041475
    %v385 = vmul.f32 %v289, 0.0023041475
    %v386 = vmul.f32 %v290, 0.0023041475
    %v387 = vmul.f32 %v291, 0.0023041475
    %v388 = vmul.f32 %v292, 0.0023041475
    %v389 = vmul.f32 %v293, 0.0023041475
    %v390 = vmul.f32 %v294, 0.0023041475
    %v391 = vmul.f32 %v295, 0.0023041475
    %v392 = vmul.f32 %v296, 0.0023041475
    %v393 = vmul.f32 %v297, 0.0023041475
    %v394 = vmul.f32 %v298, 0.0023041475
    %v395 = vmul.f32 %v299, 0.0023041475
    %v396 = vmul.f32 %v300, 0.0023041475
    %v397 = vmul.f32 %v301, 0.0023041475
    %v398 = vmul.f32 %v302, 0.0023041475
    %v399 = vmul.f32 %v303, 0.0023041475
    %v400 = vmul.f32 %v304, 0.0023041475
    %v401 = vmul.f32 %v305, 0.0023041475
    %v402 = vmul.f32 %v306, 0.0023041475
    %v403 = vmul.f32 %v307, 0.0023041475
    %v404 = vmul.f32 %v308, 0.0023041475
    %v405 = vmul.f32 %v309, 0.0023041475
    %v406 = vmul.f32 %v310, 0.0023041475
    %v407 = vmul.f32 %v311, 0.0023041475
    %v408 = vmax.f32 %v312, 0.0
    %v409 = vmax.f32 %v313, 0.0
    %v410 = vmax.f32 %v314, 0.0
    %v411 = vmax.f32 %v315, 0.0
    %v412 = vmax.f32 %v316, 0.0
    %v413 = vmax.f32 %v317, 0.0
    %v414 = vmax.f32 %v318, 0.0
    %v415 = vmax.f32 %v319, 0.0
    %v416 = vmax.f32 %v320, 0.0
    %v417 = vmax.f32 %v321, 0.0
    %v418 = vmax.f32 %v322, 0.0
    %v419 = vmax.f32 %v323, 0.0
    %v420 = vmax.f32 %v324, 0.0
    %v421 = vmax.f32 %v325, 0.0
    %v422 = vmax.f32 %v326, 0.0
    %v423 = vmax.f32 %v327, 0.0
    %v424 = vmax.f32 %v328, 0.0
    %v425 = vmax.f32 %v329, 0.0
    %v426 = vmax.f32 %v330, 0.0
    %v427 = vmax.f32 %v331, 0.0
    %v428 = vmax.f32 %v332, 0.0
    %v429 = vmax.f32 %v333, 0.0
    %v430 = vmax.f32 %v334, 0.0
    %v431 = vmax.f32 %v335, 0.0
    %v432 = vmax.f32 %v336, 0.0
    %v433 = vmax.f32 %v337, 0.0
    %v434 = vmax.f32 %v338, 0.0
    %v435 = vmax.f32 %v339, 0.0
    %v436 = vmax.f32 %v340, 0.0
    %v437 = vmax.f32 %v341, 0.0
    %v438 = vmax.f32 %v342, 0.0
    %v439 = vmax.f32 %v343, 0.0
    %v440 = vmax.f32 %v344, 0.0
    %v441 = vmax.f32 %v345, 0.0
    %v442 = vmax.f32 %v346, 0.0
    %v443 = vmax.f32 %v347, 0.0
    %v444 = vmax.f32 %v348, 0.0
    %v445 = vmax.f32 %v349, 0.0
    %v446 = vmax.f32 %v350, 0.0
    %v447 = vmax.f32 %v351, 0.0
    %v448 = vmax.f32 %v352, 0.0
    %v449 = vmax.f32 %v353, 0.0
    %v450 = vmax.f32 %v354, 0.0
    %v451 = vmax.f32 %v355, 0.0
    %v452 = vmax.f32 %v356, 0.0
    %v453 = vmax.f32 %v357, 0.0
    %v454 = vmax.f32 %v358, 0.0
    %v455 = vmax.f32 %v359, 0.0
    %v456 = vmax.f32 %v360, 0.0
    %v457 = vmax.f32 %v361, 0.0
    %v458 = vmax.f32 %v362, 0.0
    %v459 = vmax.f32 %v363, 0.0
    %v460 = vmax.f32 %v364, 0.0
    %v461 = vmax.f32 %v365, 0.0
    %v462 = vmax.f32 %v366, 0.0
    %v463 = vmax.f32 %v367, 0.0
    %v464 = vmax.f32 %v368, 0.0
    %v465 = vmax.f32 %v369, 0.0
    %v466 = vmax.f32 %v370, 0.0
    %v467 = vmax.f32 %v371, 0.0
    %v468 = vmax.f32 %v372, 0.0
    %v469 = vmax.f32 %v373, 0.0
    %v470 = vmax.f32 %v374, 0.0
    %v471 = vmax.f32 %v375, 0.0
    %v472 = vmax.f32 %v376, 0.0
    %v473 = vmax.f32 %v377, 0.0
    %v474 = vmax.f32 %v378, 0.0
    %v475 = vmax.f32 %v379, 0.0
    %v476 = vmax.f32 %v380, 0.0
    %v477 = vmax.f32 %v381, 0.0
    %v478 = vmax.f32 %v382, 0.0
    %v479 = vmax.f32 %v383, 0.0
    %v480 = vmax.f32 %v384, 0.0
    %v481 = vmax.f32 %v385, 0.0
    %v482 = vmax.f32 %v386, 0.0
    %v483 = vmax.f32 %v387, 0.0
    %v484 = vmax.f32 %v388, 0.0
    %v485 = vmax.f32 %v389, 0.0
    %v486 = vmax.f32 %v390, 0.0
    %v487 = vmax.f32 %v391, 0.0
    %v488 = vmax.f32 %v392, 0.0
    %v489 = vmax.f32 %v393, 0.0
    %v490 = vmax.f32 %v394, 0.0
    %v491 = vmax.f32 %v395, 0.0
    %v492 = vmax.f32 %v396, 0.0
    %v493 = vmax.f32 %v397, 0.0
    %v494 = vmax.f32 %v398, 0.0
    %v495 = vmax.f32 %v399, 0.0
    %v496 = vmax.f32 %v400, 0.0
    %v497 = vmax.f32 %v401, 0.0
    %v498 = vmax.f32 %v402, 0.0
    %v499 = vmax.f32 %v403, 0.0
    %v500 = vmax.f32 %v404, 0.0
    %v501 = vmax.f32 %v405, 0.0
    %v502 = vmax.f32 %v406, 0.0
    %v503 = vmax.f32 %v407, 0.0
    %504 = vst [vmem:[#allocation2] sm:$0xff] %v408
    %505 = vst [vmem:[#allocation2 + $0x8] sm:$0xff] %v409
    %506 = vst [vmem:[#allocation2 + $0x10] sm:$0xff] %v410
    %507 = vst [vmem:[#allocation2 + $0x18] sm:$0xff] %v411
    %508 = vst [vmem:[#allocation2 + $0x20] sm:$0xff] %v412
    %509 = vst [vmem:[#allocation2 + $0x28] sm:$0xff] %v413
    %510 = vst [vmem:[#allocation2 + $0x30] sm:$0xff] %v414
    %511 = vst [vmem:[#allocation2 + $0x38] sm:$0xff] %v415
    %512 = vst [vmem:[#allocation2 + $0x40] sm:$0xff] %v416
    %513 = vst [vmem:[#allocation2 + $0x48] sm:$0xff] %v417
    %514 = vst [vmem:[#allocation2 + $0x50] sm:$0xff] %v418
    %515 = vst [vmem:[#allocation2 + $0x58] sm:$0xff] %v419
    %516 = vst [vmem:[#allocation2 + $0x60] sm:$0xff] %v420
    %517 = vst [vmem:[#allocation2 + $0x68] sm:$0xff] %v421
    %518 = vst [vmem:[#allocation2 + $0x70] sm:$0xff] %v422
    %519 = vst [vmem:[#allocation2 + $0x78] sm:$0xff] %v423
    %520 = vst [vmem:[#allocation2 + $0x80] sm:$0xff] %v424
    %521 = vst [vmem:[#allocation2 + $0x88] sm:$0xff] %v425
    %522 = vst [vmem:[#allocation2 + $0x90] sm:$0xff] %v426
    %523 = vst [vmem:[#allocation2 + $0x98] sm:$0xff] %v427
    %524 = vst [vmem:[#allocation2 + $0xa0] sm:$0xff] %v428
    %525 = vst [vmem:[#allocation2 + $0xa8] sm:$0xff] %v429
    %526 = vst [vmem:[#allocation2 + $0xb0] sm:$0xff] %v430
    %527 = vst [vmem:[#allocation2 + $0xb8] sm:$0xff] %v431
    %528 = vst [vmem:[#allocation2 + $0xc0] sm:$0xff] %v432
    %529 = vst [vmem:[#allocation2 + $0xc8] sm:$0xff] %v433
    %530 = vst [vmem:[#allocation2 + $0xd0] sm:$0xff] %v434
    %531 = vst [vmem:[#allocation2 + $0xd8] sm:$0xff] %v435
    %532 = vst [vmem:[#allocation2 + $0xe0] sm:$0xff] %v436
    %533 = vst [vmem:[#allocation2 + $0xe8] sm:$0xff] %v437
    %534 = vst [vmem:[#allocation2 + $0xf0] sm:$0xff] %v438
    %535 = vst [vmem:[#allocation2 + $0xf8] sm:$0xff] %v439
    %536 = vst [vmem:[#allocation2 + $0x100] sm:$0xff] %v440
    %537 = vst [vmem:[#allocation2 + $0x108] sm:$0xff] %v441
    %538 = vst [vmem:[#allocation2 + $0x110] sm:$0xff] %v442
    %539 = vst [vmem:[#allocation2 + $0x118] sm:$0xff] %v443
    %540 = vst [vmem:[#allocation2 + $0x120] sm:$0xff] %v444
    %541 = vst [vmem:[#allocation2 + $0x128] sm:$0xff] %v445
    %542 = vst [vmem:[#allocation2 + $0x130] sm:$0xff] %v446
    %543 = vst [vmem:[#allocation2 + $0x138] sm:$0xff] %v447
    %544 = vst [vmem:[#allocation2 + $0x140] sm:$0xff] %v448
    %545 = vst [vmem:[#allocation2 + $0x148] sm:$0xff] %v449
    %546 = vst [vmem:[#allocation2 + $0x150] sm:$0xff] %v450
    %547 = vst [vmem:[#allocation2 + $0x158] sm:$0xff] %v451
    %548 = vst [vmem:[#allocation2 + $0x160] sm:$0xff] %v452
    %549 = vst [vmem:[#allocation2 + $0x168] sm:$0xff] %v453
    %550 = vst [vmem:[#allocation2 + $0x170] sm:$0xff] %v454
    %551 = vst [vmem:[#allocation2 + $0x178] sm:$0xff] %v455
    %552 = vst [vmem:[#allocation2 + $0x180] sm:$0xff] %v456
    %553 = vst [vmem:[#allocation2 + $0x188] sm:$0xff] %v457
    %554 = vst [vmem:[#allocation2 + $0x190] sm:$0xff] %v458
    %555 = vst [vmem:[#allocation2 + $0x198] sm:$0xff] %v459
    %556 = vst [vmem:[#allocation2 + $0x1a0] sm:$0xff] %v460
    %557 = vst [vmem:[#allocation2 + $0x1a8] sm:$0xff] %v461
    %558 = vst [vmem:[#allocation2 + $0x1b0] sm:$0xff] %v462
    %559 = vst [vmem:[#allocation2 + $0x1b8] sm:$0xff] %v463
    %560 = vst [vmem:[#allocation2 + $0x1c0] sm:$0xff] %v464
    %561 = vst [vmem:[#allocation2 + $0x1c8] sm:$0xff] %v465
    %562 = vst [vmem:[#allocation2 + $0x1d0] sm:$0xff] %v466
    %563 = vst [vmem:[#allocation2 + $0x1d8] sm:$0xff] %v467
    %564 = vst [vmem:[#allocation2 + $0x1e0] sm:$0xff] %v468
    %565 = vst [vmem:[#allocation2 + $0x1e8] sm:$0xff] %v469
    %566 = vst [vmem:[#allocation2 + $0x1f0] sm:$0xff] %v470
    %567 = vst [vmem:[#allocation2 + $0x1f8] sm:$0xff] %v471
    %568 = vst [vmem:[#allocation2 + $0x200] sm:$0xff] %v472
    %569 = vst [vmem:[#allocation2 + $0x208] sm:$0xff] %v473
    %570 = vst [vmem:[#allocation2 + $0x210] sm:$0xff] %v474
    %571 = vst [vmem:[#allocation2 + $0x218] sm:$0xff] %v475
    %572 = vst [vmem:[#allocation2 + $0x220] sm:$0xff] %v476
    %573 = vst [vmem:[#allocation2 + $0x228] sm:$0xff] %v477
    %574 = vst [vmem:[#allocation2 + $0x230] sm:$0xff] %v478
    %575 = vst [vmem:[#allocation2 + $0x238] sm:$0xff] %v479
    %576 = vst [vmem:[#allocation2 + $0x240] sm:$0xff] %v480
    %577 = vst [vmem:[#allocation2 + $0x248] sm:$0xff] %v481
    %578 = vst [vmem:[#allocation2 + $0x250] sm:$0xff] %v482
    %579 = vst [vmem:[#allocation2 + $0x258] sm:$0xff] %v483
    %580 = vst [vmem:[#allocation2 + $0x260] sm:$0xff] %v484
    %581 = vst [vmem:[#allocation2 + $0x268] sm:$0xff] %v485
    %582 = vst [vmem:[#allocation2 + $0x270] sm:$0xff] %v486
    %583 = vst [vmem:[#allocation2 + $0x278] sm:$0xff] %v487
    %584 = vst [vmem:[#allocation2 + $0x280] sm:$0xff] %v488
    %585 = vst [vmem:[#allocation2 + $0x288] sm:$0xff] %v489
    %586 = vst [vmem:[#allocation2 + $0x290] sm:$0xff] %v490
    %587 = vst [vmem:[#allocation2 + $0x298] sm:$0xff] %v491
    %588 = vst [vmem:[#allocation2 + $0x2a0] sm:$0xff] %v492
    %589 = vst [vmem:[#allocation2 + $0x2a8] sm:$0xff] %v493
    %590 = vst [vmem:[#allocation2 + $0x2b0] sm:$0xff] %v494
    %591 = vst [vmem:[#allocation2 + $0x2b8] sm:$0xff] %v495
    %592 = vst [vmem:[#allocation2 + $0x2c0] sm:$0xff] %v496
    %593 = vst [vmem:[#allocation2 + $0x2c8] sm:$0xff] %v497
    %594 = vst [vmem:[#allocation2 + $0x2d0] sm:$0xff] %v498
    %595 = vst [vmem:[#allocation2 + $0x2d8] sm:$0xff] %v499
    %596 = vst [vmem:[#allocation2 + $0x2e0] sm:$0xff] %v500
    %597 = vst [vmem:[#allocation2 + $0x2e8] sm:$0xff] %v501
    %598 = vst [vmem:[#allocation2 + $0x2f0] sm:$0xff] %v502
    %599 = vst [vmem:[#allocation2 + $0x2f8] sm:$0xff] %v503
    // Predicated region
    $region10: #{stack_gcn_encoder_forward.11} parent=1 // pred_check
      _
    $region11: #{stack_gcn_encoder_forward.11} parent=1 // pred_check_branch
      %601 = sbr.rel (0) target = $region13
    $region12: #{stack_gcn_encoder_forward.11} parent=1 // pred_region
      %s603 = ssub.s32 12288, 12288
      %604 = vsyncadd [#allocation3], %s603
      %s605 = sshll.u32 [#allocation2], 4
      %s606 = int_to_ptr.vmem [resolvable:$true] %s605
      %611 = dma.vmem_to_hbm [thread:$0]  %s606, 12288, %s2, [#allocation3], 256, 256, 16
    $region13: #{stack_gcn_encoder_forward.11} parent=1 // pred_fallthru
      _
    // Predicated region
    $region14: #{stack_gcn_encoder_forward.11} parent=1 // pred_check
      _
    $region15: #{stack_gcn_encoder_forward.11} parent=1 // pred_check_branch
      %613 = sbr.rel (0) target = $region17
    $region16: #{stack_gcn_encoder_forward.11} parent=1 // pred_region
      %614 = dma.done [#allocation3], 12288
    $region17: #{stack_gcn_encoder_forward.11} parent=1 // pred_fallthru
      _
    %615 = vsyncpa [#allocation3], 1

// kernel: stack_gcn_encoder_forward.9
$region0: #{stack_gcn_encoder_forward.9}
  #allocation0 [shape = 'u32[]', space=smem, size = 0x4, offset = 0x4, fixed_abs, tag = 'smem constant byte address 0x4 - core index']
  #allocation1 [shape = 'u32[144,128]{1,0:T(1,128)}', space=vmem, size = 0x12000, scoped, tag = 'internal scratch']
  %s0 = inlined_call_operand.hbm [shape: f32[2,384,256], index: 0, kind: input, shape index: {}]
  %s1 = inlined_call_operand.vmem [shape: bf16[2,256,128], index: 1, kind: input, shape index: {}]
  %s2 = inlined_call_operand.vmem [shape: f32[384,256], index: 2, kind: output, shape index: {0}]
  %s3 = inlined_call_operand.vmem [shape: f32[8,256], index: 3, kind: output, shape index: {1}]
  %4 = xla_tuple %s2, %s3
  %s5 = sld [smem:[#allocation0]]
  $region87: #{stack_gcn_encoder_forward.9} parent=0
    _
  %s7 = ssub.s32 1, %s5
  %s8 = scalar_select 0, %s7, %s5
  $region1: #{stack_gcn_encoder_forward.9} parent=0
    #allocation2 [shape = 'u8[786432]{0}', space=vmem, size = 0xc0000, scoped, tag = 'input window, operand 0']
    #allocation3 [shape = 's32[2]{0}', space=sflag, size = 0x8, scoped, tag = 'scoped memory for stack_gcn_encoder_forward.9']
    #allocation4 [shape = 'u8[393216]{0}', space=vmem, size = 0x60000, scoped, tag = 'output window, operand 0']
    %9 = vsyncpa [#allocation3], 0
    %s10 = scalar_lea.sflag [#allocation3], 1
    %11 = vsyncpa %s10, 0
    loop: start=0, step=1, limit=4
    $region2: #{stack_gcn_encoder_forward.9} parent=1 // loop_pre_header
      _
    $region3: #{stack_gcn_encoder_forward.9} parent=1 // loop_header
      %s13 = sphi 0, %s17
      %p14 = scmp.ge.s32.totalorder %s13, 4
      %s20 = sphi 0, %s32
      %s21 = sphi 0, %s28
      %s22 = sphi 0, %s20
      %s23 = sphi 0, %s21
      %s24 = sphi 0, %s22
      %s25 = sphi 0, %s23
      %s37 = sphi 0, %s39
      %s40 = sphi 0, %s37
      %s41 = sphi 0, %s40
      %s57 = sphi 0, %s41
      %s63 = sphi 0, %s65
      %s66 = sphi 0, %s63
      %s67 = sphi 0, %s66
      %s83 = sphi 0, %s67
      %s91 = sphi 0, %s93
      %s94 = sphi 0, %s91
      %s95 = sphi 0, %s94
      %s111 = sphi 0, %s95
      %s119 = sphi 0, %s121
      %s122 = sphi 0, %s119
      %s123 = sphi 0, %s122
      %s139 = sphi 0, %s123
    $region4: #{stack_gcn_encoder_forward.9} parent=1 // loop_header_branch
      %16 = sbr.rel (%p14) target = $region8
    $region5: #{stack_gcn_encoder_forward.9} parent=1 // loop_body
      %s18 = ssub.s32 %s13, 1
      %s19 = ssub.s32 %s13, 2
      %s26 = sadd.s32 1, %s21
      %p27 = scmp.ge.s32.totalorder %s26, 1
      %s28 = scalar_select %p27, 0, %s26
      %s29 = sadd.s32 1, %s20
      %s30 = scalar_select %p27, %s29, %s20
      %p31 = scmp.ge.s32.totalorder %s30, 2
      %s32 = scalar_select %p31, 0, %s30
      %s33 = ssub.s32 %s20, %s32
      %s34 = ssub.s32 %s21, %s28
      %s35 = sor.u32 %s33, %s34
      %p36 = scmp.eq.s32.totalorder %s35, 0
      %s38 = sadd.s32 %s37, 1
      %s39 = scalar_select %p36, %s37, %s38
      %p42 = pneg %p36
      %p43 = scmp.eq.s32.totalorder %s13, 1
      %p44 = por %p42, %p43
      %p45 = scmp.ne.s32.totalorder %s37, %s40
      %p46 = scmp.eq.s32.totalorder %s13, 0
      %p47 = por %p45, %p46
      %p48 = scmp.ne.s32.totalorder %s37, %s40
      %p49 = scmp.eq.s32.totalorder %s18, 1
      %p50 = por %p48, %p49
      %p51 = scmp.ne.s32.totalorder %s40, %s41
      %p52 = scmp.eq.s32.totalorder %s18, 0
      %p53 = por %p51, %p52
      %p54 = scmp.ne.s32.totalorder %s40, %s41
      %p55 = scmp.eq.s32.totalorder %s19, 1
      %p56 = por %p54, %p55
      %p58 = scmp.ne.s32.totalorder %s41, %s57
      %p59 = scmp.eq.s32.totalorder %s19, 0
      %p60 = por %p58, %p59
      %s61 = ssub.s32 %s20, %s32
      %p62 = scmp.eq.s32.totalorder %s61, 0
      %s64 = sadd.s32 %s63, 1
      %s65 = scalar_select %p62, %s63, %s64
      %p68 = pneg %p62
      %p69 = scmp.eq.s32.totalorder %s13, 1
      %p70 = por %p68, %p69
      %p71 = scmp.ne.s32.totalorder %s63, %s66
      %p72 = scmp.eq.s32.totalorder %s13, 0
      %p73 = por %p71, %p72
      %p74 = scmp.ne.s32.totalorder %s63, %s66
      %p75 = scmp.eq.s32.totalorder %s18, 1
      %p76 = por %p74, %p75
      %p77 = scmp.ne.s32.totalorder %s66, %s67
      %p78 = scmp.eq.s32.totalorder %s18, 0
      %p79 = por %p77, %p78
      %p80 = scmp.ne.s32.totalorder %s66, %s67
      %p81 = scmp.eq.s32.totalorder %s19, 1
      %p82 = por %p80, %p81
      %p84 = scmp.ne.s32.totalorder %s67, %s83
      %p85 = scmp.eq.s32.totalorder %s19, 0
      %p86 = por %p84, %p85
      %s87 = ssub.s32 %s21, %s28
      %s88 = ssub.s32 %s20, %s32
      %s89 = sor.u32 %s87, %s88
      %p90 = scmp.eq.s32.totalorder %s89, 0
      %s92 = sadd.s32 %s91, 1
      %s93 = scalar_select %p90, %s91, %s92
      %p96 = pneg %p90
      %p97 = scmp.eq.s32.totalorder %s13, 1
      %p98 = por %p96, %p97
      %p99 = scmp.ne.s32.totalorder %s91, %s94
      %p100 = scmp.eq.s32.totalorder %s13, 0
      %p101 = por %p99, %p100
      %p102 = scmp.ne.s32.totalorder %s91, %s94
      %p103 = scmp.eq.s32.totalorder %s18, 1
      %p104 = por %p102, %p103
      %p105 = scmp.ne.s32.totalorder %s94, %s95
      %p106 = scmp.eq.s32.totalorder %s18, 0
      %p107 = por %p105, %p106
      %p108 = scmp.ne.s32.totalorder %s94, %s95
      %p109 = scmp.eq.s32.totalorder %s19, 1
      %p110 = por %p108, %p109
      %p112 = scmp.ne.s32.totalorder %s95, %s111
      %p113 = scmp.eq.s32.totalorder %s19, 0
      %p114 = por %p112, %p113
      %s115 = ssub.s32 %s21, %s28
      %s116 = ssub.s32 %s20, %s32
      %s117 = sor.u32 %s115, %s116
      %p118 = scmp.eq.s32.totalorder %s117, 0
      %s120 = sadd.s32 %s119, 1
      %s121 = scalar_select %p118, %s119, %s120
      %p124 = pneg %p118
      %p125 = scmp.eq.s32.totalorder %s13, 1
      %p126 = por %p124, %p125
      %p127 = scmp.ne.s32.totalorder %s119, %s122
      %p128 = scmp.eq.s32.totalorder %s13, 0
      %p129 = por %p127, %p128
      %p130 = scmp.ne.s32.totalorder %s119, %s122
      %p131 = scmp.eq.s32.totalorder %s18, 1
      %p132 = por %p130, %p131
      %p133 = scmp.ne.s32.totalorder %s122, %s123
      %p134 = scmp.eq.s32.totalorder %s18, 0
      %p135 = por %p133, %p134
      %p136 = scmp.ne.s32.totalorder %s122, %s123
      %p137 = scmp.eq.s32.totalorder %s19, 1
      %p138 = por %p136, %p137
      %p140 = scmp.ne.s32.totalorder %s123, %s139
      %p141 = scmp.eq.s32.totalorder %s19, 0
      %p142 = por %p140, %p141
      %p143 = scmp.le.s32.totalorder 1, %s13
      %p144 = scmp.lt.s32.totalorder %s13, 3
      %p145 = pnand %p143, %p144
      %p146 = pneg %p145
      // Predicated region
      $region9: #{stack_gcn_encoder_forward.9} parent=5 // pred_check
        _
      $region10: #{stack_gcn_encoder_forward.9} parent=5 // pred_check_branch
        %148 = sbr.rel (%p145) target = $region12
      $region11: #{stack_gcn_encoder_forward.9} parent=5 // pred_region
        %s149 = ssub.s32 %s13, 1
      $region12: #{stack_gcn_encoder_forward.9} parent=5 // pred_fallthru
        _
      %p150 = scmp.lt.s32.totalorder %s13, 2
      // Predicated region
      $region13: #{stack_gcn_encoder_forward.9} parent=5 // pred_check
        %p151 = pneg %p150
      $region14: #{stack_gcn_encoder_forward.9} parent=5 // pred_check_branch
        %153 = sbr.rel (%p151) target = $region16
      $region15: #{stack_gcn_encoder_forward.9} parent=5 // pred_region
        // Predicated region
        $region17: #{stack_gcn_encoder_forward.9} parent=15 // pred_check
          %p154 = pneg %p47
        $region18: #{stack_gcn_encoder_forward.9} parent=15 // pred_check_branch
          %156 = sbr.rel (%p154) target = $region20
        $region19: #{stack_gcn_encoder_forward.9} parent=15 // pred_region
          %s157 = sand.u32 %s37, 1
          %s158 = scalar_lea.sflag [#allocation3], %s157
          %s159 = sand.u32 %s37, 1
          %s160 = smul.addr %s159, 768
          %s161 = scalar_lea.vmem [#allocation2], %s160
          %s162 = smul.u32 48, %s21
          %s164 = ssub.s32 12288, 12288
          %165 = vsyncadd %s158, %s164
          %s166 = smul.addr %s162, 2
          %s167 = smul.addr %s20, 96
          %s168 = sadd.s32 %s166, %s167
          %s169 = smul.addr %s168, 128
          %s170 = scalar_lea.hbm %s0, %s169
          %s171 = sshll.u32 %s161, 4
          %s172 = int_to_ptr.vmem [resolvable:$true] %s171
          %177 = dma.hbm_to_vmem [thread:$0]  %s170, 12288, %s172, %s158, 256, 256, 16
        $region20: #{stack_gcn_encoder_forward.9} parent=15 // pred_fallthru
          _
        // Predicated region
        $region21: #{stack_gcn_encoder_forward.9} parent=15 // pred_check
          %p178 = pneg %p73
        $region22: #{stack_gcn_encoder_forward.9} parent=15 // pred_check_branch
          %180 = sbr.rel (%p178) target = $region24
        $region23: #{stack_gcn_encoder_forward.9} parent=15 // pred_region
          %p181 = scmp.lt.s32.totalorder %s20, 1
          %s182 = scalar_select %p181, %s20, 1
          %s183 = smul.addr %s182, 32
          %s184 = smul.addr %s183, 4
          %s185 = scalar_lea.vmem %s1, %s184
        $region24: #{stack_gcn_encoder_forward.9} parent=15 // pred_fallthru
          _
      $region16: #{stack_gcn_encoder_forward.9} parent=5 // pred_fallthru
        _
      %p186 = scmp.le.s32.totalorder 1, %s13
      %p187 = scmp.lt.s32.totalorder %s13, 3
      %p188 = pnand %p186, %p187
      %p189 = pneg %p188
      // Predicated region
      $region25: #{stack_gcn_encoder_forward.9} parent=5 // pred_check
        _
      $region26: #{stack_gcn_encoder_forward.9} parent=5 // pred_check_branch
        %191 = sbr.rel (%p188) target = $region28
      $region27: #{stack_gcn_encoder_forward.9} parent=5 // pred_region
        %s192 = ssub.s32 %s13, 1
        %s193 = sand.u32 %s40, 1
        %s194 = scalar_lea.sflag [#allocation3], %s193
        %s195 = sand.u32 %s40, 1
        %s196 = smul.addr %s195, 768
        %s197 = scalar_lea.vmem [#allocation2], %s196
        // Predicated region
        $region29: #{stack_gcn_encoder_forward.9} parent=27 // pred_check
          %p198 = pneg %p53
        $region30: #{stack_gcn_encoder_forward.9} parent=27 // pred_check_branch
          %200 = sbr.rel (%p198) target = $region32
        $region31: #{stack_gcn_encoder_forward.9} parent=27 // pred_region
          %201 = dma.done %s194, 12288
        $region32: #{stack_gcn_encoder_forward.9} parent=27 // pred_fallthru
          _
        %s202 = sand.u32 %s40, 1
        %s203 = scalar_lea.sflag [#allocation3], %s202
        %s204 = sand.u32 %s40, 1
        %s205 = smul.addr %s204, 768
        %s206 = scalar_lea.vmem [#allocation2], %s205
        %p207 = pneg %p53
        %p208 = pneg %p50
        %p209 = scmp.lt.s32.totalorder %s22, 1
        %s210 = scalar_select %p209, %s22, 1
        %s211 = smul.addr %s210, 32
        %s212 = smul.addr %s211, 4
        %s213 = scalar_lea.vmem %s1, %s212
        %p214 = pneg %p79
        %p215 = pneg %p76
        %p216 = pneg %p107
        %p217 = pneg %p104
        %s218 = sand.u32 %s94, 1
        %s219 = sand.u32 %s94, 1
        %s220 = smul.addr %s219, 384
        %s221 = scalar_lea.vmem [#allocation4], %s220
        %p222 = pneg %p135
        %p223 = pneg %p132
        %p224 = scmp.lt.s32.totalorder %s23, 0
        %s225 = scalar_select %p224, %s23, 0
        %p226 = scmp.lt.s32.totalorder %s22, 1
        %s227 = scalar_select %p226, %s22, 1
        %s228 = smul.addr %s225, 2
        %s229 = sadd.s32 %s227, %s228
        %s230 = smul.addr %s229, 8
        %s231 = scalar_lea.vmem %s3, %s230
        %s232 = smul.u32 48, %s23
        %p233 = scmp.lt.s32.totalorder %s22, 1
        %s234 = scalar_select %p233, %s22, 1
        %s235 = smul.addr %s234, 32
        %s236 = smul.addr %s235, 4
        %s237 = scalar_lea.vmem %s1, %s236
        %s238 = smul.u32 48, %s23
        %p239 = scmp.lt.s32.totalorder %s23, 0
        %s240 = scalar_select %p239, %s23, 0
        %p241 = scmp.lt.s32.totalorder %s22, 1
        %s242 = scalar_select %p241, %s22, 1
        %s243 = smul.addr %s240, 2
        %s244 = sadd.s32 %s242, %s243
        %s245 = smul.addr %s244, 8
        %s246 = scalar_lea.vmem %s3, %s245
        %v248 = vld [vmem:[%s197] sm:$0xff]
        %v249 = vld [vmem:[%s197 + $0x8] sm:$0xff]
        %v250 = vld [vmem:[%s197 + $0x10] sm:$0xff]
        %v251 = vld [vmem:[%s197 + $0x18] sm:$0xff]
        %v252 = vld [vmem:[%s197 + $0x20] sm:$0xff]
        %v253 = vld [vmem:[%s197 + $0x28] sm:$0xff]
        %v254 = vld [vmem:[%s197 + $0x30] sm:$0xff]
        %v255 = vld [vmem:[%s197 + $0x38] sm:$0xff]
        %v256 = vld [vmem:[%s197 + $0x40] sm:$0xff]
        %v257 = vld [vmem:[%s197 + $0x48] sm:$0xff]
        %v258 = vld [vmem:[%s197 + $0x50] sm:$0xff]
        %v259 = vld [vmem:[%s197 + $0x58] sm:$0xff]
        %v260 = vld [vmem:[%s197 + $0x60] sm:$0xff]
        %v261 = vld [vmem:[%s197 + $0x68] sm:$0xff]
        %v262 = vld [vmem:[%s197 + $0x70] sm:$0xff]
        %v263 = vld [vmem:[%s197 + $0x78] sm:$0xff]
        %v264 = vld [vmem:[%s197 + $0x80] sm:$0xff]
        %v265 = vld [vmem:[%s197 + $0x88] sm:$0xff]
        %v266 = vld [vmem:[%s197 + $0x90] sm:$0xff]
        %v267 = vld [vmem:[%s197 + $0x98] sm:$0xff]
        %v268 = vld [vmem:[%s197 + $0xa0] sm:$0xff]
        %v269 = vld [vmem:[%s197 + $0xa8] sm:$0xff]
        %v270 = vld [vmem:[%s197 + $0xb0] sm:$0xff]
        %v271 = vld [vmem:[%s197 + $0xb8] sm:$0xff]
        %v272 = vld [vmem:[%s197 + $0xc0] sm:$0xff]
        %v273 = vld [vmem:[%s197 + $0xc8] sm:$0xff]
        %v274 = vld [vmem:[%s197 + $0xd0] sm:$0xff]
        %v275 = vld [vmem:[%s197 + $0xd8] sm:$0xff]
        %v276 = vld [vmem:[%s197 + $0xe0] sm:$0xff]
        %v277 = vld [vmem:[%s197 + $0xe8] sm:$0xff]
        %v278 = vld [vmem:[%s197 + $0xf0] sm:$0xff]
        %v279 = vld [vmem:[%s197 + $0xf8] sm:$0xff]
        %v280 = vld [vmem:[%s197 + $0x100] sm:$0xff]
        %v281 = vld [vmem:[%s197 + $0x108] sm:$0xff]
        %v282 = vld [vmem:[%s197 + $0x110] sm:$0xff]
        %v283 = vld [vmem:[%s197 + $0x118] sm:$0xff]
        %v284 = vld [vmem:[%s197 + $0x120] sm:$0xff]
        %v285 = vld [vmem:[%s197 + $0x128] sm:$0xff]
        %v286 = vld [vmem:[%s197 + $0x130] sm:$0xff]
        %v287 = vld [vmem:[%s197 + $0x138] sm:$0xff]
        %v288 = vld [vmem:[%s197 + $0x140] sm:$0xff]
        %v289 = vld [vmem:[%s197 + $0x148] sm:$0xff]
        %v290 = vld [vmem:[%s197 + $0x150] sm:$0xff]
        %v291 = vld [vmem:[%s197 + $0x158] sm:$0xff]
        %v292 = vld [vmem:[%s197 + $0x160] sm:$0xff]
        %v293 = vld [vmem:[%s197 + $0x168] sm:$0xff]
        %v294 = vld [vmem:[%s197 + $0x170] sm:$0xff]
        %v295 = vld [vmem:[%s197 + $0x178] sm:$0xff]
        %v296 = vld [vmem:[%s197 + $0x180] sm:$0xff]
        %v297 = vld [vmem:[%s197 + $0x188] sm:$0xff]
        %v298 = vld [vmem:[%s197 + $0x190] sm:$0xff]
        %v299 = vld [vmem:[%s197 + $0x198] sm:$0xff]
        %v300 = vld [vmem:[%s197 + $0x1a0] sm:$0xff]
        %v301 = vld [vmem:[%s197 + $0x1a8] sm:$0xff]
        %v302 = vld [vmem:[%s197 + $0x1b0] sm:$0xff]
        %v303 = vld [vmem:[%s197 + $0x1b8] sm:$0xff]
        %v304 = vld [vmem:[%s197 + $0x1c0] sm:$0xff]
        %v305 = vld [vmem:[%s197 + $0x1c8] sm:$0xff]
        %v306 = vld [vmem:[%s197 + $0x1d0] sm:$0xff]
        %v307 = vld [vmem:[%s197 + $0x1d8] sm:$0xff]
        %v308 = vld [vmem:[%s197 + $0x1e0] sm:$0xff]
        %v309 = vld [vmem:[%s197 + $0x1e8] sm:$0xff]
        %v310 = vld [vmem:[%s197 + $0x1f0] sm:$0xff]
        %v311 = vld [vmem:[%s197 + $0x1f8] sm:$0xff]
        %v312 = vld [vmem:[%s197 + $0x200] sm:$0xff]
        %v313 = vld [vmem:[%s197 + $0x208] sm:$0xff]
        %v314 = vld [vmem:[%s197 + $0x210] sm:$0xff]
        %v315 = vld [vmem:[%s197 + $0x218] sm:$0xff]
        %v316 = vld [vmem:[%s197 + $0x220] sm:$0xff]
        %v317 = vld [vmem:[%s197 + $0x228] sm:$0xff]
        %v318 = vld [vmem:[%s197 + $0x230] sm:$0xff]
        %v319 = vld [vmem:[%s197 + $0x238] sm:$0xff]
        %v320 = vld [vmem:[%s197 + $0x240] sm:$0xff]
        %v321 = vld [vmem:[%s197 + $0x248] sm:$0xff]
        %v322 = vld [vmem:[%s197 + $0x250] sm:$0xff]
        %v323 = vld [vmem:[%s197 + $0x258] sm:$0xff]
        %v324 = vld [vmem:[%s197 + $0x260] sm:$0xff]
        %v325 = vld [vmem:[%s197 + $0x268] sm:$0xff]
        %v326 = vld [vmem:[%s197 + $0x270] sm:$0xff]
        %v327 = vld [vmem:[%s197 + $0x278] sm:$0xff]
        %v328 = vld [vmem:[%s197 + $0x280] sm:$0xff]
        %v329 = vld [vmem:[%s197 + $0x288] sm:$0xff]
        %v330 = vld [vmem:[%s197 + $0x290] sm:$0xff]
        %v331 = vld [vmem:[%s197 + $0x298] sm:$0xff]
        %v332 = vld [vmem:[%s197 + $0x2a0] sm:$0xff]
        %v333 = vld [vmem:[%s197 + $0x2a8] sm:$0xff]
        %v334 = vld [vmem:[%s197 + $0x2b0] sm:$0xff]
        %v335 = vld [vmem:[%s197 + $0x2b8] sm:$0xff]
        %v336 = vld [vmem:[%s197 + $0x2c0] sm:$0xff]
        %v337 = vld [vmem:[%s197 + $0x2c8] sm:$0xff]
        %v338 = vld [vmem:[%s197 + $0x2d0] sm:$0xff]
        %v339 = vld [vmem:[%s197 + $0x2d8] sm:$0xff]
        %v340 = vld [vmem:[%s197 + $0x2e0] sm:$0xff]
        %v341 = vld [vmem:[%s197 + $0x2e8] sm:$0xff]
        %v342 = vld [vmem:[%s197 + $0x2f0] sm:$0xff]
        %v343 = vld [vmem:[%s197 + $0x2f8] sm:$0xff]
        %v344 = vpack.c.bf16 %v250, %v248
        %v345 = vpack.c.bf16 %v251, %v249
        %v346 = vpack.c.bf16 %v254, %v252
        %v347 = vpack.c.bf16 %v255, %v253
        %v348 = vpack.c.bf16 %v258, %v256
        %v349 = vpack.c.bf16 %v259, %v257
        %v350 = vpack.c.bf16 %v262, %v260
        %v351 = vpack.c.bf16 %v263, %v261
        %v352 = vpack.c.bf16 %v266, %v264
        %v353 = vpack.c.bf16 %v267, %v265
        %v354 = vpack.c.bf16 %v270, %v268
        %v355 = vpack.c.bf16 %v271, %v269
        %v356 = vpack.c.bf16 %v274, %v272
        %v357 = vpack.c.bf16 %v275, %v273
        %v358 = vpack.c.bf16 %v278, %v276
        %v359 = vpack.c.bf16 %v279, %v277
        %v360 = vpack.c.bf16 %v282, %v280
        %v361 = vpack.c.bf16 %v283, %v281
        %v362 = vpack.c.bf16 %v286, %v284
        %v363 = vpack.c.bf16 %v287, %v285
        %v364 = vpack.c.bf16 %v290, %v288
        %v365 = vpack.c.bf16 %v291, %v289
        %v366 = vpack.c.bf16 %v294, %v292
        %v367 = vpack.c.bf16 %v295, %v293
        %v368 = vpack.c.bf16 %v298, %v296
        %v369 = vpack.c.bf16 %v299, %v297
        %v370 = vpack.c.bf16 %v302, %v300
        %v371 = vpack.c.bf16 %v303, %v301
        %v372 = vpack.c.bf16 %v306, %v304
        %v373 = vpack.c.bf16 %v307, %v305
        %v374 = vpack.c.bf16 %v310, %v308
        %v375 = vpack.c.bf16 %v311, %v309
        %v376 = vpack.c.bf16 %v314, %v312
        %v377 = vpack.c.bf16 %v315, %v313
        %v378 = vpack.c.bf16 %v318, %v316
        %v379 = vpack.c.bf16 %v319, %v317
        %v380 = vpack.c.bf16 %v322, %v320
        %v381 = vpack.c.bf16 %v323, %v321
        %v382 = vpack.c.bf16 %v326, %v324
        %v383 = vpack.c.bf16 %v327, %v325
        %v384 = vpack.c.bf16 %v330, %v328
        %v385 = vpack.c.bf16 %v331, %v329
        %v386 = vpack.c.bf16 %v334, %v332
        %v387 = vpack.c.bf16 %v335, %v333
        %v388 = vpack.c.bf16 %v338, %v336
        %v389 = vpack.c.bf16 %v339, %v337
        %v390 = vpack.c.bf16 %v342, %v340
        %v391 = vpack.c.bf16 %v343, %v341
        %v392 = vld [vmem:[%s237] sm:$0xf]
        %v393 = vld [vmem:[%s237 + $0x4] sm:$0xf]
        %v394 = vld [vmem:[%s237 + $0x8] sm:$0xf]
        %v395 = vld [vmem:[%s237 + $0xc] sm:$0xf]
        %v396 = vld [vmem:[%s237 + $0x10] sm:$0xf]
        %v397 = vld [vmem:[%s237 + $0x14] sm:$0xf]
        %v398 = vld [vmem:[%s237 + $0x18] sm:$0xf]
        %v399 = vld [vmem:[%s237 + $0x1c] sm:$0xf]
        %v400 = vld [vmem:[%s237 + $0x20] sm:$0xf]
        %v401 = vld [vmem:[%s237 + $0x24] sm:$0xf]
        %v402 = vld [vmem:[%s237 + $0x28] sm:$0xf]
        %v403 = vld [vmem:[%s237 + $0x2c] sm:$0xf]
        %v404 = vld [vmem:[%s237 + $0x30] sm:$0xf]
        %v405 = vld [vmem:[%s237 + $0x34] sm:$0xf]
        %v406 = vld [vmem:[%s237 + $0x38] sm:$0xf]
        %v407 = vld [vmem:[%s237 + $0x3c] sm:$0xf]
        %v408 = vld [vmem:[%s237 + $0x40] sm:$0xf]
        %v409 = vld [vmem:[%s237 + $0x44] sm:$0xf]
        %v410 = vld [vmem:[%s237 + $0x48] sm:$0xf]
        %v411 = vld [vmem:[%s237 + $0x4c] sm:$0xf]
        %v412 = vld [vmem:[%s237 + $0x50] sm:$0xf]
        %v413 = vld [vmem:[%s237 + $0x54] sm:$0xf]
        %v414 = vld [vmem:[%s237 + $0x58] sm:$0xf]
        %v415 = vld [vmem:[%s237 + $0x5c] sm:$0xf]
        %v416 = vld [vmem:[%s237 + $0x60] sm:$0xf]
        %v417 = vld [vmem:[%s237 + $0x64] sm:$0xf]
        %v418 = vld [vmem:[%s237 + $0x68] sm:$0xf]
        %v419 = vld [vmem:[%s237 + $0x6c] sm:$0xf]
        %v420 = vld [vmem:[%s237 + $0x70] sm:$0xf]
        %v421 = vld [vmem:[%s237 + $0x74] sm:$0xf]
        %v422 = vld [vmem:[%s237 + $0x78] sm:$0xf]
        %v423 = vld [vmem:[%s237 + $0x7c] sm:$0xf]
        %v456 = vunpack.c.l.b16 %v392
        %v457 = vunpack.c.l.b16 %v393
        %v458 = vunpack.c.l.b16 %v394
        %v459 = vunpack.c.l.b16 %v395
        %v460 = vunpack.c.l.b16 %v396
        %v461 = vunpack.c.l.b16 %v397
        %v462 = vunpack.c.l.b16 %v398
        %v463 = vunpack.c.l.b16 %v399
        %v464 = vunpack.c.l.b16 %v400
        %v465 = vunpack.c.l.b16 %v401
        %v466 = vunpack.c.l.b16 %v402
        %v467 = vunpack.c.l.b16 %v403
        %v468 = vunpack.c.l.b16 %v404
        %v469 = vunpack.c.l.b16 %v405
        %v470 = vunpack.c.l.b16 %v406
        %v471 = vunpack.c.l.b16 %v407
        %v472 = vunpack.c.l.b16 %v408
        %v473 = vunpack.c.l.b16 %v409
        %v474 = vunpack.c.l.b16 %v410
        %v475 = vunpack.c.l.b16 %v411
        %v476 = vunpack.c.l.b16 %v412
        %v477 = vunpack.c.l.b16 %v413
        %v478 = vunpack.c.l.b16 %v414
        %v479 = vunpack.c.l.b16 %v415
        %v480 = vunpack.c.l.b16 %v416
        %v481 = vunpack.c.l.b16 %v417
        %v482 = vunpack.c.l.b16 %v418
        %v483 = vunpack.c.l.b16 %v419
        %v484 = vunpack.c.l.b16 %v420
        %v485 = vunpack.c.l.b16 %v421
        %v486 = vunpack.c.l.b16 %v422
        %v487 = vunpack.c.l.b16 %v423
        %v488 = vpack.c.b16 %v457, %v456
        %v489 = vpack.c.b16 %v459, %v458
        %v490 = vpack.c.b16 %v461, %v460
        %v491 = vpack.c.b16 %v463, %v462
        %v492 = vpack.c.b16 %v465, %v464
        %v493 = vpack.c.b16 %v467, %v466
        %v494 = vpack.c.b16 %v469, %v468
        %v495 = vpack.c.b16 %v471, %v470
        %v496 = vpack.c.b16 %v473, %v472
        %v497 = vpack.c.b16 %v475, %v474
        %v498 = vpack.c.b16 %v477, %v476
        %v499 = vpack.c.b16 %v479, %v478
        %v500 = vpack.c.b16 %v481, %v480
        %v501 = vpack.c.b16 %v483, %v482
        %v502 = vpack.c.b16 %v485, %v484
        %v503 = vpack.c.b16 %v487, %v486
        %520 = vmatprep.subr.bf16.mxu0 0
        %521 = vmatpush1.bf16.msra.mxu0 %v495
        %522 = vmatprep.subr.bf16.mxu0 0
        %523 = vmatpush1.bf16.msra.mxu0 %v494
        %524 = vmatprep.subr.bf16.mxu0 0
        %525 = vmatpush1.bf16.msra.mxu0 %v493
        %526 = vmatprep.subr.bf16.mxu0 0
        %527 = vmatpush1.bf16.msra.mxu0 %v492
        %528 = vmatprep.subr.bf16.mxu0 0
        %529 = vmatpush1.bf16.msra.mxu0 %v491
        %530 = vmatprep.subr.bf16.mxu0 0
        %531 = vmatpush1.bf16.msra.mxu0 %v490
        %532 = vmatprep.subr.bf16.mxu0 0
        %533 = vmatpush1.bf16.msra.mxu0 %v489
        %534 = vmatprep.subr.bf16.mxu0 0
        %535 = vmatpush1.bf16.msra.mxu0 %v488
        %536 = vmatprep.subr.bf16.mxu0 0
        %537 = vmatpush2.bf16.msra.mxu0 %v503
        %538 = vmatprep.subr.bf16.mxu0 0
        %539 = vmatpush2.bf16.msra.mxu0 %v502
        %540 = vmatprep.subr.bf16.mxu0 0
        %541 = vmatpush2.bf16.msra.mxu0 %v501
        %542 = vmatprep.subr.bf16.mxu0 0
        %543 = vmatpush2.bf16.msra.mxu0 %v500
        %544 = vmatprep.subr.bf16.mxu0 0
        %545 = vmatpush2.bf16.msra.mxu0 %v499
        %546 = vmatprep.subr.bf16.mxu0 0
        %547 = vmatpush2.bf16.msra.mxu0 %v498
        %548 = vmatprep.subr.bf16.mxu0 0
        %549 = vmatpush2.bf16.msra.mxu0 %v497
        %550 = vmatprep.subr.bf16.mxu0 0
        %551 = vmatpush2.bf16.msra.mxu0 %v496
        %552 = vmatprep.mubr.bf16.mxu0 %v345
        %553 = vmatmul.mubr.bf16.gmra.mxu0 %v344
        %v554 = vpop.f32.mrf.mxu0
        %v555 = vadd.f32 0.0, %v554
        %v556 = vpop.f32.mrf.mxu0
        %v557 = vpop.f32.mrf.mxu0
        %v558 = vadd.f32 0.0, %v557
        %v559 = vpop.f32.mrf.mxu0
        %560 = vmatprep.mubr.bf16.mxu0 %v347
        %561 = vmatmul.mubr.bf16.gmra.mxu0 %v346
        %v562 = vpop.f32.mrf.mxu0
        %v563 = vadd.f32 0.0, %v562
        %v564 = vpop.f32.mrf.mxu0
        %v565 = vpop.f32.mrf.mxu0
        %v566 = vadd.f32 0.0, %v565
        %v567 = vpop.f32.mrf.mxu0
        %568 = vmatprep.mubr.bf16.mxu0 %v349
        %569 = vmatmul.mubr.bf16.gmra.mxu0 %v348
        %v570 = vpop.f32.mrf.mxu0
        %v571 = vadd.f32 0.0, %v570
        %v572 = vpop.f32.mrf.mxu0
        %v573 = vpop.f32.mrf.mxu0
        %v574 = vadd.f32 0.0, %v573
        %v575 = vpop.f32.mrf.mxu0
        %576 = vmatprep.mubr.bf16.mxu0 %v351
        %577 = vmatmul.mubr.bf16.gmra.mxu0 %v350
        %v578 = vpop.f32.mrf.mxu0
        %v579 = vadd.f32 0.0, %v578
        %v580 = vpop.f32.mrf.mxu0
        %v581 = vpop.f32.mrf.mxu0
        %v582 = vadd.f32 0.0, %v581
        %v583 = vpop.f32.mrf.mxu0
        %584 = vmatprep.mubr.bf16.mxu0 %v353
        %585 = vmatmul.mubr.bf16.gmra.mxu0 %v352
        %v586 = vpop.f32.mrf.mxu0
        %v587 = vadd.f32 0.0, %v586
        %v588 = vpop.f32.mrf.mxu0
        %v589 = vpop.f32.mrf.mxu0
        %v590 = vadd.f32 0.0, %v589
        %v591 = vpop.f32.mrf.mxu0
        %592 = vmatprep.mubr.bf16.mxu0 %v355
        %593 = vmatmul.mubr.bf16.gmra.mxu0 %v354
        %v594 = vpop.f32.mrf.mxu0
        %v595 = vadd.f32 0.0, %v594
        %v596 = vpop.f32.mrf.mxu0
        %v597 = vpop.f32.mrf.mxu0
        %v598 = vadd.f32 0.0, %v597
        %v599 = vpop.f32.mrf.mxu0
        %600 = vmatprep.mubr.bf16.mxu0 %v357
        %601 = vmatmul.mubr.bf16.gmra.mxu0 %v356
        %v602 = vpop.f32.mrf.mxu0
        %v603 = vadd.f32 0.0, %v602
        %v604 = vpop.f32.mrf.mxu0
        %v605 = vpop.f32.mrf.mxu0
        %v606 = vadd.f32 0.0, %v605
        %v607 = vpop.f32.mrf.mxu0
        %608 = vmatprep.mubr.bf16.mxu0 %v359
        %609 = vmatmul.mubr.bf16.gmra.mxu0 %v358
        %v610 = vpop.f32.mrf.mxu0
        %v611 = vadd.f32 0.0, %v610
        %v612 = vpop.f32.mrf.mxu0
        %v613 = vpop.f32.mrf.mxu0
        %v614 = vadd.f32 0.0, %v613
        %v615 = vpop.f32.mrf.mxu0
        %616 = vmatprep.mubr.bf16.mxu0 %v361
        %617 = vmatmul.mubr.bf16.gmra.mxu0 %v360
        %v618 = vpop.f32.mrf.mxu0
        %v619 = vadd.f32 0.0, %v618
        %v620 = vpop.f32.mrf.mxu0
        %v621 = vpop.f32.mrf.mxu0
        %v622 = vadd.f32 0.0, %v621
        %v623 = vpop.f32.mrf.mxu0
        %624 = vmatprep.mubr.bf16.mxu0 %v363
        %625 = vmatmul.mubr.bf16.gmra.mxu0 %v362
        %v626 = vpop.f32.mrf.mxu0
        %v627 = vadd.f32 0.0, %v626
        %v628 = vpop.f32.mrf.mxu0
        %v629 = vpop.f32.mrf.mxu0
        %v630 = vadd.f32 0.0, %v629
        %v631 = vpop.f32.mrf.mxu0
        %632 = vmatprep.mubr.bf16.mxu0 %v365
        %633 = vmatmul.mubr.bf16.gmra.mxu0 %v364
        %v634 = vpop.f32.mrf.mxu0
        %v635 = vadd.f32 0.0, %v634
        %v636 = vpop.f32.mrf.mxu0
        %v637 = vpop.f32.mrf.mxu0
        %v638 = vadd.f32 0.0, %v637
        %v639 = vpop.f32.mrf.mxu0
        %640 = vmatprep.mubr.bf16.mxu0 %v367
        %641 = vmatmul.mubr.bf16.gmra.mxu0 %v366
        %v642 = vpop.f32.mrf.mxu0
        %v643 = vadd.f32 0.0, %v642
        %v644 = vpop.f32.mrf.mxu0
        %v645 = vpop.f32.mrf.mxu0
        %v646 = vadd.f32 0.0, %v645
        %v647 = vpop.f32.mrf.mxu0
        %648 = vmatprep.mubr.bf16.mxu0 %v369
        %649 = vmatmul.mubr.bf16.gmra.mxu0 %v368
        %v650 = vpop.f32.mrf.mxu0
        %v651 = vadd.f32 0.0, %v650
        %v652 = vpop.f32.mrf.mxu0
        %v653 = vpop.f32.mrf.mxu0
        %v654 = vadd.f32 0.0, %v653
        %v655 = vpop.f32.mrf.mxu0
        %656 = vmatprep.mubr.bf16.mxu0 %v371
        %657 = vmatmul.mubr.bf16.gmra.mxu0 %v370
        %v658 = vpop.f32.mrf.mxu0
        %v659 = vadd.f32 0.0, %v658
        %v660 = vpop.f32.mrf.mxu0
        %v661 = vpop.f32.mrf.mxu0
        %v662 = vadd.f32 0.0, %v661
        %v663 = vpop.f32.mrf.mxu0
        %664 = vmatprep.mubr.bf16.mxu0 %v373
        %665 = vmatmul.mubr.bf16.gmra.mxu0 %v372
        %v666 = vpop.f32.mrf.mxu0
        %v667 = vadd.f32 0.0, %v666
        %v668 = vpop.f32.mrf.mxu0
        %v669 = vpop.f32.mrf.mxu0
        %v670 = vadd.f32 0.0, %v669
        %v671 = vpop.f32.mrf.mxu0
        %672 = vmatprep.mubr.bf16.mxu0 %v375
        %673 = vmatmul.mubr.bf16.gmra.mxu0 %v374
        %v674 = vpop.f32.mrf.mxu0
        %v675 = vadd.f32 0.0, %v674
        %v676 = vpop.f32.mrf.mxu0
        %v677 = vpop.f32.mrf.mxu0
        %v678 = vadd.f32 0.0, %v677
        %v679 = vpop.f32.mrf.mxu0
        %680 = vmatprep.mubr.bf16.mxu0 %v377
        %681 = vmatmul.mubr.bf16.gmra.mxu0 %v376
        %v682 = vpop.f32.mrf.mxu0
        %v683 = vadd.f32 0.0, %v682
        %v684 = vpop.f32.mrf.mxu0
        %v685 = vpop.f32.mrf.mxu0
        %v686 = vadd.f32 0.0, %v685
        %v687 = vpop.f32.mrf.mxu0
        %688 = vmatprep.mubr.bf16.mxu0 %v379
        %689 = vmatmul.mubr.bf16.gmra.mxu0 %v378
        %v690 = vpop.f32.mrf.mxu0
        %v691 = vadd.f32 0.0, %v690
        %v692 = vpop.f32.mrf.mxu0
        %v693 = vpop.f32.mrf.mxu0
        %v694 = vadd.f32 0.0, %v693
        %v695 = vpop.f32.mrf.mxu0
        %696 = vmatprep.mubr.bf16.mxu0 %v381
        %697 = vmatmul.mubr.bf16.gmra.mxu0 %v380
        %v698 = vpop.f32.mrf.mxu0
        %v699 = vadd.f32 0.0, %v698
        %v700 = vpop.f32.mrf.mxu0
        %v701 = vpop.f32.mrf.mxu0
        %v702 = vadd.f32 0.0, %v701
        %v703 = vpop.f32.mrf.mxu0
        %704 = vmatprep.mubr.bf16.mxu0 %v383
        %705 = vmatmul.mubr.bf16.gmra.mxu0 %v382
        %v706 = vpop.f32.mrf.mxu0
        %v707 = vadd.f32 0.0, %v706
        %v708 = vpop.f32.mrf.mxu0
        %v709 = vpop.f32.mrf.mxu0
        %v710 = vadd.f32 0.0, %v709
        %v711 = vpop.f32.mrf.mxu0
        %712 = vmatprep.mubr.bf16.mxu0 %v385
        %713 = vmatmul.mubr.bf16.gmra.mxu0 %v384
        %v714 = vpop.f32.mrf.mxu0
        %v715 = vadd.f32 0.0, %v714
        %v716 = vpop.f32.mrf.mxu0
        %v717 = vpop.f32.mrf.mxu0
        %v718 = vadd.f32 0.0, %v717
        %v719 = vpop.f32.mrf.mxu0
        %720 = vmatprep.mubr.bf16.mxu0 %v387
        %721 = vmatmul.mubr.bf16.gmra.mxu0 %v386
        %v722 = vpop.f32.mrf.mxu0
        %v723 = vadd.f32 0.0, %v722
        %v724 = vpop.f32.mrf.mxu0
        %v725 = vpop.f32.mrf.mxu0
        %v726 = vadd.f32 0.0, %v725
        %v727 = vpop.f32.mrf.mxu0
        %728 = vmatprep.mubr.bf16.mxu0 %v389
        %729 = vmatmul.mubr.bf16.gmra.mxu0 %v388
        %v730 = vpop.f32.mrf.mxu0
        %v731 = vadd.f32 0.0, %v730
        %v732 = vpop.f32.mrf.mxu0
        %v733 = vpop.f32.mrf.mxu0
        %v734 = vadd.f32 0.0, %v733
        %v735 = vpop.f32.mrf.mxu0
        %736 = vmatprep.mubr.bf16.mxu0 %v391
        %737 = vmatmul.mubr.bf16.gmra.mxu0 %v390
        %v738 = vpop.f32.mrf.mxu0
        %v739 = vadd.f32 0.0, %v738
        %v740 = vpop.f32.mrf.mxu0
        %v741 = vpop.f32.mrf.mxu0
        %v742 = vadd.f32 0.0, %v741
        %v743 = vpop.f32.mrf.mxu0
        %744 = vdwg.mxu0
        %745 = vst [vmem:[%s221] sm:$0xff] %v555
        %746 = vst [vmem:[%s221 + $0x8] sm:$0xff] %v558
        %747 = vst [vmem:[%s221 + $0x10] sm:$0xff] %v563
        %748 = vst [vmem:[%s221 + $0x18] sm:$0xff] %v566
        %749 = vst [vmem:[%s221 + $0x20] sm:$0xff] %v571
        %750 = vst [vmem:[%s221 + $0x28] sm:$0xff] %v574
        %751 = vst [vmem:[%s221 + $0x30] sm:$0xff] %v579
        %752 = vst [vmem:[%s221 + $0x38] sm:$0xff] %v582
        %753 = vst [vmem:[%s221 + $0x40] sm:$0xff] %v587
        %754 = vst [vmem:[%s221 + $0x48] sm:$0xff] %v590
        %755 = vst [vmem:[%s221 + $0x50] sm:$0xff] %v595
        %756 = vst [vmem:[%s221 + $0x58] sm:$0xff] %v598
        %757 = vst [vmem:[%s221 + $0x60] sm:$0xff] %v603
        %758 = vst [vmem:[%s221 + $0x68] sm:$0xff] %v606
        %759 = vst [vmem:[%s221 + $0x70] sm:$0xff] %v611
        %760 = vst [vmem:[%s221 + $0x78] sm:$0xff] %v614
        %761 = vst [vmem:[%s221 + $0x80] sm:$0xff] %v619
        %762 = vst [vmem:[%s221 + $0x88] sm:$0xff] %v622
        %763 = vst [vmem:[%s221 + $0x90] sm:$0xff] %v627
        %764 = vst [vmem:[%s221 + $0x98] sm:$0xff] %v630
        %765 = vst [vmem:[%s221 + $0xa0] sm:$0xff] %v635
        %766 = vst [vmem:[%s221 + $0xa8] sm:$0xff] %v638
        %767 = vst [vmem:[%s221 + $0xb0] sm:$0xff] %v643
        %768 = vst [vmem:[%s221 + $0xb8] sm:$0xff] %v646
        %769 = vst [vmem:[%s221 + $0xc0] sm:$0xff] %v651
        %770 = vst [vmem:[%s221 + $0xc8] sm:$0xff] %v654
        %771 = vst [vmem:[%s221 + $0xd0] sm:$0xff] %v659
        %772 = vst [vmem:[%s221 + $0xd8] sm:$0xff] %v662
        %773 = vst [vmem:[%s221 + $0xe0] sm:$0xff] %v667
        %774 = vst [vmem:[%s221 + $0xe8] sm:$0xff] %v670
        %775 = vst [vmem:[%s221 + $0xf0] sm:$0xff] %v675
        %776 = vst [vmem:[%s221 + $0xf8] sm:$0xff] %v678
        %777 = vst [vmem:[%s221 + $0x100] sm:$0xff] %v683
        %778 = vst [vmem:[%s221 + $0x108] sm:$0xff] %v686
        %779 = vst [vmem:[%s221 + $0x110] sm:$0xff] %v691
        %780 = vst [vmem:[%s221 + $0x118] sm:$0xff] %v694
        %781 = vst [vmem:[%s221 + $0x120] sm:$0xff] %v699
        %782 = vst [vmem:[%s221 + $0x128] sm:$0xff] %v702
        %783 = vst [vmem:[%s221 + $0x130] sm:$0xff] %v707
        %784 = vst [vmem:[%s221 + $0x138] sm:$0xff] %v710
        %785 = vst [vmem:[%s221 + $0x140] sm:$0xff] %v715
        %786 = vst [vmem:[%s221 + $0x148] sm:$0xff] %v718
        %787 = vst [vmem:[%s221 + $0x150] sm:$0xff] %v723
        %788 = vst [vmem:[%s221 + $0x158] sm:$0xff] %v726
        %789 = vst [vmem:[%s221 + $0x160] sm:$0xff] %v731
        %790 = vst [vmem:[%s221 + $0x168] sm:$0xff] %v734
        %791 = vst [vmem:[%s221 + $0x170] sm:$0xff] %v739
        %792 = vst [vmem:[%s221 + $0x178] sm:$0xff] %v742
        %v793 = vadd.f32 %v555, %v558
        %v794 = vadd.f32 %v793, %v563
        %v795 = vadd.f32 %v794, %v566
        %v796 = vadd.f32 %v795, %v571
        %v797 = vadd.f32 %v796, %v574
        %v798 = vadd.f32 %v797, %v579
        %v799 = vadd.f32 %v798, %v582
        %v800 = vadd.f32 %v799, %v587
        %v801 = vadd.f32 %v800, %v590
        %v802 = vadd.f32 %v801, %v595
        %v803 = vadd.f32 %v802, %v598
        %v804 = vadd.f32 %v803, %v603
        %v805 = vadd.f32 %v804, %v606
        %v806 = vadd.f32 %v805, %v611
        %v807 = vadd.f32 %v806, %v614
        %v808 = vadd.f32 %v807, %v619
        %v809 = vadd.f32 %v808, %v622
        %v810 = vadd.f32 %v809, %v627
        %v811 = vadd.f32 %v810, %v630
        %v812 = vadd.f32 %v811, %v635
        %v813 = vadd.f32 %v812, %v638
        %v814 = vadd.f32 %v813, %v643
        %v815 = vadd.f32 %v814, %v646
        %v816 = vadd.f32 %v815, %v651
        %v817 = vadd.f32 %v816, %v654
        %v818 = vadd.f32 %v817, %v659
        %v819 = vadd.f32 %v818, %v662
        %v820 = vadd.f32 %v819, %v667
        %v821 = vadd.f32 %v820, %v670
        %v822 = vadd.f32 %v821, %v675
        %v823 = vadd.f32 %v822, %v678
        %v824 = vadd.f32 %v823, %v683
        %v825 = vadd.f32 %v824, %v686
        %v826 = vadd.f32 %v825, %v691
        %v827 = vadd.f32 %v826, %v694
        %v828 = vadd.f32 %v827, %v699
        %v829 = vadd.f32 %v828, %v702
        %v830 = vadd.f32 %v829, %v707
        %v831 = vadd.f32 %v830, %v710
        %v832 = vadd.f32 %v831, %v715
        %v833 = vadd.f32 %v832, %v718
        %v834 = vadd.f32 %v833, %v723
        %v835 = vadd.f32 %v834, %v726
        %v836 = vadd.f32 %v835, %v731
        %v837 = vadd.f32 %v836, %v734
        %v838 = vadd.f32 %v837, %v739
        %v839 = vadd.f32 %v838, %v742
        %v840 = vrot.slane %v839, 4
        %v841 = vadd.f32 %v839, %v840
        %v842 = vrot.slane %v841, 2
        %v843 = vadd.f32 %v841, %v842
        %v844 = vrot.slane %v843, 1
        %v845 = vadd.f32 %v843, %v844
        %846 = vst [vmem:[%s246] sm:$0xff] %v845
        %s847 = sand.u32 %s94, 1
        %s848 = sand.u32 %s94, 1
        %s849 = smul.addr %s848, 384
        %s850 = scalar_lea.vmem [#allocation4], %s849
        %p851 = scmp.lt.s32.totalorder %s23, 0
        %s852 = scalar_select %p851, %s23, 0
        %p853 = scmp.lt.s32.totalorder %s22, 1
        %s854 = scalar_select %p853, %s22, 1
        %s855 = smul.addr %s852, 2
        %s856 = sadd.s32 %s854, %s855
        %s857 = smul.addr %s856, 8
        %s858 = scalar_lea.vmem %s3, %s857
        // Predicated region
        $region33: #{stack_gcn_encoder_forward.9} parent=27 // pred_check
          %p859 = pneg %p104
        $region34: #{stack_gcn_encoder_forward.9} parent=27 // pred_check_branch
          %861 = sbr.rel (%p859) target = $region36
        $region35: #{stack_gcn_encoder_forward.9} parent=27 // pred_region
          %s862 = smul.u32 48, %s23
          %s863 = smul.addr %s862, 2
          %s864 = sadd.s32 %s22, %s863
          %s865 = smul.addr %s864, 8
          %s866 = scalar_lea.vmem %s2, %s865
          // Predicated region
          $region37: #{stack_gcn_encoder_forward.9} parent=35 // pred_check
            _
          $region38: #{stack_gcn_encoder_forward.9} parent=35 // pred_check_branch
            %868 = sbr.rel (0) target = $region40
          $region39: #{stack_gcn_encoder_forward.9} parent=35 // pred_region
            // Predicated region
            $region41: #{stack_gcn_encoder_forward.9} parent=39 // pred_check
              _
            $region42: #{stack_gcn_encoder_forward.9} parent=39 // pred_check_branch
              %870 = sbr.rel (0) target = $region44
            $region43: #{stack_gcn_encoder_forward.9} parent=39 // pred_region
              // Predicated region
              $region56: #{stack_gcn_encoder_forward.9} parent=43 // pred_check
                _
              $region57: #{stack_gcn_encoder_forward.9} parent=43 // pred_check_branch
                %980 = sbr.rel (0) target = $region59
              $region58: #{stack_gcn_encoder_forward.9} parent=43 // pred_region
                loop: start=0, step=1, limit=1
                $region60: #{stack_gcn_encoder_forward.9} parent=58 // loop_pre_header
                  _
                $region61: #{stack_gcn_encoder_forward.9} parent=58 // loop_header
                  %s982 = sphi 0, %s986
                  %p983 = scmp.ge.s32.totalorder %s982, 1
                  %s987 = sphi %s850, %s850
                  %s988 = sphi %s866, %s866
                $region62: #{stack_gcn_encoder_forward.9} parent=58 // loop_header_branch
                  %985 = sbr.rel (%p983) target = $region66
                $region63: #{stack_gcn_encoder_forward.9} parent=58 // loop_body
                  %v989 = vld [vmem:[%s987] sm:$0xff]
                  %990 = vst [vmem:[%s988] sm:$0xff] %v989
                  %v991 = vld [vmem:[%s987 + $0x8] sm:$0xff]
                  %992 = vst [vmem:[%s988 + $0x10] sm:$0xff] %v991
                  %v993 = vld [vmem:[%s987 + $0x10] sm:$0xff]
                  %994 = vst [vmem:[%s988 + $0x20] sm:$0xff] %v993
                  %v995 = vld [vmem:[%s987 + $0x18] sm:$0xff]
                  %996 = vst [vmem:[%s988 + $0x30] sm:$0xff] %v995
                  %v997 = vld [vmem:[%s987 + $0x20] sm:$0xff]
                  %998 = vst [vmem:[%s988 + $0x40] sm:$0xff] %v997
                  %v999 = vld [vmem:[%s987 + $0x28] sm:$0xff]
                  %1000 = vst [vmem:[%s988 + $0x50] sm:$0xff] %v999
                  %v1001 = vld [vmem:[%s987 + $0x30] sm:$0xff]
                  %1002 = vst [vmem:[%s988 + $0x60] sm:$0xff] %v1001
                  %v1003 = vld [vmem:[%s987 + $0x38] sm:$0xff]
                  %1004 = vst [vmem:[%s988 + $0x70] sm:$0xff] %v1003
                  %v1005 = vld [vmem:[%s987 + $0x40] sm:$0xff]
                  %1006 = vst [vmem:[%s988 + $0x80] sm:$0xff] %v1005
                  %v1007 = vld [vmem:[%s987 + $0x48] sm:$0xff]
                  %1008 = vst [vmem:[%s988 + $0x90] sm:$0xff] %v1007
                  %v1009 = vld [vmem:[%s987 + $0x50] sm:$0xff]
                  %1010 = vst [vmem:[%s988 + $0xa0] sm:$0xff] %v1009
                  %v1011 = vld [vmem:[%s987 + $0x58] sm:$0xff]
                  %1012 = vst [vmem:[%s988 + $0xb0] sm:$0xff] %v1011
                  %v1013 = vld [vmem:[%s987 + $0x60] sm:$0xff]
                  %1014 = vst [vmem:[%s988 + $0xc0] sm:$0xff] %v1013
                  %v1015 = vld [vmem:[%s987 + $0x68] sm:$0xff]
                  %1016 = vst [vmem:[%s988 + $0xd0] sm:$0xff] %v1015
                  %v1017 = vld [vmem:[%s987 + $0x70] sm:$0xff]
                  %1018 = vst [vmem:[%s988 + $0xe0] sm:$0xff] %v1017
                  %v1019 = vld [vmem:[%s987 + $0x78] sm:$0xff]
                  %1020 = vst [vmem:[%s988 + $0xf0] sm:$0xff] %v1019
                  %v1021 = vld [vmem:[%s987 + $0x80] sm:$0xff]
                  %1022 = vst [vmem:[%s988 + $0x100] sm:$0xff] %v1021
                  %v1023 = vld [vmem:[%s987 + $0x88] sm:$0xff]
                  %1024 = vst [vmem:[%s988 + $0x110] sm:$0xff] %v1023
                  %v1025 = vld [vmem:[%s987 + $0x90] sm:$0xff]
                  %1026 = vst [vmem:[%s988 + $0x120] sm:$0xff] %v1025
                  %v1027 = vld [vmem:[%s987 + $0x98] sm:$0xff]
                  %1028 = vst [vmem:[%s988 + $0x130] sm:$0xff] %v1027
                  %v1029 = vld [vmem:[%s987 + $0xa0] sm:$0xff]
                  %1030 = vst [vmem:[%s988 + $0x140] sm:$0xff] %v1029
                  %v1031 = vld [vmem:[%s987 + $0xa8] sm:$0xff]
                  %1032 = vst [vmem:[%s988 + $0x150] sm:$0xff] %v1031
                  %v1033 = vld [vmem:[%s987 + $0xb0] sm:$0xff]
                  %1034 = vst [vmem:[%s988 + $0x160] sm:$0xff] %v1033
                  %v1035 = vld [vmem:[%s987 + $0xb8] sm:$0xff]
                  %1036 = vst [vmem:[%s988 + $0x170] sm:$0xff] %v1035
                  %v1037 = vld [vmem:[%s987 + $0xc0] sm:$0xff]
                  %1038 = vst [vmem:[%s988 + $0x180] sm:$0xff] %v1037
                  %v1039 = vld [vmem:[%s987 + $0xc8] sm:$0xff]
                  %1040 = vst [vmem:[%s988 + $0x190] sm:$0xff] %v1039
                  %v1041 = vld [vmem:[%s987 + $0xd0] sm:$0xff]
                  %1042 = vst [vmem:[%s988 + $0x1a0] sm:$0xff] %v1041
                  %v1043 = vld [vmem:[%s987 + $0xd8] sm:$0xff]
                  %1044 = vst [vmem:[%s988 + $0x1b0] sm:$0xff] %v1043
                  %v1045 = vld [vmem:[%s987 + $0xe0] sm:$0xff]
                  %1046 = vst [vmem:[%s988 + $0x1c0] sm:$0xff] %v1045
                  %v1047 = vld [vmem:[%s987 + $0xe8] sm:$0xff]
                  %1048 = vst [vmem:[%s988 + $0x1d0] sm:$0xff] %v1047
                  %v1049 = vld [vmem:[%s987 + $0xf0] sm:$0xff]
                  %1050 = vst [vmem:[%s988 + $0x1e0] sm:$0xff] %v1049
                  %v1051 = vld [vmem:[%s987 + $0xf8] sm:$0xff]
                  %1052 = vst [vmem:[%s988 + $0x1f0] sm:$0xff] %v1051
                  %v1053 = vld [vmem:[%s987 + $0x100] sm:$0xff]
                  %1054 = vst [vmem:[%s988 + $0x200] sm:$0xff] %v1053
                  %v1055 = vld [vmem:[%s987 + $0x108] sm:$0xff]
                  %1056 = vst [vmem:[%s988 + $0x210] sm:$0xff] %v1055
                  %v1057 = vld [vmem:[%s987 + $0x110] sm:$0xff]
                  %1058 = vst [vmem:[%s988 + $0x220] sm:$0xff] %v1057
                  %v1059 = vld [vmem:[%s987 + $0x118] sm:$0xff]
                  %1060 = vst [vmem:[%s988 + $0x230] sm:$0xff] %v1059
                  %v1061 = vld [vmem:[%s987 + $0x120] sm:$0xff]
                  %1062 = vst [vmem:[%s988 + $0x240] sm:$0xff] %v1061
                  %v1063 = vld [vmem:[%s987 + $0x128] sm:$0xff]
                  %1064 = vst [vmem:[%s988 + $0x250] sm:$0xff] %v1063
                  %v1065 = vld [vmem:[%s987 + $0x130] sm:$0xff]
                  %1066 = vst [vmem:[%s988 + $0x260] sm:$0xff] %v1065
                  %v1067 = vld [vmem:[%s987 + $0x138] sm:$0xff]
                  %1068 = vst [vmem:[%s988 + $0x270] sm:$0xff] %v1067
                  %v1069 = vld [vmem:[%s987 + $0x140] sm:$0xff]
                  %1070 = vst [vmem:[%s988 + $0x280] sm:$0xff] %v1069
                  %v1071 = vld [vmem:[%s987 + $0x148] sm:$0xff]
                  %1072 = vst [vmem:[%s988 + $0x290] sm:$0xff] %v1071
                  %v1073 = vld [vmem:[%s987 + $0x150] sm:$0xff]
                  %1074 = vst [vmem:[%s988 + $0x2a0] sm:$0xff] %v1073
                  %v1075 = vld [vmem:[%s987 + $0x158] sm:$0xff]
                  %1076 = vst [vmem:[%s988 + $0x2b0] sm:$0xff] %v1075
                  %v1077 = vld [vmem:[%s987 + $0x160] sm:$0xff]
                  %1078 = vst [vmem:[%s988 + $0x2c0] sm:$0xff] %v1077
                  %v1079 = vld [vmem:[%s987 + $0x168] sm:$0xff]
                  %1080 = vst [vmem:[%s988 + $0x2d0] sm:$0xff] %v1079
                  %v1081 = vld [vmem:[%s987 + $0x170] sm:$0xff]
                  %1082 = vst [vmem:[%s988 + $0x2e0] sm:$0xff] %v1081
                  %v1083 = vld [vmem:[%s987 + $0x178] sm:$0xff]
                  %1084 = vst [vmem:[%s988 + $0x2f0] sm:$0xff] %v1083
                $region64: #{stack_gcn_encoder_forward.9} parent=58 // loop_footer
                  %s986 = sadd.s32 1, %s982
                $region65: #{stack_gcn_encoder_forward.9} parent=58 // loop_footer_branch
                  %981 = sbr.rel target = $region61
                $region66: #{stack_gcn_encoder_forward.9} parent=58 // loop_exit
                  _
              $region59: #{stack_gcn_encoder_forward.9} parent=43 // pred_fallthru
                _
              // Predicated region
              $region67: #{stack_gcn_encoder_forward.9} parent=43 // pred_check
                _
              $region68: #{stack_gcn_encoder_forward.9} parent=43 // pred_check_branch
                %1086 = sbr.rel target = $region70
              $region69: #{stack_gcn_encoder_forward.9} parent=43 // pred_region
                _
              $region70: #{stack_gcn_encoder_forward.9} parent=43 // pred_fallthru
                _
            $region44: #{stack_gcn_encoder_forward.9} parent=39 // pred_fallthru
              _
            // Predicated region
            $region45: #{stack_gcn_encoder_forward.9} parent=39 // pred_check
              _
            $region46: #{stack_gcn_encoder_forward.9} parent=39 // pred_check_branch
              %872 = sbr.rel target = $region48
            $region47: #{stack_gcn_encoder_forward.9} parent=39 // pred_region
              %s874 = ssub.s32 256, 1
              loop: start=0, step=1, limit=1
              $region49: #{stack_gcn_encoder_forward.9} parent=47 // loop_pre_header
                _
              $region50: #{stack_gcn_encoder_forward.9} parent=47 // loop_header
                %s876 = sphi 0, %s880
                %p877 = scmp.ge.s32.totalorder %s876, 1
                %s881 = sphi %s850, %s850
                %s882 = sphi %s866, %s866
              $region51: #{stack_gcn_encoder_forward.9} parent=47 // loop_header_branch
                %879 = sbr.rel (%p877) target = $region55
              $region52: #{stack_gcn_encoder_forward.9} parent=47 // loop_body
                %v883 = vld [vmem:[%s881] sm:%s874]
                %884 = vst [vmem:[%s882] sm:%s874] %v883
                %v885 = vld [vmem:[%s881 + $0x8] sm:%s874]
                %886 = vst [vmem:[%s882 + $0x10] sm:%s874] %v885
                %v887 = vld [vmem:[%s881 + $0x10] sm:%s874]
                %888 = vst [vmem:[%s882 + $0x20] sm:%s874] %v887
                %v889 = vld [vmem:[%s881 + $0x18] sm:%s874]
                %890 = vst [vmem:[%s882 + $0x30] sm:%s874] %v889
                %v891 = vld [vmem:[%s881 + $0x20] sm:%s874]
                %892 = vst [vmem:[%s882 + $0x40] sm:%s874] %v891
                %v893 = vld [vmem:[%s881 + $0x28] sm:%s874]
                %894 = vst [vmem:[%s882 + $0x50] sm:%s874] %v893
                %v895 = vld [vmem:[%s881 + $0x30] sm:%s874]
                %896 = vst [vmem:[%s882 + $0x60] sm:%s874] %v895
                %v897 = vld [vmem:[%s881 + $0x38] sm:%s874]
                %898 = vst [vmem:[%s882 + $0x70] sm:%s874] %v897
                %v899 = vld [vmem:[%s881 + $0x40] sm:%s874]
                %900 = vst [vmem:[%s882 + $0x80] sm:%s874] %v899
                %v901 = vld [vmem:[%s881 + $0x48] sm:%s874]
                %902 = vst [vmem:[%s882 + $0x90] sm:%s874] %v901
                %v903 = vld [vmem:[%s881 + $0x50] sm:%s874]
                %904 = vst [vmem:[%s882 + $0xa0] sm:%s874] %v903
                %v905 = vld [vmem:[%s881 + $0x58] sm:%s874]
                %906 = vst [vmem:[%s882 + $0xb0] sm:%s874] %v905
                %v907 = vld [vmem:[%s881 + $0x60] sm:%s874]
                %908 = vst [vmem:[%s882 + $0xc0] sm:%s874] %v907
                %v909 = vld [vmem:[%s881 + $0x68] sm:%s874]
                %910 = vst [vmem:[%s882 + $0xd0] sm:%s874] %v909
                %v911 = vld [vmem:[%s881 + $0x70] sm:%s874]
                %912 = vst [vmem:[%s882 + $0xe0] sm:%s874] %v911
                %v913 = vld [vmem:[%s881 + $0x78] sm:%s874]
                %914 = vst [vmem:[%s882 + $0xf0] sm:%s874] %v913
                %v915 = vld [vmem:[%s881 + $0x80] sm:%s874]
                %916 = vst [vmem:[%s882 + $0x100] sm:%s874] %v915
                %v917 = vld [vmem:[%s881 + $0x88] sm:%s874]
                %918 = vst [vmem:[%s882 + $0x110] sm:%s874] %v917
                %v919 = vld [vmem:[%s881 + $0x90] sm:%s874]
                %920 = vst [vmem:[%s882 + $0x120] sm:%s874] %v919
                %v921 = vld [vmem:[%s881 + $0x98] sm:%s874]
                %922 = vst [vmem:[%s882 + $0x130] sm:%s874] %v921
                %v923 = vld [vmem:[%s881 + $0xa0] sm:%s874]
                %924 = vst [vmem:[%s882 + $0x140] sm:%s874] %v923
                %v925 = vld [vmem:[%s881 + $0xa8] sm:%s874]
                %926 = vst [vmem:[%s882 + $0x150] sm:%s874] %v925
                %v927 = vld [vmem:[%s881 + $0xb0] sm:%s874]
                %928 = vst [vmem:[%s882 + $0x160] sm:%s874] %v927
                %v929 = vld [vmem:[%s881 + $0xb8] sm:%s874]
                %930 = vst [vmem:[%s882 + $0x170] sm:%s874] %v929
                %v931 = vld [vmem:[%s881 + $0xc0] sm:%s874]
                %932 = vst [vmem:[%s882 + $0x180] sm:%s874] %v931
                %v933 = vld [vmem:[%s881 + $0xc8] sm:%s874]
                %934 = vst [vmem:[%s882 + $0x190] sm:%s874] %v933
                %v935 = vld [vmem:[%s881 + $0xd0] sm:%s874]
                %936 = vst [vmem:[%s882 + $0x1a0] sm:%s874] %v935
                %v937 = vld [vmem:[%s881 + $0xd8] sm:%s874]
                %938 = vst [vmem:[%s882 + $0x1b0] sm:%s874] %v937
                %v939 = vld [vmem:[%s881 + $0xe0] sm:%s874]
                %940 = vst [vmem:[%s882 + $0x1c0] sm:%s874] %v939
                %v941 = vld [vmem:[%s881 + $0xe8] sm:%s874]
                %942 = vst [vmem:[%s882 + $0x1d0] sm:%s874] %v941
                %v943 = vld [vmem:[%s881 + $0xf0] sm:%s874]
                %944 = vst [vmem:[%s882 + $0x1e0] sm:%s874] %v943
                %v945 = vld [vmem:[%s881 + $0xf8] sm:%s874]
                %946 = vst [vmem:[%s882 + $0x1f0] sm:%s874] %v945
                %v947 = vld [vmem:[%s881 + $0x100] sm:%s874]
                %948 = vst [vmem:[%s882 + $0x200] sm:%s874] %v947
                %v949 = vld [vmem:[%s881 + $0x108] sm:%s874]
                %950 = vst [vmem:[%s882 + $0x210] sm:%s874] %v949
                %v951 = vld [vmem:[%s881 + $0x110] sm:%s874]
                %952 = vst [vmem:[%s882 + $0x220] sm:%s874] %v951
                %v953 = vld [vmem:[%s881 + $0x118] sm:%s874]
                %954 = vst [vmem:[%s882 + $0x230] sm:%s874] %v953
                %v955 = vld [vmem:[%s881 + $0x120] sm:%s874]
                %956 = vst [vmem:[%s882 + $0x240] sm:%s874] %v955
                %v957 = vld [vmem:[%s881 + $0x128] sm:%s874]
                %958 = vst [vmem:[%s882 + $0x250] sm:%s874] %v957
                %v959 = vld [vmem:[%s881 + $0x130] sm:%s874]
                %960 = vst [vmem:[%s882 + $0x260] sm:%s874] %v959
                %v961 = vld [vmem:[%s881 + $0x138] sm:%s874]
                %962 = vst [vmem:[%s882 + $0x270] sm:%s874] %v961
                %v963 = vld [vmem:[%s881 + $0x140] sm:%s874]
                %964 = vst [vmem:[%s882 + $0x280] sm:%s874] %v963
                %v965 = vld [vmem:[%s881 + $0x148] sm:%s874]
                %966 = vst [vmem:[%s882 + $0x290] sm:%s874] %v965
                %v967 = vld [vmem:[%s881 + $0x150] sm:%s874]
                %968 = vst [vmem:[%s882 + $0x2a0] sm:%s874] %v967
                %v969 = vld [vmem:[%s881 + $0x158] sm:%s874]
                %970 = vst [vmem:[%s882 + $0x2b0] sm:%s874] %v969
                %v971 = vld [vmem:[%s881 + $0x160] sm:%s874]
                %972 = vst [vmem:[%s882 + $0x2c0] sm:%s874] %v971
                %v973 = vld [vmem:[%s881 + $0x168] sm:%s874]
                %974 = vst [vmem:[%s882 + $0x2d0] sm:%s874] %v973
                %v975 = vld [vmem:[%s881 + $0x170] sm:%s874]
                %976 = vst [vmem:[%s882 + $0x2e0] sm:%s874] %v975
                %v977 = vld [vmem:[%s881 + $0x178] sm:%s874]
                %978 = vst [vmem:[%s882 + $0x2f0] sm:%s874] %v977
              $region53: #{stack_gcn_encoder_forward.9} parent=47 // loop_footer
                %s880 = sadd.s32 1, %s876
              $region54: #{stack_gcn_encoder_forward.9} parent=47 // loop_footer_branch
                %875 = sbr.rel target = $region50
              $region55: #{stack_gcn_encoder_forward.9} parent=47 // loop_exit
                _
            $region48: #{stack_gcn_encoder_forward.9} parent=39 // pred_fallthru
              _
          $region40: #{stack_gcn_encoder_forward.9} parent=35 // pred_fallthru
            _
          %1087 = vnop
        $region36: #{stack_gcn_encoder_forward.9} parent=27 // pred_fallthru
          _
        // Predicated region
        $region71: #{stack_gcn_encoder_forward.9} parent=27 // pred_check
          %p1088 = pneg %p132
        $region72: #{stack_gcn_encoder_forward.9} parent=27 // pred_check_branch
          %1090 = sbr.rel (%p1088) target = $region74
        $region73: #{stack_gcn_encoder_forward.9} parent=27 // pred_region
          _
        $region74: #{stack_gcn_encoder_forward.9} parent=27 // pred_fallthru
          _
      $region28: #{stack_gcn_encoder_forward.9} parent=5 // pred_fallthru
        _
      %p1091 = scmp.le.s32.totalorder 2, %s13
      // Predicated region
      $region75: #{stack_gcn_encoder_forward.9} parent=5 // pred_check
        %p1092 = pneg %p1091
      $region76: #{stack_gcn_encoder_forward.9} parent=5 // pred_check_branch
        %1094 = sbr.rel (%p1092) target = $region78
      $region77: #{stack_gcn_encoder_forward.9} parent=5 // pred_region
        %s1095 = ssub.s32 %s13, 2
        // Predicated region
        $region79: #{stack_gcn_encoder_forward.9} parent=77 // pred_check
          %p1096 = pneg %p110
        $region80: #{stack_gcn_encoder_forward.9} parent=77 // pred_check_branch
          %1098 = sbr.rel (%p1096) target = $region82
        $region81: #{stack_gcn_encoder_forward.9} parent=77 // pred_region
          %s1099 = sand.u32 %s95, 1
          %s1100 = sand.u32 %s95, 1
          %s1101 = smul.addr %s1100, 384
          %s1102 = scalar_lea.vmem [#allocation4], %s1101
        $region82: #{stack_gcn_encoder_forward.9} parent=77 // pred_fallthru
          _
        // Predicated region
        $region83: #{stack_gcn_encoder_forward.9} parent=77 // pred_check
          %p1103 = pneg %p138
        $region84: #{stack_gcn_encoder_forward.9} parent=77 // pred_check_branch
          %1105 = sbr.rel (%p1103) target = $region86
        $region85: #{stack_gcn_encoder_forward.9} parent=77 // pred_region
          %p1106 = scmp.lt.s32.totalorder %s25, 0
          %s1107 = scalar_select %p1106, %s25, 0
          %p1108 = scmp.lt.s32.totalorder %s24, 1
          %s1109 = scalar_select %p1108, %s24, 1
          %s1110 = smul.addr %s1107, 2
          %s1111 = sadd.s32 %s1109, %s1110
          %s1112 = smul.addr %s1111, 8
          %s1113 = scalar_lea.vmem %s3, %s1112
        $region86: #{stack_gcn_encoder_forward.9} parent=77 // pred_fallthru
          _
      $region78: #{stack_gcn_encoder_forward.9} parent=5 // pred_fallthru
        _
    $region6: #{stack_gcn_encoder_forward.9} parent=1 // loop_footer
      %s17 = sadd.s32 1, %s13
    $region7: #{stack_gcn_encoder_forward.9} parent=1 // loop_footer_branch
      %12 = sbr.rel target = $region3
    $region8: #{stack_gcn_encoder_forward.9} parent=1 // loop_exit
      _
    %1114 = vsyncpa [#allocation3], 1
    %s1115 = scalar_lea.sflag [#allocation3], 1
    %1116 = vsyncpa %s1115, 1

// kernel: stack_gcn_encoder_forward.7
$region0: #{stack_gcn_encoder_forward.7}
  #allocation0 [shape = 'u32[]', space=smem, size = 0x4, offset = 0x4, fixed_abs, tag = 'smem constant byte address 0x4 - core index']
  #allocation1 [shape = 'u32[144,128]{1,0:T(1,128)}', space=vmem, size = 0x12000, scoped, tag = 'internal scratch']
  %s0 = inlined_call_operand.vmem [shape: f32[384,128], index: 0, kind: input, shape index: {}]
  %s1 = inlined_call_operand.vmem [shape: f32[2,128,128], index: 1, kind: input, shape index: {}]
  %s2 = inlined_call_operand.vmem [shape: bf16[2,384,128], index: 2, kind: output, shape index: {}]
  %s3 = sld [smem:[#allocation0]]
  $region41: #{stack_gcn_encoder_forward.7} parent=0
    _
  %s5 = ssub.s32 1, %s3
  %s6 = scalar_select 0, %s5, %s3
  loop: start=0, step=1, limit=4
  $region2: #{stack_gcn_encoder_forward.7} parent=0 // loop_pre_header
    _
  $region3: #{stack_gcn_encoder_forward.7} parent=0 // loop_header
    %s8 = sphi 0, %s12
    %p9 = scmp.ge.s32.totalorder %s8, 4
    %s15 = sphi 0, %s27
    %s16 = sphi 0, %s23
    %s17 = sphi 0, %s15
    %s18 = sphi 0, %s16
    %s19 = sphi 0, %s17
    %s20 = sphi 0, %s18
    %s30 = sphi 0, %s32
    %s33 = sphi 0, %s30
    %s34 = sphi 0, %s33
    %s50 = sphi 0, %s34
    %s56 = sphi 0, %s58
    %s59 = sphi 0, %s56
    %s60 = sphi 0, %s59
    %s76 = sphi 0, %s60
    %s84 = sphi 0, %s86
    %s87 = sphi 0, %s84
    %s88 = sphi 0, %s87
    %s104 = sphi 0, %s88
  $region4: #{stack_gcn_encoder_forward.7} parent=0 // loop_header_branch
    %11 = sbr.rel (%p9) target = $region8
  $region5: #{stack_gcn_encoder_forward.7} parent=0 // loop_body
    %s13 = ssub.s32 %s8, 1
    %s14 = ssub.s32 %s8, 2
    %s21 = sadd.s32 1, %s16
    %p22 = scmp.ge.s32.totalorder %s21, 1
    %s23 = scalar_select %p22, 0, %s21
    %s24 = sadd.s32 1, %s15
    %s25 = scalar_select %p22, %s24, %s15
    %p26 = scmp.ge.s32.totalorder %s25, 2
    %s27 = scalar_select %p26, 0, %s25
    %s28 = ssub.s32 %s16, %s23
    %p29 = scmp.eq.s32.totalorder %s28, 0
    %s31 = sadd.s32 %s30, 1
    %s32 = scalar_select %p29, %s30, %s31
    %p35 = pneg %p29
    %p36 = scmp.eq.s32.totalorder %s8, 1
    %p37 = por %p35, %p36
    %p38 = scmp.ne.s32.totalorder %s30, %s33
    %p39 = scmp.eq.s32.totalorder %s8, 0
    %p40 = por %p38, %p39
    %p41 = scmp.ne.s32.totalorder %s30, %s33
    %p42 = scmp.eq.s32.totalorder %s13, 1
    %p43 = por %p41, %p42
    %p44 = scmp.ne.s32.totalorder %s33, %s34
    %p45 = scmp.eq.s32.totalorder %s13, 0
    %p46 = por %p44, %p45
    %p47 = scmp.ne.s32.totalorder %s33, %s34
    %p48 = scmp.eq.s32.totalorder %s14, 1
    %p49 = por %p47, %p48
    %p51 = scmp.ne.s32.totalorder %s34, %s50
    %p52 = scmp.eq.s32.totalorder %s14, 0
    %p53 = por %p51, %p52
    %s54 = ssub.s32 %s15, %s27
    %p55 = scmp.eq.s32.totalorder %s54, 0
    %s57 = sadd.s32 %s56, 1
    %s58 = scalar_select %p55, %s56, %s57
    %p61 = pneg %p55
    %p62 = scmp.eq.s32.totalorder %s8, 1
    %p63 = por %p61, %p62
    %p64 = scmp.ne.s32.totalorder %s56, %s59
    %p65 = scmp.eq.s32.totalorder %s8, 0
    %p66 = por %p64, %p65
    %p67 = scmp.ne.s32.totalorder %s56, %s59
    %p68 = scmp.eq.s32.totalorder %s13, 1
    %p69 = por %p67, %p68
    %p70 = scmp.ne.s32.totalorder %s59, %s60
    %p71 = scmp.eq.s32.totalorder %s13, 0
    %p72 = por %p70, %p71
    %p73 = scmp.ne.s32.totalorder %s59, %s60
    %p74 = scmp.eq.s32.totalorder %s14, 1
    %p75 = por %p73, %p74
    %p77 = scmp.ne.s32.totalorder %s60, %s76
    %p78 = scmp.eq.s32.totalorder %s14, 0
    %p79 = por %p77, %p78
    %s80 = ssub.s32 %s15, %s27
    %s81 = ssub.s32 %s16, %s23
    %s82 = sor.u32 %s80, %s81
    %p83 = scmp.eq.s32.totalorder %s82, 0
    %s85 = sadd.s32 %s84, 1
    %s86 = scalar_select %p83, %s84, %s85
    %p89 = pneg %p83
    %p90 = scmp.eq.s32.totalorder %s8, 1
    %p91 = por %p89, %p90
    %p92 = scmp.ne.s32.totalorder %s84, %s87
    %p93 = scmp.eq.s32.totalorder %s8, 0
    %p94 = por %p92, %p93
    %p95 = scmp.ne.s32.totalorder %s84, %s87
    %p96 = scmp.eq.s32.totalorder %s13, 1
    %p97 = por %p95, %p96
    %p98 = scmp.ne.s32.totalorder %s87, %s88
    %p99 = scmp.eq.s32.totalorder %s13, 0
    %p100 = por %p98, %p99
    %p101 = scmp.ne.s32.totalorder %s87, %s88
    %p102 = scmp.eq.s32.totalorder %s14, 1
    %p103 = por %p101, %p102
    %p105 = scmp.ne.s32.totalorder %s88, %s104
    %p106 = scmp.eq.s32.totalorder %s14, 0
    %p107 = por %p105, %p106
    %p108 = scmp.le.s32.totalorder 1, %s8
    %p109 = scmp.lt.s32.totalorder %s8, 3
    %p110 = pnand %p108, %p109
    %p111 = pneg %p110
    // Predicated region
    $region9: #{stack_gcn_encoder_forward.7} parent=5 // pred_check
      _
    $region10: #{stack_gcn_encoder_forward.7} parent=5 // pred_check_branch
      %113 = sbr.rel (%p110) target = $region12
    $region11: #{stack_gcn_encoder_forward.7} parent=5 // pred_region
      %s114 = ssub.s32 %s8, 1
      // Predicated region
      $region13: #{stack_gcn_encoder_forward.7} parent=11 // pred_check
        %p115 = pneg %p46
      $region14: #{stack_gcn_encoder_forward.7} parent=11 // pred_check_branch
        %117 = sbr.rel (%p115) target = $region16
      $region15: #{stack_gcn_encoder_forward.7} parent=11 // pred_region
        %s118 = smul.u32 48, %s18
        %p119 = scmp.lt.s32.totalorder %s118, 47
        %s120 = scalar_select %p119, %s118, 47
        %s121 = smul.addr %s120, 8
        %s122 = scalar_lea.vmem %s0, %s121
        %s123 = smul.u32 48, %s18
      $region16: #{stack_gcn_encoder_forward.7} parent=11 // pred_fallthru
        _
    $region12: #{stack_gcn_encoder_forward.7} parent=5 // pred_fallthru
      _
    %p124 = scmp.lt.s32.totalorder %s8, 2
    // Predicated region
    $region17: #{stack_gcn_encoder_forward.7} parent=5 // pred_check
      %p125 = pneg %p124
    $region18: #{stack_gcn_encoder_forward.7} parent=5 // pred_check_branch
      %127 = sbr.rel (%p125) target = $region20
    $region19: #{stack_gcn_encoder_forward.7} parent=5 // pred_region
      // Predicated region
      $region21: #{stack_gcn_encoder_forward.7} parent=19 // pred_check
        %p128 = pneg %p66
      $region22: #{stack_gcn_encoder_forward.7} parent=19 // pred_check_branch
        %130 = sbr.rel (%p128) target = $region24
      $region23: #{stack_gcn_encoder_forward.7} parent=19 // pred_region
        %p131 = scmp.lt.s32.totalorder %s15, 1
        %s132 = scalar_select %p131, %s15, 1
        %s133 = smul.addr %s132, 16
        %s134 = smul.addr %s133, 8
        %s135 = scalar_lea.vmem %s1, %s134
      $region24: #{stack_gcn_encoder_forward.7} parent=19 // pred_fallthru
        _
    $region20: #{stack_gcn_encoder_forward.7} parent=5 // pred_fallthru
      _
    %p136 = scmp.le.s32.totalorder 1, %s8
    %p137 = scmp.lt.s32.totalorder %s8, 3
    %p138 = pnand %p136, %p137
    %p139 = pneg %p138
    // Predicated region
    $region25: #{stack_gcn_encoder_forward.7} parent=5 // pred_check
      _
    $region26: #{stack_gcn_encoder_forward.7} parent=5 // pred_check_branch
      %141 = sbr.rel (%p138) target = $region28
    $region27: #{stack_gcn_encoder_forward.7} parent=5 // pred_region
      %s142 = ssub.s32 %s8, 1
      %s143 = smul.u32 48, %s18
      %p144 = scmp.lt.s32.totalorder %s143, 47
      %s145 = scalar_select %p144, %s143, 47
      %s146 = smul.addr %s145, 8
      %s147 = scalar_lea.vmem %s0, %s146
      %p148 = pneg %p46
      %p149 = pneg %p43
      %p150 = scmp.lt.s32.totalorder %s17, 1
      %s151 = scalar_select %p150, %s17, 1
      %s152 = smul.addr %s151, 16
      %s153 = smul.addr %s152, 8
      %s154 = scalar_lea.vmem %s1, %s153
      %p155 = pneg %p72
      %p156 = pneg %p69
      %p157 = pneg %p100
      %p158 = pneg %p97
      %s159 = smul.u32 48, %s18
      %p160 = scmp.lt.s32.totalorder %s17, 1
      %s161 = scalar_select %p160, %s17, 1
      %p162 = scmp.lt.s32.totalorder %s159, 47
      %s163 = scalar_select %p162, %s159, 47
      %s164 = smul.addr %s161, 48
      %s165 = sadd.s32 %s163, %s164
      %s166 = smul.addr %s165, 4
      %s167 = scalar_lea.vmem %s2, %s166
      %s168 = smul.u32 48, %s18
      %p169 = scmp.lt.s32.totalorder %s168, 47
      %s170 = scalar_select %p169, %s168, 47
      %s171 = smul.addr %s170, 8
      %s172 = scalar_lea.vmem %s0, %s171
      %s173 = smul.u32 48, %s18
      %p174 = scmp.lt.s32.totalorder %s17, 1
      %s175 = scalar_select %p174, %s17, 1
      %s176 = smul.addr %s175, 16
      %s177 = smul.addr %s176, 8
      %s178 = scalar_lea.vmem %s1, %s177
      %s179 = smul.u32 48, %s18
      %p180 = scmp.lt.s32.totalorder %s17, 1
      %s181 = scalar_select %p180, %s17, 1
      %p182 = scmp.lt.s32.totalorder %s179, 47
      %s183 = scalar_select %p182, %s179, 47
      %s184 = smul.addr %s181, 48
      %s185 = sadd.s32 %s183, %s184
      %s186 = smul.addr %s185, 4
      %s187 = scalar_lea.vmem %s2, %s186
      %s188 = smul.u32 48, %s18
      %v190 = vld [vmem:[%s172] sm:$0xff]
      %v191 = vld [vmem:[%s172 + $0x8] sm:$0xff]
      %v192 = vld [vmem:[%s172 + $0x10] sm:$0xff]
      %v193 = vld [vmem:[%s172 + $0x18] sm:$0xff]
      %v194 = vld [vmem:[%s172 + $0x20] sm:$0xff]
      %v195 = vld [vmem:[%s172 + $0x28] sm:$0xff]
      %v196 = vld [vmem:[%s172 + $0x30] sm:$0xff]
      %v197 = vld [vmem:[%s172 + $0x38] sm:$0xff]
      %v198 = vld [vmem:[%s172 + $0x40] sm:$0xff]
      %v199 = vld [vmem:[%s172 + $0x48] sm:$0xff]
      %v200 = vld [vmem:[%s172 + $0x50] sm:$0xff]
      %v201 = vld [vmem:[%s172 + $0x58] sm:$0xff]
      %v202 = vld [vmem:[%s172 + $0x60] sm:$0xff]
      %v203 = vld [vmem:[%s172 + $0x68] sm:$0xff]
      %v204 = vld [vmem:[%s172 + $0x70] sm:$0xff]
      %v205 = vld [vmem:[%s172 + $0x78] sm:$0xff]
      %v206 = vld [vmem:[%s172 + $0x80] sm:$0xff]
      %v207 = vld [vmem:[%s172 + $0x88] sm:$0xff]
      %v208 = vld [vmem:[%s172 + $0x90] sm:$0xff]
      %v209 = vld [vmem:[%s172 + $0x98] sm:$0xff]
      %v210 = vld [vmem:[%s172 + $0xa0] sm:$0xff]
      %v211 = vld [vmem:[%s172 + $0xa8] sm:$0xff]
      %v212 = vld [vmem:[%s172 + $0xb0] sm:$0xff]
      %v213 = vld [vmem:[%s172 + $0xb8] sm:$0xff]
      %v214 = vld [vmem:[%s172 + $0xc0] sm:$0xff]
      %v215 = vld [vmem:[%s172 + $0xc8] sm:$0xff]
      %v216 = vld [vmem:[%s172 + $0xd0] sm:$0xff]
      %v217 = vld [vmem:[%s172 + $0xd8] sm:$0xff]
      %v218 = vld [vmem:[%s172 + $0xe0] sm:$0xff]
      %v219 = vld [vmem:[%s172 + $0xe8] sm:$0xff]
      %v220 = vld [vmem:[%s172 + $0xf0] sm:$0xff]
      %v221 = vld [vmem:[%s172 + $0xf8] sm:$0xff]
      %v222 = vld [vmem:[%s172 + $0x100] sm:$0xff]
      %v223 = vld [vmem:[%s172 + $0x108] sm:$0xff]
      %v224 = vld [vmem:[%s172 + $0x110] sm:$0xff]
      %v225 = vld [vmem:[%s172 + $0x118] sm:$0xff]
      %v226 = vld [vmem:[%s172 + $0x120] sm:$0xff]
      %v227 = vld [vmem:[%s172 + $0x128] sm:$0xff]
      %v228 = vld [vmem:[%s172 + $0x130] sm:$0xff]
      %v229 = vld [vmem:[%s172 + $0x138] sm:$0xff]
      %v230 = vld [vmem:[%s172 + $0x140] sm:$0xff]
      %v231 = vld [vmem:[%s172 + $0x148] sm:$0xff]
      %v232 = vld [vmem:[%s172 + $0x150] sm:$0xff]
      %v233 = vld [vmem:[%s172 + $0x158] sm:$0xff]
      %v234 = vld [vmem:[%s172 + $0x160] sm:$0xff]
      %v235 = vld [vmem:[%s172 + $0x168] sm:$0xff]
      %v236 = vld [vmem:[%s172 + $0x170] sm:$0xff]
      %v237 = vld [vmem:[%s172 + $0x178] sm:$0xff]
      %v238 = vpack.c.bf16 %v191, %v190
      %v239 = vpack.c.bf16 %v193, %v192
      %v240 = vpack.c.bf16 %v195, %v194
      %v241 = vpack.c.bf16 %v197, %v196
      %v242 = vpack.c.bf16 %v199, %v198
      %v243 = vpack.c.bf16 %v201, %v200
      %v244 = vpack.c.bf16 %v203, %v202
      %v245 = vpack.c.bf16 %v205, %v204
      %v246 = vpack.c.bf16 %v207, %v206
      %v247 = vpack.c.bf16 %v209, %v208
      %v248 = vpack.c.bf16 %v211, %v210
      %v249 = vpack.c.bf16 %v213, %v212
      %v250 = vpack.c.bf16 %v215, %v214
      %v251 = vpack.c.bf16 %v217, %v216
      %v252 = vpack.c.bf16 %v219, %v218
      %v253 = vpack.c.bf16 %v221, %v220
      %v254 = vpack.c.bf16 %v223, %v222
      %v255 = vpack.c.bf16 %v225, %v224
      %v256 = vpack.c.bf16 %v227, %v226
      %v257 = vpack.c.bf16 %v229, %v228
      %v258 = vpack.c.bf16 %v231, %v230
      %v259 = vpack.c.bf16 %v233, %v232
      %v260 = vpack.c.bf16 %v235, %v234
      %v261 = vpack.c.bf16 %v237, %v236
      %v262 = vld [vmem:[%s178] sm:$0xff]
      %v263 = vld [vmem:[%s178 + $0x8] sm:$0xff]
      %v264 = vld [vmem:[%s178 + $0x10] sm:$0xff]
      %v265 = vld [vmem:[%s178 + $0x18] sm:$0xff]
      %v266 = vld [vmem:[%s178 + $0x20] sm:$0xff]
      %v267 = vld [vmem:[%s178 + $0x28] sm:$0xff]
      %v268 = vld [vmem:[%s178 + $0x30] sm:$0xff]
      %v269 = vld [vmem:[%s178 + $0x38] sm:$0xff]
      %v270 = vld [vmem:[%s178 + $0x40] sm:$0xff]
      %v271 = vld [vmem:[%s178 + $0x48] sm:$0xff]
      %v272 = vld [vmem:[%s178 + $0x50] sm:$0xff]
      %v273 = vld [vmem:[%s178 + $0x58] sm:$0xff]
      %v274 = vld [vmem:[%s178 + $0x60] sm:$0xff]
      %v275 = vld [vmem:[%s178 + $0x68] sm:$0xff]
      %v276 = vld [vmem:[%s178 + $0x70] sm:$0xff]
      %v277 = vld [vmem:[%s178 + $0x78] sm:$0xff]
      %v278 = vpack.c.bf16 %v263, %v262
      %v279 = vpack.c.bf16 %v265, %v264
      %v280 = vpack.c.bf16 %v267, %v266
      %v281 = vpack.c.bf16 %v269, %v268
      %v282 = vpack.c.bf16 %v271, %v270
      %v283 = vpack.c.bf16 %v273, %v272
      %v284 = vpack.c.bf16 %v275, %v274
      %v285 = vpack.c.bf16 %v277, %v276
      %286 = vmatprep.subr.bf16.mxu0 0
      %287 = vmatpush1.bf16.msra.mxu0 %v285
      %288 = vmatprep.subr.bf16.mxu0 0
      %289 = vmatpush1.bf16.msra.mxu0 %v284
      %290 = vmatprep.subr.bf16.mxu0 0
      %291 = vmatpush1.bf16.msra.mxu0 %v283
      %292 = vmatprep.subr.bf16.mxu0 0
      %293 = vmatpush1.bf16.msra.mxu0 %v282
      %294 = vmatprep.subr.bf16.mxu0 0
      %295 = vmatpush1.bf16.msra.mxu0 %v281
      %296 = vmatprep.subr.bf16.mxu0 0
      %297 = vmatpush1.bf16.msra.mxu0 %v280
      %298 = vmatprep.subr.bf16.mxu0 0
      %299 = vmatpush1.bf16.msra.mxu0 %v279
      %300 = vmatprep.subr.bf16.mxu0 0
      %301 = vmatpush1.bf16.msra.mxu0 %v278
      %302 = vmatprep.subr.bf16.mxu0 0
      %303 = vmatpush2.bf16.msra.mxu0 0
      %304 = vmatprep.subr.bf16.mxu0 0
      %305 = vmatpush2.bf16.msra.mxu0 0
      %306 = vmatprep.subr.bf16.mxu0 0
      %307 = vmatpush2.bf16.msra.mxu0 0
      %308 = vmatprep.subr.bf16.mxu0 0
      %309 = vmatpush2.bf16.msra.mxu0 0
      %310 = vmatprep.subr.bf16.mxu0 0
      %311 = vmatpush2.bf16.msra.mxu0 0
      %312 = vmatprep.subr.bf16.mxu0 0
      %313 = vmatpush2.bf16.msra.mxu0 0
      %314 = vmatprep.subr.bf16.mxu0 0
      %315 = vmatpush2.bf16.msra.mxu0 0
      %316 = vmatprep.subr.bf16.mxu0 0
      %317 = vmatpush2.bf16.msra.mxu0 0
      %318 = vmatprep.mubr.bf16.mxu0 0
      %319 = vmatmul.mubr.bf16.gmra.mxu0 %v238
      %v320 = vpop.f32.mrf.mxu0
      %v321 = vadd.f32 0.0, %v320
      %v322 = vpop.f32.mrf.mxu0
      %v323 = vpop.f32.mrf.mxu0
      %v324 = vadd.f32 0.0, %v323
      %v325 = vpop.f32.mrf.mxu0
      %326 = vmatprep.mubr.bf16.mxu0 0
      %327 = vmatmul.mubr.bf16.gmra.mxu0 %v239
      %v328 = vpop.f32.mrf.mxu0
      %v329 = vadd.f32 0.0, %v328
      %v330 = vpop.f32.mrf.mxu0
      %v331 = vpop.f32.mrf.mxu0
      %v332 = vadd.f32 0.0, %v331
      %v333 = vpop.f32.mrf.mxu0
      %334 = vmatprep.mubr.bf16.mxu0 0
      %335 = vmatmul.mubr.bf16.gmra.mxu0 %v240
      %v336 = vpop.f32.mrf.mxu0
      %v337 = vadd.f32 0.0, %v336
      %v338 = vpop.f32.mrf.mxu0
      %v339 = vpop.f32.mrf.mxu0
      %v340 = vadd.f32 0.0, %v339
      %v341 = vpop.f32.mrf.mxu0
      %342 = vmatprep.mubr.bf16.mxu0 0
      %343 = vmatmul.mubr.bf16.gmra.mxu0 %v241
      %v344 = vpop.f32.mrf.mxu0
      %v345 = vadd.f32 0.0, %v344
      %v346 = vpop.f32.mrf.mxu0
      %v347 = vpop.f32.mrf.mxu0
      %v348 = vadd.f32 0.0, %v347
      %v349 = vpop.f32.mrf.mxu0
      %350 = vmatprep.mubr.bf16.mxu0 0
      %351 = vmatmul.mubr.bf16.gmra.mxu0 %v242
      %v352 = vpop.f32.mrf.mxu0
      %v353 = vadd.f32 0.0, %v352
      %v354 = vpop.f32.mrf.mxu0
      %v355 = vpop.f32.mrf.mxu0
      %v356 = vadd.f32 0.0, %v355
      %v357 = vpop.f32.mrf.mxu0
      %358 = vmatprep.mubr.bf16.mxu0 0
      %359 = vmatmul.mubr.bf16.gmra.mxu0 %v243
      %v360 = vpop.f32.mrf.mxu0
      %v361 = vadd.f32 0.0, %v360
      %v362 = vpop.f32.mrf.mxu0
      %v363 = vpop.f32.mrf.mxu0
      %v364 = vadd.f32 0.0, %v363
      %v365 = vpop.f32.mrf.mxu0
      %366 = vmatprep.mubr.bf16.mxu0 0
      %367 = vmatmul.mubr.bf16.gmra.mxu0 %v244
      %v368 = vpop.f32.mrf.mxu0
      %v369 = vadd.f32 0.0, %v368
      %v370 = vpop.f32.mrf.mxu0
      %v371 = vpop.f32.mrf.mxu0
      %v372 = vadd.f32 0.0, %v371
      %v373 = vpop.f32.mrf.mxu0
      %374 = vmatprep.mubr.bf16.mxu0 0
      %375 = vmatmul.mubr.bf16.gmra.mxu0 %v245
      %v376 = vpop.f32.mrf.mxu0
      %v377 = vadd.f32 0.0, %v376
      %v378 = vpop.f32.mrf.mxu0
      %v379 = vpop.f32.mrf.mxu0
      %v380 = vadd.f32 0.0, %v379
      %v381 = vpop.f32.mrf.mxu0
      %382 = vmatprep.mubr.bf16.mxu0 0
      %383 = vmatmul.mubr.bf16.gmra.mxu0 %v246
      %v384 = vpop.f32.mrf.mxu0
      %v385 = vadd.f32 0.0, %v384
      %v386 = vpop.f32.mrf.mxu0
      %v387 = vpop.f32.mrf.mxu0
      %v388 = vadd.f32 0.0, %v387
      %v389 = vpop.f32.mrf.mxu0
      %390 = vmatprep.mubr.bf16.mxu0 0
      %391 = vmatmul.mubr.bf16.gmra.mxu0 %v247
      %v392 = vpop.f32.mrf.mxu0
      %v393 = vadd.f32 0.0, %v392
      %v394 = vpop.f32.mrf.mxu0
      %v395 = vpop.f32.mrf.mxu0
      %v396 = vadd.f32 0.0, %v395
      %v397 = vpop.f32.mrf.mxu0
      %398 = vmatprep.mubr.bf16.mxu0 0
      %399 = vmatmul.mubr.bf16.gmra.mxu0 %v248
      %v400 = vpop.f32.mrf.mxu0
      %v401 = vadd.f32 0.0, %v400
      %v402 = vpop.f32.mrf.mxu0
      %v403 = vpop.f32.mrf.mxu0
      %v404 = vadd.f32 0.0, %v403
      %v405 = vpop.f32.mrf.mxu0
      %406 = vmatprep.mubr.bf16.mxu0 0
      %407 = vmatmul.mubr.bf16.gmra.mxu0 %v249
      %v408 = vpop.f32.mrf.mxu0
      %v409 = vadd.f32 0.0, %v408
      %v410 = vpop.f32.mrf.mxu0
      %v411 = vpop.f32.mrf.mxu0
      %v412 = vadd.f32 0.0, %v411
      %v413 = vpop.f32.mrf.mxu0
      %414 = vmatprep.mubr.bf16.mxu0 0
      %415 = vmatmul.mubr.bf16.gmra.mxu0 %v250
      %v416 = vpop.f32.mrf.mxu0
      %v417 = vadd.f32 0.0, %v416
      %v418 = vpop.f32.mrf.mxu0
      %v419 = vpop.f32.mrf.mxu0
      %v420 = vadd.f32 0.0, %v419
      %v421 = vpop.f32.mrf.mxu0
      %422 = vmatprep.mubr.bf16.mxu0 0
      %423 = vmatmul.mubr.bf16.gmra.mxu0 %v251
      %v424 = vpop.f32.mrf.mxu0
      %v425 = vadd.f32 0.0, %v424
      %v426 = vpop.f32.mrf.mxu0
      %v427 = vpop.f32.mrf.mxu0
      %v428 = vadd.f32 0.0, %v427
      %v429 = vpop.f32.mrf.mxu0
      %430 = vmatprep.mubr.bf16.mxu0 0
      %431 = vmatmul.mubr.bf16.gmra.mxu0 %v252
      %v432 = vpop.f32.mrf.mxu0
      %v433 = vadd.f32 0.0, %v432
      %v434 = vpop.f32.mrf.mxu0
      %v435 = vpop.f32.mrf.mxu0
      %v436 = vadd.f32 0.0, %v435
      %v437 = vpop.f32.mrf.mxu0
      %438 = vmatprep.mubr.bf16.mxu0 0
      %439 = vmatmul.mubr.bf16.gmra.mxu0 %v253
      %v440 = vpop.f32.mrf.mxu0
      %v441 = vadd.f32 0.0, %v440
      %v442 = vpop.f32.mrf.mxu0
      %v443 = vpop.f32.mrf.mxu0
      %v444 = vadd.f32 0.0, %v443
      %v445 = vpop.f32.mrf.mxu0
      %446 = vmatprep.mubr.bf16.mxu0 0
      %447 = vmatmul.mubr.bf16.gmra.mxu0 %v254
      %v448 = vpop.f32.mrf.mxu0
      %v449 = vadd.f32 0.0, %v448
      %v450 = vpop.f32.mrf.mxu0
      %v451 = vpop.f32.mrf.mxu0
      %v452 = vadd.f32 0.0, %v451
      %v453 = vpop.f32.mrf.mxu0
      %454 = vmatprep.mubr.bf16.mxu0 0
      %455 = vmatmul.mubr.bf16.gmra.mxu0 %v255
      %v456 = vpop.f32.mrf.mxu0
      %v457 = vadd.f32 0.0, %v456
      %v458 = vpop.f32.mrf.mxu0
      %v459 = vpop.f32.mrf.mxu0
      %v460 = vadd.f32 0.0, %v459
      %v461 = vpop.f32.mrf.mxu0
      %462 = vmatprep.mubr.bf16.mxu0 0
      %463 = vmatmul.mubr.bf16.gmra.mxu0 %v256
      %v464 = vpop.f32.mrf.mxu0
      %v465 = vadd.f32 0.0, %v464
      %v466 = vpop.f32.mrf.mxu0
      %v467 = vpop.f32.mrf.mxu0
      %v468 = vadd.f32 0.0, %v467
      %v469 = vpop.f32.mrf.mxu0
      %470 = vmatprep.mubr.bf16.mxu0 0
      %471 = vmatmul.mubr.bf16.gmra.mxu0 %v257
      %v472 = vpop.f32.mrf.mxu0
      %v473 = vadd.f32 0.0, %v472
      %v474 = vpop.f32.mrf.mxu0
      %v475 = vpop.f32.mrf.mxu0
      %v476 = vadd.f32 0.0, %v475
      %v477 = vpop.f32.mrf.mxu0
      %478 = vmatprep.mubr.bf16.mxu0 0
      %479 = vmatmul.mubr.bf16.gmra.mxu0 %v258
      %v480 = vpop.f32.mrf.mxu0
      %v481 = vadd.f32 0.0, %v480
      %v482 = vpop.f32.mrf.mxu0
      %v483 = vpop.f32.mrf.mxu0
      %v484 = vadd.f32 0.0, %v483
      %v485 = vpop.f32.mrf.mxu0
      %486 = vmatprep.mubr.bf16.mxu0 0
      %487 = vmatmul.mubr.bf16.gmra.mxu0 %v259
      %v488 = vpop.f32.mrf.mxu0
      %v489 = vadd.f32 0.0, %v488
      %v490 = vpop.f32.mrf.mxu0
      %v491 = vpop.f32.mrf.mxu0
      %v492 = vadd.f32 0.0, %v491
      %v493 = vpop.f32.mrf.mxu0
      %494 = vmatprep.mubr.bf16.mxu0 0
      %495 = vmatmul.mubr.bf16.gmra.mxu0 %v260
      %v496 = vpop.f32.mrf.mxu0
      %v497 = vadd.f32 0.0, %v496
      %v498 = vpop.f32.mrf.mxu0
      %v499 = vpop.f32.mrf.mxu0
      %v500 = vadd.f32 0.0, %v499
      %v501 = vpop.f32.mrf.mxu0
      %502 = vmatprep.mubr.bf16.mxu0 0
      %503 = vmatmul.mubr.bf16.gmra.mxu0 %v261
      %v504 = vpop.f32.mrf.mxu0
      %v505 = vadd.f32 0.0, %v504
      %v506 = vpop.f32.mrf.mxu0
      %v507 = vpop.f32.mrf.mxu0
      %v508 = vadd.f32 0.0, %v507
      %v509 = vpop.f32.mrf.mxu0
      %510 = vdwg.mxu0
      %v511 = vpack.c.bf16 %v324, %v321
      %v512 = vpack.c.bf16 %v332, %v329
      %v513 = vpack.c.bf16 %v340, %v337
      %v514 = vpack.c.bf16 %v348, %v345
      %v515 = vpack.c.bf16 %v356, %v353
      %v516 = vpack.c.bf16 %v364, %v361
      %v517 = vpack.c.bf16 %v372, %v369
      %v518 = vpack.c.bf16 %v380, %v377
      %v519 = vpack.c.bf16 %v388, %v385
      %v520 = vpack.c.bf16 %v396, %v393
      %v521 = vpack.c.bf16 %v404, %v401
      %v522 = vpack.c.bf16 %v412, %v409
      %v523 = vpack.c.bf16 %v420, %v417
      %v524 = vpack.c.bf16 %v428, %v425
      %v525 = vpack.c.bf16 %v436, %v433
      %v526 = vpack.c.bf16 %v444, %v441
      %v527 = vpack.c.bf16 %v452, %v449
      %v528 = vpack.c.bf16 %v460, %v457
      %v529 = vpack.c.bf16 %v468, %v465
      %v530 = vpack.c.bf16 %v476, %v473
      %v531 = vpack.c.bf16 %v484, %v481
      %v532 = vpack.c.bf16 %v492, %v489
      %v533 = vpack.c.bf16 %v500, %v497
      %v534 = vpack.c.bf16 %v508, %v505
      %v559 = vunpack.c.l.b16 %v511
      %v560 = vunpack.c.h.b16 %v511
      %v561 = vunpack.c.l.b16 %v512
      %v562 = vunpack.c.h.b16 %v512
      %v563 = vunpack.c.l.b16 %v513
      %v564 = vunpack.c.h.b16 %v513
      %v565 = vunpack.c.l.b16 %v514
      %v566 = vunpack.c.h.b16 %v514
      %v567 = vunpack.c.l.b16 %v515
      %v568 = vunpack.c.h.b16 %v515
      %v569 = vunpack.c.l.b16 %v516
      %v570 = vunpack.c.h.b16 %v516
      %v571 = vunpack.c.l.b16 %v517
      %v572 = vunpack.c.h.b16 %v517
      %v573 = vunpack.c.l.b16 %v518
      %v574 = vunpack.c.h.b16 %v518
      %v575 = vunpack.c.l.b16 %v519
      %v576 = vunpack.c.h.b16 %v519
      %v577 = vunpack.c.l.b16 %v520
      %v578 = vunpack.c.h.b16 %v520
      %v579 = vunpack.c.l.b16 %v521
      %v580 = vunpack.c.h.b16 %v521
      %v581 = vunpack.c.l.b16 %v522
      %v582 = vunpack.c.h.b16 %v522
      %v583 = vunpack.c.l.b16 %v523
      %v584 = vunpack.c.h.b16 %v523
      %v585 = vunpack.c.l.b16 %v524
      %v586 = vunpack.c.h.b16 %v524
      %v587 = vunpack.c.l.b16 %v525
      %v588 = vunpack.c.h.b16 %v525
      %v589 = vunpack.c.l.b16 %v526
      %v590 = vunpack.c.h.b16 %v526
      %v591 = vunpack.c.l.b16 %v527
      %v592 = vunpack.c.h.b16 %v527
      %v593 = vunpack.c.l.b16 %v528
      %v594 = vunpack.c.h.b16 %v528
      %v595 = vunpack.c.l.b16 %v529
      %v596 = vunpack.c.h.b16 %v529
      %v597 = vunpack.c.l.b16 %v530
      %v598 = vunpack.c.h.b16 %v530
      %v599 = vunpack.c.l.b16 %v531
      %v600 = vunpack.c.h.b16 %v531
      %v601 = vunpack.c.l.b16 %v532
      %v602 = vunpack.c.h.b16 %v532
      %v603 = vunpack.c.l.b16 %v533
      %v604 = vunpack.c.h.b16 %v533
      %v605 = vunpack.c.l.b16 %v534
      %v606 = vunpack.c.h.b16 %v534
      %v607 = vpack.c.b16 %v559, %v559
      %v608 = vpack.c.b16 %v560, %v560
      %v609 = vpack.c.b16 %v561, %v561
      %v610 = vpack.c.b16 %v562, %v562
      %v611 = vpack.c.b16 %v563, %v563
      %v612 = vpack.c.b16 %v564, %v564
      %v613 = vpack.c.b16 %v565, %v565
      %v614 = vpack.c.b16 %v566, %v566
      %v615 = vpack.c.b16 %v567, %v567
      %v616 = vpack.c.b16 %v568, %v568
      %v617 = vpack.c.b16 %v569, %v569
      %v618 = vpack.c.b16 %v570, %v570
      %v619 = vpack.c.b16 %v571, %v571
      %v620 = vpack.c.b16 %v572, %v572
      %v621 = vpack.c.b16 %v573, %v573
      %v622 = vpack.c.b16 %v574, %v574
      %v623 = vpack.c.b16 %v575, %v575
      %v624 = vpack.c.b16 %v576, %v576
      %v625 = vpack.c.b16 %v577, %v577
      %v626 = vpack.c.b16 %v578, %v578
      %v627 = vpack.c.b16 %v579, %v579
      %v628 = vpack.c.b16 %v580, %v580
      %v629 = vpack.c.b16 %v581, %v581
      %v630 = vpack.c.b16 %v582, %v582
      %v631 = vpack.c.b16 %v583, %v583
      %v632 = vpack.c.b16 %v584, %v584
      %v633 = vpack.c.b16 %v585, %v585
      %v634 = vpack.c.b16 %v586, %v586
      %v635 = vpack.c.b16 %v587, %v587
      %v636 = vpack.c.b16 %v588, %v588
      %v637 = vpack.c.b16 %v589, %v589
      %v638 = vpack.c.b16 %v590, %v590
      %v639 = vpack.c.b16 %v591, %v591
      %v640 = vpack.c.b16 %v592, %v592
      %v641 = vpack.c.b16 %v593, %v593
      %v642 = vpack.c.b16 %v594, %v594
      %v643 = vpack.c.b16 %v595, %v595
      %v644 = vpack.c.b16 %v596, %v596
      %v645 = vpack.c.b16 %v597, %v597
      %v646 = vpack.c.b16 %v598, %v598
      %v647 = vpack.c.b16 %v599, %v599
      %v648 = vpack.c.b16 %v600, %v600
      %v649 = vpack.c.b16 %v601, %v601
      %v650 = vpack.c.b16 %v602, %v602
      %v651 = vpack.c.b16 %v603, %v603
      %v652 = vpack.c.b16 %v604, %v604
      %v653 = vpack.c.b16 %v605, %v605
      %v654 = vpack.c.b16 %v606, %v606
      %703 = vst [vmem:[%s187] sm:$0xf] %v607
      %704 = vst [vmem:[%s187 + $0x4] sm:$0xf] %v608
      %705 = vst [vmem:[%s187 + $0x8] sm:$0xf] %v609
      %706 = vst [vmem:[%s187 + $0xc] sm:$0xf] %v610
      %707 = vst [vmem:[%s187 + $0x10] sm:$0xf] %v611
      %708 = vst [vmem:[%s187 + $0x14] sm:$0xf] %v612
      %709 = vst [vmem:[%s187 + $0x18] sm:$0xf] %v613
      %710 = vst [vmem:[%s187 + $0x1c] sm:$0xf] %v614
      %711 = vst [vmem:[%s187 + $0x20] sm:$0xf] %v615
      %712 = vst [vmem:[%s187 + $0x24] sm:$0xf] %v616
      %713 = vst [vmem:[%s187 + $0x28] sm:$0xf] %v617
      %714 = vst [vmem:[%s187 + $0x2c] sm:$0xf] %v618
      %715 = vst [vmem:[%s187 + $0x30] sm:$0xf] %v619
      %716 = vst [vmem:[%s187 + $0x34] sm:$0xf] %v620
      %717 = vst [vmem:[%s187 + $0x38] sm:$0xf] %v621
      %718 = vst [vmem:[%s187 + $0x3c] sm:$0xf] %v622
      %719 = vst [vmem:[%s187 + $0x40] sm:$0xf] %v623
      %720 = vst [vmem:[%s187 + $0x44] sm:$0xf] %v624
      %721 = vst [vmem:[%s187 + $0x48] sm:$0xf] %v625
      %722 = vst [vmem:[%s187 + $0x4c] sm:$0xf] %v626
      %723 = vst [vmem:[%s187 + $0x50] sm:$0xf] %v627
      %724 = vst [vmem:[%s187 + $0x54] sm:$0xf] %v628
      %725 = vst [vmem:[%s187 + $0x58] sm:$0xf] %v629
      %726 = vst [vmem:[%s187 + $0x5c] sm:$0xf] %v630
      %727 = vst [vmem:[%s187 + $0x60] sm:$0xf] %v631
      %728 = vst [vmem:[%s187 + $0x64] sm:$0xf] %v632
      %729 = vst [vmem:[%s187 + $0x68] sm:$0xf] %v633
      %730 = vst [vmem:[%s187 + $0x6c] sm:$0xf] %v634
      %731 = vst [vmem:[%s187 + $0x70] sm:$0xf] %v635
      %732 = vst [vmem:[%s187 + $0x74] sm:$0xf] %v636
      %733 = vst [vmem:[%s187 + $0x78] sm:$0xf] %v637
      %734 = vst [vmem:[%s187 + $0x7c] sm:$0xf] %v638
      %735 = vst [vmem:[%s187 + $0x80] sm:$0xf] %v639
      %736 = vst [vmem:[%s187 + $0x84] sm:$0xf] %v640
      %737 = vst [vmem:[%s187 + $0x88] sm:$0xf] %v641
      %738 = vst [vmem:[%s187 + $0x8c] sm:$0xf] %v642
      %739 = vst [vmem:[%s187 + $0x90] sm:$0xf] %v643
      %740 = vst [vmem:[%s187 + $0x94] sm:$0xf] %v644
      %741 = vst [vmem:[%s187 + $0x98] sm:$0xf] %v645
      %742 = vst [vmem:[%s187 + $0x9c] sm:$0xf] %v646
      %743 = vst [vmem:[%s187 + $0xa0] sm:$0xf] %v647
      %744 = vst [vmem:[%s187 + $0xa4] sm:$0xf] %v648
      %745 = vst [vmem:[%s187 + $0xa8] sm:$0xf] %v649
      %746 = vst [vmem:[%s187 + $0xac] sm:$0xf] %v650
      %747 = vst [vmem:[%s187 + $0xb0] sm:$0xf] %v651
      %748 = vst [vmem:[%s187 + $0xb4] sm:$0xf] %v652
      %749 = vst [vmem:[%s187 + $0xb8] sm:$0xf] %v653
      %750 = vst [vmem:[%s187 + $0xbc] sm:$0xf] %v654
      %s751 = smul.u32 48, %s18
      %p752 = scmp.lt.s32.totalorder %s17, 1
      %s753 = scalar_select %p752, %s17, 1
      %p754 = scmp.lt.s32.totalorder %s751, 47
      %s755 = scalar_select %p754, %s751, 47
      %s756 = smul.addr %s753, 48
      %s757 = sadd.s32 %s755, %s756
      %s758 = smul.addr %s757, 4
      %s759 = scalar_lea.vmem %s2, %s758
      // Predicated region
      $region29: #{stack_gcn_encoder_forward.7} parent=27 // pred_check
        %p760 = pneg %p97
      $region30: #{stack_gcn_encoder_forward.7} parent=27 // pred_check_branch
        %762 = sbr.rel (%p760) target = $region32
      $region31: #{stack_gcn_encoder_forward.7} parent=27 // pred_region
        %s763 = smul.u32 48, %s18
      $region32: #{stack_gcn_encoder_forward.7} parent=27 // pred_fallthru
        _
    $region28: #{stack_gcn_encoder_forward.7} parent=5 // pred_fallthru
      _
    %p764 = scmp.le.s32.totalorder 2, %s8
    // Predicated region
    $region33: #{stack_gcn_encoder_forward.7} parent=5 // pred_check
      %p765 = pneg %p764
    $region34: #{stack_gcn_encoder_forward.7} parent=5 // pred_check_branch
      %767 = sbr.rel (%p765) target = $region36
    $region35: #{stack_gcn_encoder_forward.7} parent=5 // pred_region
      %s768 = ssub.s32 %s8, 2
      // Predicated region
      $region37: #{stack_gcn_encoder_forward.7} parent=35 // pred_check
        %p769 = pneg %p103
      $region38: #{stack_gcn_encoder_forward.7} parent=35 // pred_check_branch
        %771 = sbr.rel (%p769) target = $region40
      $region39: #{stack_gcn_encoder_forward.7} parent=35 // pred_region
        %s772 = smul.u32 48, %s20
        %p773 = scmp.lt.s32.totalorder %s19, 1
        %s774 = scalar_select %p773, %s19, 1
        %p775 = scmp.lt.s32.totalorder %s772, 47
        %s776 = scalar_select %p775, %s772, 47
        %s777 = smul.addr %s774, 48
        %s778 = sadd.s32 %s776, %s777
        %s779 = smul.addr %s778, 4
        %s780 = scalar_lea.vmem %s2, %s779
      $region40: #{stack_gcn_encoder_forward.7} parent=35 // pred_fallthru
        _
    $region36: #{stack_gcn_encoder_forward.7} parent=5 // pred_fallthru
      _
  $region6: #{stack_gcn_encoder_forward.7} parent=0 // loop_footer
    %s12 = sadd.s32 1, %s8
  $region7: #{stack_gcn_encoder_forward.7} parent=0 // loop_footer_branch
    %7 = sbr.rel target = $region3
  $region8: #{stack_gcn_encoder_forward.7} parent=0 // loop_exit
    _

// kernel: stack_gcn_encoder_forward.10
$region0: #{stack_gcn_encoder_forward.10}
  #allocation0 [shape = 'u32[]', space=smem, size = 0x4, offset = 0x4, fixed_abs, tag = 'smem constant byte address 0x4 - core index']
  #allocation1 [shape = 'u32[144,128]{1,0:T(1,128)}', space=vmem, size = 0x12000, scoped, tag = 'internal scratch']
  %s0 = inlined_call_operand.vmem [shape: f32[256,256], index: 0, kind: input, shape index: {}]
  %s1 = inlined_call_operand.vmem [shape: f32[1,256], index: 1, kind: input, shape index: {}]
  %s2 = inlined_call_operand.hbm [shape: f32[256,256], index: 2, kind: output, shape index: {}]
  %s3 = sld [smem:[#allocation0]]
  $region18: #{stack_gcn_encoder_forward.10} parent=0
    _
  %s5 = ssub.s32 1, %s3
  %s6 = scalar_select 0, %s5, %s3
  $region1: #{stack_gcn_encoder_forward.10} parent=0
    #allocation2 [shape = 'u8[262144]{0}', space=vmem, size = 0x40000, scoped, tag = 'output window, operand 0, single buffered']
    #allocation3 [shape = 's32[1]{0}', space=sflag, size = 0x4, scoped, tag = 'scoped memory for stack_gcn_encoder_forward.10']
    %7 = vsyncpa [#allocation3], 0
    // Predicated region
    $region2: #{stack_gcn_encoder_forward.10} parent=1 // pred_check
      _
    $region3: #{stack_gcn_encoder_forward.10} parent=1 // pred_check_branch
      %9 = sbr.rel (0) target = $region5
    $region4: #{stack_gcn_encoder_forward.10} parent=1 // pred_region
      _
    $region5: #{stack_gcn_encoder_forward.10} parent=1 // pred_fallthru
      _
    // Predicated region
    $region6: #{stack_gcn_encoder_forward.10} parent=1 // pred_check
      _
    $region7: #{stack_gcn_encoder_forward.10} parent=1 // pred_check_branch
      %11 = sbr.rel (0) target = $region9
    $region8: #{stack_gcn_encoder_forward.10} parent=1 // pred_region
      _
    $region9: #{stack_gcn_encoder_forward.10} parent=1 // pred_fallthru
      _
    %v12 = vld [vmem:[%s1] sm:$0x3]
    %v13 = vld [vmem:[%s0] sm:$0xff]
    %v14 = vld [vmem:[%s0 + $0x8] sm:$0xff]
    %v15 = vld [vmem:[%s0 + $0x10] sm:$0xff]
    %v16 = vld [vmem:[%s0 + $0x18] sm:$0xff]
    %v17 = vld [vmem:[%s0 + $0x20] sm:$0xff]
    %v18 = vld [vmem:[%s0 + $0x28] sm:$0xff]
    %v19 = vld [vmem:[%s0 + $0x30] sm:$0xff]
    %v20 = vld [vmem:[%s0 + $0x38] sm:$0xff]
    %v21 = vld [vmem:[%s0 + $0x40] sm:$0xff]
    %v22 = vld [vmem:[%s0 + $0x48] sm:$0xff]
    %v23 = vld [vmem:[%s0 + $0x50] sm:$0xff]
    %v24 = vld [vmem:[%s0 + $0x58] sm:$0xff]
    %v25 = vld [vmem:[%s0 + $0x60] sm:$0xff]
    %v26 = vld [vmem:[%s0 + $0x68] sm:$0xff]
    %v27 = vld [vmem:[%s0 + $0x70] sm:$0xff]
    %v28 = vld [vmem:[%s0 + $0x78] sm:$0xff]
    %v29 = vld [vmem:[%s0 + $0x80] sm:$0xff]
    %v30 = vld [vmem:[%s0 + $0x88] sm:$0xff]
    %v31 = vld [vmem:[%s0 + $0x90] sm:$0xff]
    %v32 = vld [vmem:[%s0 + $0x98] sm:$0xff]
    %v33 = vld [vmem:[%s0 + $0xa0] sm:$0xff]
    %v34 = vld [vmem:[%s0 + $0xa8] sm:$0xff]
    %v35 = vld [vmem:[%s0 + $0xb0] sm:$0xff]
    %v36 = vld [vmem:[%s0 + $0xb8] sm:$0xff]
    %v37 = vld [vmem:[%s0 + $0xc0] sm:$0xff]
    %v38 = vld [vmem:[%s0 + $0xc8] sm:$0xff]
    %v39 = vld [vmem:[%s0 + $0xd0] sm:$0xff]
    %v40 = vld [vmem:[%s0 + $0xd8] sm:$0xff]
    %v41 = vld [vmem:[%s0 + $0xe0] sm:$0xff]
    %v42 = vld [vmem:[%s0 + $0xe8] sm:$0xff]
    %v43 = vld [vmem:[%s0 + $0xf0] sm:$0xff]
    %v44 = vld [vmem:[%s0 + $0xf8] sm:$0xff]
    %v45 = vld [vmem:[%s0 + $0x100] sm:$0xff]
    %v46 = vld [vmem:[%s0 + $0x108] sm:$0xff]
    %v47 = vld [vmem:[%s0 + $0x110] sm:$0xff]
    %v48 = vld [vmem:[%s0 + $0x118] sm:$0xff]
    %v49 = vld [vmem:[%s0 + $0x120] sm:$0xff]
    %v50 = vld [vmem:[%s0 + $0x128] sm:$0xff]
    %v51 = vld [vmem:[%s0 + $0x130] sm:$0xff]
    %v52 = vld [vmem:[%s0 + $0x138] sm:$0xff]
    %v53 = vld [vmem:[%s0 + $0x140] sm:$0xff]
    %v54 = vld [vmem:[%s0 + $0x148] sm:$0xff]
    %v55 = vld [vmem:[%s0 + $0x150] sm:$0xff]
    %v56 = vld [vmem:[%s0 + $0x158] sm:$0xff]
    %v57 = vld [vmem:[%s0 + $0x160] sm:$0xff]
    %v58 = vld [vmem:[%s0 + $0x168] sm:$0xff]
    %v59 = vld [vmem:[%s0 + $0x170] sm:$0xff]
    %v60 = vld [vmem:[%s0 + $0x178] sm:$0xff]
    %v61 = vld [vmem:[%s0 + $0x180] sm:$0xff]
    %v62 = vld [vmem:[%s0 + $0x188] sm:$0xff]
    %v63 = vld [vmem:[%s0 + $0x190] sm:$0xff]
    %v64 = vld [vmem:[%s0 + $0x198] sm:$0xff]
    %v65 = vld [vmem:[%s0 + $0x1a0] sm:$0xff]
    %v66 = vld [vmem:[%s0 + $0x1a8] sm:$0xff]
    %v67 = vld [vmem:[%s0 + $0x1b0] sm:$0xff]
    %v68 = vld [vmem:[%s0 + $0x1b8] sm:$0xff]
    %v69 = vld [vmem:[%s0 + $0x1c0] sm:$0xff]
    %v70 = vld [vmem:[%s0 + $0x1c8] sm:$0xff]
    %v71 = vld [vmem:[%s0 + $0x1d0] sm:$0xff]
    %v72 = vld [vmem:[%s0 + $0x1d8] sm:$0xff]
    %v73 = vld [vmem:[%s0 + $0x1e0] sm:$0xff]
    %v74 = vld [vmem:[%s0 + $0x1e8] sm:$0xff]
    %v75 = vld [vmem:[%s0 + $0x1f0] sm:$0xff]
    %v76 = vld [vmem:[%s0 + $0x1f8] sm:$0xff]
    %v77 = vmul.f32 %v13, 50.0
    %v78 = vmul.f32 %v14, 50.0
    %v79 = vmul.f32 %v15, 50.0
    %v80 = vmul.f32 %v16, 50.0
    %v81 = vmul.f32 %v17, 50.0
    %v82 = vmul.f32 %v18, 50.0
    %v83 = vmul.f32 %v19, 50.0
    %v84 = vmul.f32 %v20, 50.0
    %v85 = vmul.f32 %v21, 50.0
    %v86 = vmul.f32 %v22, 50.0
    %v87 = vmul.f32 %v23, 50.0
    %v88 = vmul.f32 %v24, 50.0
    %v89 = vmul.f32 %v25, 50.0
    %v90 = vmul.f32 %v26, 50.0
    %v91 = vmul.f32 %v27, 50.0
    %v92 = vmul.f32 %v28, 50.0
    %v93 = vmul.f32 %v29, 50.0
    %v94 = vmul.f32 %v30, 50.0
    %v95 = vmul.f32 %v31, 50.0
    %v96 = vmul.f32 %v32, 50.0
    %v97 = vmul.f32 %v33, 50.0
    %v98 = vmul.f32 %v34, 50.0
    %v99 = vmul.f32 %v35, 50.0
    %v100 = vmul.f32 %v36, 50.0
    %v101 = vmul.f32 %v37, 50.0
    %v102 = vmul.f32 %v38, 50.0
    %v103 = vmul.f32 %v39, 50.0
    %v104 = vmul.f32 %v40, 50.0
    %v105 = vmul.f32 %v41, 50.0
    %v106 = vmul.f32 %v42, 50.0
    %v107 = vmul.f32 %v43, 50.0
    %v108 = vmul.f32 %v44, 50.0
    %v109 = vmul.f32 %v45, 50.0
    %v110 = vmul.f32 %v46, 50.0
    %v111 = vmul.f32 %v47, 50.0
    %v112 = vmul.f32 %v48, 50.0
    %v113 = vmul.f32 %v49, 50.0
    %v114 = vmul.f32 %v50, 50.0
    %v115 = vmul.f32 %v51, 50.0
    %v116 = vmul.f32 %v52, 50.0
    %v117 = vmul.f32 %v53, 50.0
    %v118 = vmul.f32 %v54, 50.0
    %v119 = vmul.f32 %v55, 50.0
    %v120 = vmul.f32 %v56, 50.0
    %v121 = vmul.f32 %v57, 50.0
    %v122 = vmul.f32 %v58, 50.0
    %v123 = vmul.f32 %v59, 50.0
    %v124 = vmul.f32 %v60, 50.0
    %v125 = vmul.f32 %v61, 50.0
    %v126 = vmul.f32 %v62, 50.0
    %v127 = vmul.f32 %v63, 50.0
    %v128 = vmul.f32 %v64, 50.0
    %v129 = vmul.f32 %v65, 50.0
    %v130 = vmul.f32 %v66, 50.0
    %v131 = vmul.f32 %v67, 50.0
    %v132 = vmul.f32 %v68, 50.0
    %v133 = vmul.f32 %v69, 50.0
    %v134 = vmul.f32 %v70, 50.0
    %v135 = vmul.f32 %v71, 50.0
    %v136 = vmul.f32 %v72, 50.0
    %v137 = vmul.f32 %v73, 50.0
    %v138 = vmul.f32 %v74, 50.0
    %v139 = vmul.f32 %v75, 50.0
    %v140 = vmul.f32 %v76, 50.0
    %v142 = vlaneseq
    %v143 = vshrl.u32 %v142, 7
    %v144 = vsub.s32 0, %v143
    %v145 = vrot.slane %v12, %v144
    %v146 = vlaneseq
    %v147 = vshrl.u32 %v146, 7
    %v148 = vsub.s32 1, %v147
    %v149 = vrot.slane %v12, %v148
    %v152 = vadd.f32 %v145, %v77
    %v153 = vadd.f32 %v149, %v78
    %v154 = vadd.f32 %v145, %v79
    %v155 = vadd.f32 %v149, %v80
    %v156 = vadd.f32 %v145, %v81
    %v157 = vadd.f32 %v149, %v82
    %v158 = vadd.f32 %v145, %v83
    %v159 = vadd.f32 %v149, %v84
    %v160 = vadd.f32 %v145, %v85
    %v161 = vadd.f32 %v149, %v86
    %v162 = vadd.f32 %v145, %v87
    %v163 = vadd.f32 %v149, %v88
    %v164 = vadd.f32 %v145, %v89
    %v165 = vadd.f32 %v149, %v90
    %v166 = vadd.f32 %v145, %v91
    %v167 = vadd.f32 %v149, %v92
    %v168 = vadd.f32 %v145, %v93
    %v169 = vadd.f32 %v149, %v94
    %v170 = vadd.f32 %v145, %v95
    %v171 = vadd.f32 %v149, %v96
    %v172 = vadd.f32 %v145, %v97
    %v173 = vadd.f32 %v149, %v98
    %v174 = vadd.f32 %v145, %v99
    %v175 = vadd.f32 %v149, %v100
    %v176 = vadd.f32 %v145, %v101
    %v177 = vadd.f32 %v149, %v102
    %v178 = vadd.f32 %v145, %v103
    %v179 = vadd.f32 %v149, %v104
    %v180 = vadd.f32 %v145, %v105
    %v181 = vadd.f32 %v149, %v106
    %v182 = vadd.f32 %v145, %v107
    %v183 = vadd.f32 %v149, %v108
    %v184 = vadd.f32 %v145, %v109
    %v185 = vadd.f32 %v149, %v110
    %v186 = vadd.f32 %v145, %v111
    %v187 = vadd.f32 %v149, %v112
    %v188 = vadd.f32 %v145, %v113
    %v189 = vadd.f32 %v149, %v114
    %v190 = vadd.f32 %v145, %v115
    %v191 = vadd.f32 %v149, %v116
    %v192 = vadd.f32 %v145, %v117
    %v193 = vadd.f32 %v149, %v118
    %v194 = vadd.f32 %v145, %v119
    %v195 = vadd.f32 %v149, %v120
    %v196 = vadd.f32 %v145, %v121
    %v197 = vadd.f32 %v149, %v122
    %v198 = vadd.f32 %v145, %v123
    %v199 = vadd.f32 %v149, %v124
    %v200 = vadd.f32 %v145, %v125
    %v201 = vadd.f32 %v149, %v126
    %v202 = vadd.f32 %v145, %v127
    %v203 = vadd.f32 %v149, %v128
    %v204 = vadd.f32 %v145, %v129
    %v205 = vadd.f32 %v149, %v130
    %v206 = vadd.f32 %v145, %v131
    %v207 = vadd.f32 %v149, %v132
    %v208 = vadd.f32 %v145, %v133
    %v209 = vadd.f32 %v149, %v134
    %v210 = vadd.f32 %v145, %v135
    %v211 = vadd.f32 %v149, %v136
    %v212 = vadd.f32 %v145, %v137
    %v213 = vadd.f32 %v149, %v138
    %v214 = vadd.f32 %v145, %v139
    %v215 = vadd.f32 %v149, %v140
    %v216 = vmul.f32 %v152, 0.003267974
    %v217 = vmul.f32 %v153, 0.003267974
    %v218 = vmul.f32 %v154, 0.003267974
    %v219 = vmul.f32 %v155, 0.003267974
    %v220 = vmul.f32 %v156, 0.003267974
    %v221 = vmul.f32 %v157, 0.003267974
    %v222 = vmul.f32 %v158, 0.003267974
    %v223 = vmul.f32 %v159, 0.003267974
    %v224 = vmul.f32 %v160, 0.003267974
    %v225 = vmul.f32 %v161, 0.003267974
    %v226 = vmul.f32 %v162, 0.003267974
    %v227 = vmul.f32 %v163, 0.003267974
    %v228 = vmul.f32 %v164, 0.003267974
    %v229 = vmul.f32 %v165, 0.003267974
    %v230 = vmul.f32 %v166, 0.003267974
    %v231 = vmul.f32 %v167, 0.003267974
    %v232 = vmul.f32 %v168, 0.003267974
    %v233 = vmul.f32 %v169, 0.003267974
    %v234 = vmul.f32 %v170, 0.003267974
    %v235 = vmul.f32 %v171, 0.003267974
    %v236 = vmul.f32 %v172, 0.003267974
    %v237 = vmul.f32 %v173, 0.003267974
    %v238 = vmul.f32 %v174, 0.003267974
    %v239 = vmul.f32 %v175, 0.003267974
    %v240 = vmul.f32 %v176, 0.003267974
    %v241 = vmul.f32 %v177, 0.003267974
    %v242 = vmul.f32 %v178, 0.003267974
    %v243 = vmul.f32 %v179, 0.003267974
    %v244 = vmul.f32 %v180, 0.003267974
    %v245 = vmul.f32 %v181, 0.003267974
    %v246 = vmul.f32 %v182, 0.003267974
    %v247 = vmul.f32 %v183, 0.003267974
    %v248 = vmul.f32 %v184, 0.003267974
    %v249 = vmul.f32 %v185, 0.003267974
    %v250 = vmul.f32 %v186, 0.003267974
    %v251 = vmul.f32 %v187, 0.003267974
    %v252 = vmul.f32 %v188, 0.003267974
    %v253 = vmul.f32 %v189, 0.003267974
    %v254 = vmul.f32 %v190, 0.003267974
    %v255 = vmul.f32 %v191, 0.003267974
    %v256 = vmul.f32 %v192, 0.003267974
    %v257 = vmul.f32 %v193, 0.003267974
    %v258 = vmul.f32 %v194, 0.003267974
    %v259 = vmul.f32 %v195, 0.003267974
    %v260 = vmul.f32 %v196, 0.003267974
    %v261 = vmul.f32 %v197, 0.003267974
    %v262 = vmul.f32 %v198, 0.003267974
    %v263 = vmul.f32 %v199, 0.003267974
    %v264 = vmul.f32 %v200, 0.003267974
    %v265 = vmul.f32 %v201, 0.003267974
    %v266 = vmul.f32 %v202, 0.003267974
    %v267 = vmul.f32 %v203, 0.003267974
    %v268 = vmul.f32 %v204, 0.003267974
    %v269 = vmul.f32 %v205, 0.003267974
    %v270 = vmul.f32 %v206, 0.003267974
    %v271 = vmul.f32 %v207, 0.003267974
    %v272 = vmul.f32 %v208, 0.003267974
    %v273 = vmul.f32 %v209, 0.003267974
    %v274 = vmul.f32 %v210, 0.003267974
    %v275 = vmul.f32 %v211, 0.003267974
    %v276 = vmul.f32 %v212, 0.003267974
    %v277 = vmul.f32 %v213, 0.003267974
    %v278 = vmul.f32 %v214, 0.003267974
    %v279 = vmul.f32 %v215, 0.003267974
    %v280 = vmax.f32 %v216, 0.0
    %v281 = vmax.f32 %v217, 0.0
    %v282 = vmax.f32 %v218, 0.0
    %v283 = vmax.f32 %v219, 0.0
    %v284 = vmax.f32 %v220, 0.0
    %v285 = vmax.f32 %v221, 0.0
    %v286 = vmax.f32 %v222, 0.0
    %v287 = vmax.f32 %v223, 0.0
    %v288 = vmax.f32 %v224, 0.0
    %v289 = vmax.f32 %v225, 0.0
    %v290 = vmax.f32 %v226, 0.0
    %v291 = vmax.f32 %v227, 0.0
    %v292 = vmax.f32 %v228, 0.0
    %v293 = vmax.f32 %v229, 0.0
    %v294 = vmax.f32 %v230, 0.0
    %v295 = vmax.f32 %v231, 0.0
    %v296 = vmax.f32 %v232, 0.0
    %v297 = vmax.f32 %v233, 0.0
    %v298 = vmax.f32 %v234, 0.0
    %v299 = vmax.f32 %v235, 0.0
    %v300 = vmax.f32 %v236, 0.0
    %v301 = vmax.f32 %v237, 0.0
    %v302 = vmax.f32 %v238, 0.0
    %v303 = vmax.f32 %v239, 0.0
    %v304 = vmax.f32 %v240, 0.0
    %v305 = vmax.f32 %v241, 0.0
    %v306 = vmax.f32 %v242, 0.0
    %v307 = vmax.f32 %v243, 0.0
    %v308 = vmax.f32 %v244, 0.0
    %v309 = vmax.f32 %v245, 0.0
    %v310 = vmax.f32 %v246, 0.0
    %v311 = vmax.f32 %v247, 0.0
    %v312 = vmax.f32 %v248, 0.0
    %v313 = vmax.f32 %v249, 0.0
    %v314 = vmax.f32 %v250, 0.0
    %v315 = vmax.f32 %v251, 0.0
    %v316 = vmax.f32 %v252, 0.0
    %v317 = vmax.f32 %v253, 0.0
    %v318 = vmax.f32 %v254, 0.0
    %v319 = vmax.f32 %v255, 0.0
    %v320 = vmax.f32 %v256, 0.0
    %v321 = vmax.f32 %v257, 0.0
    %v322 = vmax.f32 %v258, 0.0
    %v323 = vmax.f32 %v259, 0.0
    %v324 = vmax.f32 %v260, 0.0
    %v325 = vmax.f32 %v261, 0.0
    %v326 = vmax.f32 %v262, 0.0
    %v327 = vmax.f32 %v263, 0.0
    %v328 = vmax.f32 %v264, 0.0
    %v329 = vmax.f32 %v265, 0.0
    %v330 = vmax.f32 %v266, 0.0
    %v331 = vmax.f32 %v267, 0.0
    %v332 = vmax.f32 %v268, 0.0
    %v333 = vmax.f32 %v269, 0.0
    %v334 = vmax.f32 %v270, 0.0
    %v335 = vmax.f32 %v271, 0.0
    %v336 = vmax.f32 %v272, 0.0
    %v337 = vmax.f32 %v273, 0.0
    %v338 = vmax.f32 %v274, 0.0
    %v339 = vmax.f32 %v275, 0.0
    %v340 = vmax.f32 %v276, 0.0
    %v341 = vmax.f32 %v277, 0.0
    %v342 = vmax.f32 %v278, 0.0
    %v343 = vmax.f32 %v279, 0.0
    %344 = vst [vmem:[#allocation2] sm:$0xff] %v280
    %345 = vst [vmem:[#allocation2 + $0x8] sm:$0xff] %v281
    %346 = vst [vmem:[#allocation2 + $0x10] sm:$0xff] %v282
    %347 = vst [vmem:[#allocation2 + $0x18] sm:$0xff] %v283
    %348 = vst [vmem:[#allocation2 + $0x20] sm:$0xff] %v284
    %349 = vst [vmem:[#allocation2 + $0x28] sm:$0xff] %v285
    %350 = vst [vmem:[#allocation2 + $0x30] sm:$0xff] %v286
    %351 = vst [vmem:[#allocation2 + $0x38] sm:$0xff] %v287
    %352 = vst [vmem:[#allocation2 + $0x40] sm:$0xff] %v288
    %353 = vst [vmem:[#allocation2 + $0x48] sm:$0xff] %v289
    %354 = vst [vmem:[#allocation2 + $0x50] sm:$0xff] %v290
    %355 = vst [vmem:[#allocation2 + $0x58] sm:$0xff] %v291
    %356 = vst [vmem:[#allocation2 + $0x60] sm:$0xff] %v292
    %357 = vst [vmem:[#allocation2 + $0x68] sm:$0xff] %v293
    %358 = vst [vmem:[#allocation2 + $0x70] sm:$0xff] %v294
    %359 = vst [vmem:[#allocation2 + $0x78] sm:$0xff] %v295
    %360 = vst [vmem:[#allocation2 + $0x80] sm:$0xff] %v296
    %361 = vst [vmem:[#allocation2 + $0x88] sm:$0xff] %v297
    %362 = vst [vmem:[#allocation2 + $0x90] sm:$0xff] %v298
    %363 = vst [vmem:[#allocation2 + $0x98] sm:$0xff] %v299
    %364 = vst [vmem:[#allocation2 + $0xa0] sm:$0xff] %v300
    %365 = vst [vmem:[#allocation2 + $0xa8] sm:$0xff] %v301
    %366 = vst [vmem:[#allocation2 + $0xb0] sm:$0xff] %v302
    %367 = vst [vmem:[#allocation2 + $0xb8] sm:$0xff] %v303
    %368 = vst [vmem:[#allocation2 + $0xc0] sm:$0xff] %v304
    %369 = vst [vmem:[#allocation2 + $0xc8] sm:$0xff] %v305
    %370 = vst [vmem:[#allocation2 + $0xd0] sm:$0xff] %v306
    %371 = vst [vmem:[#allocation2 + $0xd8] sm:$0xff] %v307
    %372 = vst [vmem:[#allocation2 + $0xe0] sm:$0xff] %v308
    %373 = vst [vmem:[#allocation2 + $0xe8] sm:$0xff] %v309
    %374 = vst [vmem:[#allocation2 + $0xf0] sm:$0xff] %v310
    %375 = vst [vmem:[#allocation2 + $0xf8] sm:$0xff] %v311
    %376 = vst [vmem:[#allocation2 + $0x100] sm:$0xff] %v312
    %377 = vst [vmem:[#allocation2 + $0x108] sm:$0xff] %v313
    %378 = vst [vmem:[#allocation2 + $0x110] sm:$0xff] %v314
    %379 = vst [vmem:[#allocation2 + $0x118] sm:$0xff] %v315
    %380 = vst [vmem:[#allocation2 + $0x120] sm:$0xff] %v316
    %381 = vst [vmem:[#allocation2 + $0x128] sm:$0xff] %v317
    %382 = vst [vmem:[#allocation2 + $0x130] sm:$0xff] %v318
    %383 = vst [vmem:[#allocation2 + $0x138] sm:$0xff] %v319
    %384 = vst [vmem:[#allocation2 + $0x140] sm:$0xff] %v320
    %385 = vst [vmem:[#allocation2 + $0x148] sm:$0xff] %v321
    %386 = vst [vmem:[#allocation2 + $0x150] sm:$0xff] %v322
    %387 = vst [vmem:[#allocation2 + $0x158] sm:$0xff] %v323
    %388 = vst [vmem:[#allocation2 + $0x160] sm:$0xff] %v324
    %389 = vst [vmem:[#allocation2 + $0x168] sm:$0xff] %v325
    %390 = vst [vmem:[#allocation2 + $0x170] sm:$0xff] %v326
    %391 = vst [vmem:[#allocation2 + $0x178] sm:$0xff] %v327
    %392 = vst [vmem:[#allocation2 + $0x180] sm:$0xff] %v328
    %393 = vst [vmem:[#allocation2 + $0x188] sm:$0xff] %v329
    %394 = vst [vmem:[#allocation2 + $0x190] sm:$0xff] %v330
    %395 = vst [vmem:[#allocation2 + $0x198] sm:$0xff] %v331
    %396 = vst [vmem:[#allocation2 + $0x1a0] sm:$0xff] %v332
    %397 = vst [vmem:[#allocation2 + $0x1a8] sm:$0xff] %v333
    %398 = vst [vmem:[#allocation2 + $0x1b0] sm:$0xff] %v334
    %399 = vst [vmem:[#allocation2 + $0x1b8] sm:$0xff] %v335
    %400 = vst [vmem:[#allocation2 + $0x1c0] sm:$0xff] %v336
    %401 = vst [vmem:[#allocation2 + $0x1c8] sm:$0xff] %v337
    %402 = vst [vmem:[#allocation2 + $0x1d0] sm:$0xff] %v338
    %403 = vst [vmem:[#allocation2 + $0x1d8] sm:$0xff] %v339
    %404 = vst [vmem:[#allocation2 + $0x1e0] sm:$0xff] %v340
    %405 = vst [vmem:[#allocation2 + $0x1e8] sm:$0xff] %v341
    %406 = vst [vmem:[#allocation2 + $0x1f0] sm:$0xff] %v342
    %407 = vst [vmem:[#allocation2 + $0x1f8] sm:$0xff] %v343
    // Predicated region
    $region10: #{stack_gcn_encoder_forward.10} parent=1 // pred_check
      _
    $region11: #{stack_gcn_encoder_forward.10} parent=1 // pred_check_branch
      %409 = sbr.rel (0) target = $region13
    $region12: #{stack_gcn_encoder_forward.10} parent=1 // pred_region
      %s411 = ssub.s32 8192, 8192
      %412 = vsyncadd [#allocation3], %s411
      %s413 = sshll.u32 [#allocation2], 4
      %s414 = int_to_ptr.vmem [resolvable:$true] %s413
      %419 = dma.vmem_to_hbm [thread:$0]  %s414, 8192, %s2, [#allocation3], 256, 256, 16
    $region13: #{stack_gcn_encoder_forward.10} parent=1 // pred_fallthru
      _
    // Predicated region
    $region14: #{stack_gcn_encoder_forward.10} parent=1 // pred_check
      _
    $region15: #{stack_gcn_encoder_forward.10} parent=1 // pred_check_branch
      %421 = sbr.rel (0) target = $region17
    $region16: #{stack_gcn_encoder_forward.10} parent=1 // pred_region
      %422 = dma.done [#allocation3], 8192
    $region17: #{stack_gcn_encoder_forward.10} parent=1 // pred_fallthru
      _
    %423 = vsyncpa [#allocation3], 1

// kernel: stack_gcn_encoder_forward.8
$region0: #{stack_gcn_encoder_forward.8}
  #allocation0 [shape = 'u32[]', space=smem, size = 0x4, offset = 0x4, fixed_abs, tag = 'smem constant byte address 0x4 - core index']
  #allocation1 [shape = 'u32[144,128]{1,0:T(1,128)}', space=vmem, size = 0x12000, scoped, tag = 'internal scratch']
  %s0 = inlined_call_operand.vmem [shape: f32[2,256,384], index: 0, kind: input, shape index: {}]
  %s1 = inlined_call_operand.vmem [shape: bf16[2,384,128], index: 1, kind: input, shape index: {}]
  %s2 = inlined_call_operand.vmem [shape: f32[256,256], index: 2, kind: output, shape index: {0}]
  %s3 = inlined_call_operand.vmem [shape: f32[8,256], index: 3, kind: output, shape index: {1}]
  %4 = xla_tuple %s2, %s3
  %s5 = sld [smem:[#allocation0]]
  $region83: #{stack_gcn_encoder_forward.8} parent=0
    _
  %s7 = ssub.s32 1, %s5
  %s8 = scalar_select 0, %s7, %s5
  $region1: #{stack_gcn_encoder_forward.8} parent=0
    #allocation2 [shape = 'u8[262144]{0}', space=vmem, size = 0x40000, scoped, tag = 'output window, operand 0']
    loop: start=0, step=1, limit=4
    $region2: #{stack_gcn_encoder_forward.8} parent=1 // loop_pre_header
      _
    $region3: #{stack_gcn_encoder_forward.8} parent=1 // loop_header
      %s10 = sphi 0, %s14
      %p11 = scmp.ge.s32.totalorder %s10, 4
      %s17 = sphi 0, %s29
      %s18 = sphi 0, %s25
      %s19 = sphi 0, %s17
      %s20 = sphi 0, %s18
      %s21 = sphi 0, %s19
      %s22 = sphi 0, %s20
      %s34 = sphi 0, %s36
      %s37 = sphi 0, %s34
      %s38 = sphi 0, %s37
      %s54 = sphi 0, %s38
      %s60 = sphi 0, %s62
      %s63 = sphi 0, %s60
      %s64 = sphi 0, %s63
      %s80 = sphi 0, %s64
      %s88 = sphi 0, %s90
      %s91 = sphi 0, %s88
      %s92 = sphi 0, %s91
      %s108 = sphi 0, %s92
      %s116 = sphi 0, %s118
      %s119 = sphi 0, %s116
      %s120 = sphi 0, %s119
      %s136 = sphi 0, %s120
    $region4: #{stack_gcn_encoder_forward.8} parent=1 // loop_header_branch
      %13 = sbr.rel (%p11) target = $region8
    $region5: #{stack_gcn_encoder_forward.8} parent=1 // loop_body
      %s15 = ssub.s32 %s10, 1
      %s16 = ssub.s32 %s10, 2
      %s23 = sadd.s32 1, %s18
      %p24 = scmp.ge.s32.totalorder %s23, 1
      %s25 = scalar_select %p24, 0, %s23
      %s26 = sadd.s32 1, %s17
      %s27 = scalar_select %p24, %s26, %s17
      %p28 = scmp.ge.s32.totalorder %s27, 2
      %s29 = scalar_select %p28, 0, %s27
      %s30 = ssub.s32 %s17, %s29
      %s31 = ssub.s32 %s18, %s25
      %s32 = sor.u32 %s30, %s31
      %p33 = scmp.eq.s32.totalorder %s32, 0
      %s35 = sadd.s32 %s34, 1
      %s36 = scalar_select %p33, %s34, %s35
      %p39 = pneg %p33
      %p40 = scmp.eq.s32.totalorder %s10, 1
      %p41 = por %p39, %p40
      %p42 = scmp.ne.s32.totalorder %s34, %s37
      %p43 = scmp.eq.s32.totalorder %s10, 0
      %p44 = por %p42, %p43
      %p45 = scmp.ne.s32.totalorder %s34, %s37
      %p46 = scmp.eq.s32.totalorder %s15, 1
      %p47 = por %p45, %p46
      %p48 = scmp.ne.s32.totalorder %s37, %s38
      %p49 = scmp.eq.s32.totalorder %s15, 0
      %p50 = por %p48, %p49
      %p51 = scmp.ne.s32.totalorder %s37, %s38
      %p52 = scmp.eq.s32.totalorder %s16, 1
      %p53 = por %p51, %p52
      %p55 = scmp.ne.s32.totalorder %s38, %s54
      %p56 = scmp.eq.s32.totalorder %s16, 0
      %p57 = por %p55, %p56
      %s58 = ssub.s32 %s17, %s29
      %p59 = scmp.eq.s32.totalorder %s58, 0
      %s61 = sadd.s32 %s60, 1
      %s62 = scalar_select %p59, %s60, %s61
      %p65 = pneg %p59
      %p66 = scmp.eq.s32.totalorder %s10, 1
      %p67 = por %p65, %p66
      %p68 = scmp.ne.s32.totalorder %s60, %s63
      %p69 = scmp.eq.s32.totalorder %s10, 0
      %p70 = por %p68, %p69
      %p71 = scmp.ne.s32.totalorder %s60, %s63
      %p72 = scmp.eq.s32.totalorder %s15, 1
      %p73 = por %p71, %p72
      %p74 = scmp.ne.s32.totalorder %s63, %s64
      %p75 = scmp.eq.s32.totalorder %s15, 0
      %p76 = por %p74, %p75
      %p77 = scmp.ne.s32.totalorder %s63, %s64
      %p78 = scmp.eq.s32.totalorder %s16, 1
      %p79 = por %p77, %p78
      %p81 = scmp.ne.s32.totalorder %s64, %s80
      %p82 = scmp.eq.s32.totalorder %s16, 0
      %p83 = por %p81, %p82
      %s84 = ssub.s32 %s18, %s25
      %s85 = ssub.s32 %s17, %s29
      %s86 = sor.u32 %s84, %s85
      %p87 = scmp.eq.s32.totalorder %s86, 0
      %s89 = sadd.s32 %s88, 1
      %s90 = scalar_select %p87, %s88, %s89
      %p93 = pneg %p87
      %p94 = scmp.eq.s32.totalorder %s10, 1
      %p95 = por %p93, %p94
      %p96 = scmp.ne.s32.totalorder %s88, %s91
      %p97 = scmp.eq.s32.totalorder %s10, 0
      %p98 = por %p96, %p97
      %p99 = scmp.ne.s32.totalorder %s88, %s91
      %p100 = scmp.eq.s32.totalorder %s15, 1
      %p101 = por %p99, %p100
      %p102 = scmp.ne.s32.totalorder %s91, %s92
      %p103 = scmp.eq.s32.totalorder %s15, 0
      %p104 = por %p102, %p103
      %p105 = scmp.ne.s32.totalorder %s91, %s92
      %p106 = scmp.eq.s32.totalorder %s16, 1
      %p107 = por %p105, %p106
      %p109 = scmp.ne.s32.totalorder %s92, %s108
      %p110 = scmp.eq.s32.totalorder %s16, 0
      %p111 = por %p109, %p110
      %s112 = ssub.s32 %s18, %s25
      %s113 = ssub.s32 %s17, %s29
      %s114 = sor.u32 %s112, %s113
      %p115 = scmp.eq.s32.totalorder %s114, 0
      %s117 = sadd.s32 %s116, 1
      %s118 = scalar_select %p115, %s116, %s117
      %p121 = pneg %p115
      %p122 = scmp.eq.s32.totalorder %s10, 1
      %p123 = por %p121, %p122
      %p124 = scmp.ne.s32.totalorder %s116, %s119
      %p125 = scmp.eq.s32.totalorder %s10, 0
      %p126 = por %p124, %p125
      %p127 = scmp.ne.s32.totalorder %s116, %s119
      %p128 = scmp.eq.s32.totalorder %s15, 1
      %p129 = por %p127, %p128
      %p130 = scmp.ne.s32.totalorder %s119, %s120
      %p131 = scmp.eq.s32.totalorder %s15, 0
      %p132 = por %p130, %p131
      %p133 = scmp.ne.s32.totalorder %s119, %s120
      %p134 = scmp.eq.s32.totalorder %s16, 1
      %p135 = por %p133, %p134
      %p137 = scmp.ne.s32.totalorder %s120, %s136
      %p138 = scmp.eq.s32.totalorder %s16, 0
      %p139 = por %p137, %p138
      %p140 = scmp.le.s32.totalorder 1, %s10
      %p141 = scmp.lt.s32.totalorder %s10, 3
      %p142 = pnand %p140, %p141
      %p143 = pneg %p142
      // Predicated region
      $region9: #{stack_gcn_encoder_forward.8} parent=5 // pred_check
        _
      $region10: #{stack_gcn_encoder_forward.8} parent=5 // pred_check_branch
        %145 = sbr.rel (%p142) target = $region12
      $region11: #{stack_gcn_encoder_forward.8} parent=5 // pred_region
        %s146 = ssub.s32 %s10, 1
      $region12: #{stack_gcn_encoder_forward.8} parent=5 // pred_fallthru
        _
      %p147 = scmp.lt.s32.totalorder %s10, 2
      // Predicated region
      $region13: #{stack_gcn_encoder_forward.8} parent=5 // pred_check
        %p148 = pneg %p147
      $region14: #{stack_gcn_encoder_forward.8} parent=5 // pred_check_branch
        %150 = sbr.rel (%p148) target = $region16
      $region15: #{stack_gcn_encoder_forward.8} parent=5 // pred_region
        // Predicated region
        $region17: #{stack_gcn_encoder_forward.8} parent=15 // pred_check
          %p151 = pneg %p44
        $region18: #{stack_gcn_encoder_forward.8} parent=15 // pred_check_branch
          %153 = sbr.rel (%p151) target = $region20
        $region19: #{stack_gcn_encoder_forward.8} parent=15 // pred_region
          %s154 = smul.u32 32, %s18
          %p155 = scmp.lt.s32.totalorder %s17, 1
          %s156 = scalar_select %p155, %s17, 1
          %p157 = scmp.lt.s32.totalorder %s154, 31
          %s158 = scalar_select %p157, %s154, 31
          %s159 = smul.addr %s158, 3
          %s160 = smul.addr %s156, 96
          %s161 = sadd.s32 %s159, %s160
          %s162 = smul.addr %s161, 8
          %s163 = scalar_lea.vmem %s0, %s162
          %s164 = smul.u32 32, %s18
        $region20: #{stack_gcn_encoder_forward.8} parent=15 // pred_fallthru
          _
        // Predicated region
        $region21: #{stack_gcn_encoder_forward.8} parent=15 // pred_check
          %p165 = pneg %p70
        $region22: #{stack_gcn_encoder_forward.8} parent=15 // pred_check_branch
          %167 = sbr.rel (%p165) target = $region24
        $region23: #{stack_gcn_encoder_forward.8} parent=15 // pred_region
          %p168 = scmp.lt.s32.totalorder %s17, 1
          %s169 = scalar_select %p168, %s17, 1
          %s170 = smul.addr %s169, 48
          %s171 = smul.addr %s170, 4
          %s172 = scalar_lea.vmem %s1, %s171
        $region24: #{stack_gcn_encoder_forward.8} parent=15 // pred_fallthru
          _
      $region16: #{stack_gcn_encoder_forward.8} parent=5 // pred_fallthru
        _
      %p173 = scmp.le.s32.totalorder 1, %s10
      %p174 = scmp.lt.s32.totalorder %s10, 3
      %p175 = pnand %p173, %p174
      %p176 = pneg %p175
      // Predicated region
      $region25: #{stack_gcn_encoder_forward.8} parent=5 // pred_check
        _
      $region26: #{stack_gcn_encoder_forward.8} parent=5 // pred_check_branch
        %178 = sbr.rel (%p175) target = $region28
      $region27: #{stack_gcn_encoder_forward.8} parent=5 // pred_region
        %s179 = ssub.s32 %s10, 1
        %s180 = smul.u32 32, %s20
        %p181 = scmp.lt.s32.totalorder %s19, 1
        %s182 = scalar_select %p181, %s19, 1
        %p183 = scmp.lt.s32.totalorder %s180, 31
        %s184 = scalar_select %p183, %s180, 31
        %s185 = smul.addr %s184, 3
        %s186 = smul.addr %s182, 96
        %s187 = sadd.s32 %s185, %s186
        %s188 = smul.addr %s187, 8
        %s189 = scalar_lea.vmem %s0, %s188
        %p190 = pneg %p50
        %p191 = pneg %p47
        %p192 = scmp.lt.s32.totalorder %s19, 1
        %s193 = scalar_select %p192, %s19, 1
        %s194 = smul.addr %s193, 48
        %s195 = smul.addr %s194, 4
        %s196 = scalar_lea.vmem %s1, %s195
        %p197 = pneg %p76
        %p198 = pneg %p73
        %p199 = pneg %p104
        %p200 = pneg %p101
        %s201 = sand.u32 %s91, 1
        %s202 = sand.u32 %s91, 1
        %s203 = smul.addr %s202, 256
        %s204 = scalar_lea.vmem [#allocation2], %s203
        %p205 = pneg %p132
        %p206 = pneg %p129
        %p207 = scmp.lt.s32.totalorder %s20, 0
        %s208 = scalar_select %p207, %s20, 0
        %p209 = scmp.lt.s32.totalorder %s19, 1
        %s210 = scalar_select %p209, %s19, 1
        %s211 = smul.addr %s208, 2
        %s212 = sadd.s32 %s210, %s211
        %s213 = smul.addr %s212, 8
        %s214 = scalar_lea.vmem %s3, %s213
        %s215 = smul.u32 32, %s20
        %p216 = scmp.lt.s32.totalorder %s19, 1
        %s217 = scalar_select %p216, %s19, 1
        %p218 = scmp.lt.s32.totalorder %s215, 31
        %s219 = scalar_select %p218, %s215, 31
        %s220 = smul.addr %s219, 3
        %s221 = smul.addr %s217, 96
        %s222 = sadd.s32 %s220, %s221
        %s223 = smul.addr %s222, 8
        %s224 = scalar_lea.vmem %s0, %s223
        %s225 = smul.u32 32, %s20
        %p226 = scmp.lt.s32.totalorder %s19, 1
        %s227 = scalar_select %p226, %s19, 1
        %s228 = smul.addr %s227, 48
        %s229 = smul.addr %s228, 4
        %s230 = scalar_lea.vmem %s1, %s229
        %s231 = smul.u32 32, %s20
        %p232 = scmp.lt.s32.totalorder %s20, 0
        %s233 = scalar_select %p232, %s20, 0
        %p234 = scmp.lt.s32.totalorder %s19, 1
        %s235 = scalar_select %p234, %s19, 1
        %s236 = smul.addr %s233, 2
        %s237 = sadd.s32 %s235, %s236
        %s238 = smul.addr %s237, 8
        %s239 = scalar_lea.vmem %s3, %s238
        %v241 = vld [vmem:[%s224] sm:$0xff]
        %v242 = vld [vmem:[%s224 + $0x8] sm:$0xff]
        %v243 = vld [vmem:[%s224 + $0x10] sm:$0xff]
        %v244 = vld [vmem:[%s224 + $0x18] sm:$0xff]
        %v245 = vld [vmem:[%s224 + $0x20] sm:$0xff]
        %v246 = vld [vmem:[%s224 + $0x28] sm:$0xff]
        %v247 = vld [vmem:[%s224 + $0x30] sm:$0xff]
        %v248 = vld [vmem:[%s224 + $0x38] sm:$0xff]
        %v249 = vld [vmem:[%s224 + $0x40] sm:$0xff]
        %v250 = vld [vmem:[%s224 + $0x48] sm:$0xff]
        %v251 = vld [vmem:[%s224 + $0x50] sm:$0xff]
        %v252 = vld [vmem:[%s224 + $0x58] sm:$0xff]
        %v253 = vld [vmem:[%s224 + $0x60] sm:$0xff]
        %v254 = vld [vmem:[%s224 + $0x68] sm:$0xff]
        %v255 = vld [vmem:[%s224 + $0x70] sm:$0xff]
        %v256 = vld [vmem:[%s224 + $0x78] sm:$0xff]
        %v257 = vld [vmem:[%s224 + $0x80] sm:$0xff]
        %v258 = vld [vmem:[%s224 + $0x88] sm:$0xff]
        %v259 = vld [vmem:[%s224 + $0x90] sm:$0xff]
        %v260 = vld [vmem:[%s224 + $0x98] sm:$0xff]
        %v261 = vld [vmem:[%s224 + $0xa0] sm:$0xff]
        %v262 = vld [vmem:[%s224 + $0xa8] sm:$0xff]
        %v263 = vld [vmem:[%s224 + $0xb0] sm:$0xff]
        %v264 = vld [vmem:[%s224 + $0xb8] sm:$0xff]
        %v265 = vld [vmem:[%s224 + $0xc0] sm:$0xff]
        %v266 = vld [vmem:[%s224 + $0xc8] sm:$0xff]
        %v267 = vld [vmem:[%s224 + $0xd0] sm:$0xff]
        %v268 = vld [vmem:[%s224 + $0xd8] sm:$0xff]
        %v269 = vld [vmem:[%s224 + $0xe0] sm:$0xff]
        %v270 = vld [vmem:[%s224 + $0xe8] sm:$0xff]
        %v271 = vld [vmem:[%s224 + $0xf0] sm:$0xff]
        %v272 = vld [vmem:[%s224 + $0xf8] sm:$0xff]
        %v273 = vld [vmem:[%s224 + $0x100] sm:$0xff]
        %v274 = vld [vmem:[%s224 + $0x108] sm:$0xff]
        %v275 = vld [vmem:[%s224 + $0x110] sm:$0xff]
        %v276 = vld [vmem:[%s224 + $0x118] sm:$0xff]
        %v277 = vld [vmem:[%s224 + $0x120] sm:$0xff]
        %v278 = vld [vmem:[%s224 + $0x128] sm:$0xff]
        %v279 = vld [vmem:[%s224 + $0x130] sm:$0xff]
        %v280 = vld [vmem:[%s224 + $0x138] sm:$0xff]
        %v281 = vld [vmem:[%s224 + $0x140] sm:$0xff]
        %v282 = vld [vmem:[%s224 + $0x148] sm:$0xff]
        %v283 = vld [vmem:[%s224 + $0x150] sm:$0xff]
        %v284 = vld [vmem:[%s224 + $0x158] sm:$0xff]
        %v285 = vld [vmem:[%s224 + $0x160] sm:$0xff]
        %v286 = vld [vmem:[%s224 + $0x168] sm:$0xff]
        %v287 = vld [vmem:[%s224 + $0x170] sm:$0xff]
        %v288 = vld [vmem:[%s224 + $0x178] sm:$0xff]
        %v289 = vld [vmem:[%s224 + $0x180] sm:$0xff]
        %v290 = vld [vmem:[%s224 + $0x188] sm:$0xff]
        %v291 = vld [vmem:[%s224 + $0x190] sm:$0xff]
        %v292 = vld [vmem:[%s224 + $0x198] sm:$0xff]
        %v293 = vld [vmem:[%s224 + $0x1a0] sm:$0xff]
        %v294 = vld [vmem:[%s224 + $0x1a8] sm:$0xff]
        %v295 = vld [vmem:[%s224 + $0x1b0] sm:$0xff]
        %v296 = vld [vmem:[%s224 + $0x1b8] sm:$0xff]
        %v297 = vld [vmem:[%s224 + $0x1c0] sm:$0xff]
        %v298 = vld [vmem:[%s224 + $0x1c8] sm:$0xff]
        %v299 = vld [vmem:[%s224 + $0x1d0] sm:$0xff]
        %v300 = vld [vmem:[%s224 + $0x1d8] sm:$0xff]
        %v301 = vld [vmem:[%s224 + $0x1e0] sm:$0xff]
        %v302 = vld [vmem:[%s224 + $0x1e8] sm:$0xff]
        %v303 = vld [vmem:[%s224 + $0x1f0] sm:$0xff]
        %v304 = vld [vmem:[%s224 + $0x1f8] sm:$0xff]
        %v305 = vld [vmem:[%s224 + $0x200] sm:$0xff]
        %v306 = vld [vmem:[%s224 + $0x208] sm:$0xff]
        %v307 = vld [vmem:[%s224 + $0x210] sm:$0xff]
        %v308 = vld [vmem:[%s224 + $0x218] sm:$0xff]
        %v309 = vld [vmem:[%s224 + $0x220] sm:$0xff]
        %v310 = vld [vmem:[%s224 + $0x228] sm:$0xff]
        %v311 = vld [vmem:[%s224 + $0x230] sm:$0xff]
        %v312 = vld [vmem:[%s224 + $0x238] sm:$0xff]
        %v313 = vld [vmem:[%s224 + $0x240] sm:$0xff]
        %v314 = vld [vmem:[%s224 + $0x248] sm:$0xff]
        %v315 = vld [vmem:[%s224 + $0x250] sm:$0xff]
        %v316 = vld [vmem:[%s224 + $0x258] sm:$0xff]
        %v317 = vld [vmem:[%s224 + $0x260] sm:$0xff]
        %v318 = vld [vmem:[%s224 + $0x268] sm:$0xff]
        %v319 = vld [vmem:[%s224 + $0x270] sm:$0xff]
        %v320 = vld [vmem:[%s224 + $0x278] sm:$0xff]
        %v321 = vld [vmem:[%s224 + $0x280] sm:$0xff]
        %v322 = vld [vmem:[%s224 + $0x288] sm:$0xff]
        %v323 = vld [vmem:[%s224 + $0x290] sm:$0xff]
        %v324 = vld [vmem:[%s224 + $0x298] sm:$0xff]
        %v325 = vld [vmem:[%s224 + $0x2a0] sm:$0xff]
        %v326 = vld [vmem:[%s224 + $0x2a8] sm:$0xff]
        %v327 = vld [vmem:[%s224 + $0x2b0] sm:$0xff]
        %v328 = vld [vmem:[%s224 + $0x2b8] sm:$0xff]
        %v329 = vld [vmem:[%s224 + $0x2c0] sm:$0xff]
        %v330 = vld [vmem:[%s224 + $0x2c8] sm:$0xff]
        %v331 = vld [vmem:[%s224 + $0x2d0] sm:$0xff]
        %v332 = vld [vmem:[%s224 + $0x2d8] sm:$0xff]
        %v333 = vld [vmem:[%s224 + $0x2e0] sm:$0xff]
        %v334 = vld [vmem:[%s224 + $0x2e8] sm:$0xff]
        %v335 = vld [vmem:[%s224 + $0x2f0] sm:$0xff]
        %v336 = vld [vmem:[%s224 + $0x2f8] sm:$0xff]
        %v337 = vpack.c.bf16 %v244, %v241
        %v338 = vpack.c.bf16 %v245, %v242
        %v339 = vpack.c.bf16 %v246, %v243
        %v340 = vpack.c.bf16 %v250, %v247
        %v341 = vpack.c.bf16 %v251, %v248
        %v342 = vpack.c.bf16 %v252, %v249
        %v343 = vpack.c.bf16 %v256, %v253
        %v344 = vpack.c.bf16 %v257, %v254
        %v345 = vpack.c.bf16 %v258, %v255
        %v346 = vpack.c.bf16 %v262, %v259
        %v347 = vpack.c.bf16 %v263, %v260
        %v348 = vpack.c.bf16 %v264, %v261
        %v349 = vpack.c.bf16 %v268, %v265
        %v350 = vpack.c.bf16 %v269, %v266
        %v351 = vpack.c.bf16 %v270, %v267
        %v352 = vpack.c.bf16 %v274, %v271
        %v353 = vpack.c.bf16 %v275, %v272
        %v354 = vpack.c.bf16 %v276, %v273
        %v355 = vpack.c.bf16 %v280, %v277
        %v356 = vpack.c.bf16 %v281, %v278
        %v357 = vpack.c.bf16 %v282, %v279
        %v358 = vpack.c.bf16 %v286, %v283
        %v359 = vpack.c.bf16 %v287, %v284
        %v360 = vpack.c.bf16 %v288, %v285
        %v361 = vpack.c.bf16 %v292, %v289
        %v362 = vpack.c.bf16 %v293, %v290
        %v363 = vpack.c.bf16 %v294, %v291
        %v364 = vpack.c.bf16 %v298, %v295
        %v365 = vpack.c.bf16 %v299, %v296
        %v366 = vpack.c.bf16 %v300, %v297
        %v367 = vpack.c.bf16 %v304, %v301
        %v368 = vpack.c.bf16 %v305, %v302
        %v369 = vpack.c.bf16 %v306, %v303
        %v370 = vpack.c.bf16 %v310, %v307
        %v371 = vpack.c.bf16 %v311, %v308
        %v372 = vpack.c.bf16 %v312, %v309
        %v373 = vpack.c.bf16 %v316, %v313
        %v374 = vpack.c.bf16 %v317, %v314
        %v375 = vpack.c.bf16 %v318, %v315
        %v376 = vpack.c.bf16 %v322, %v319
        %v377 = vpack.c.bf16 %v323, %v320
        %v378 = vpack.c.bf16 %v324, %v321
        %v379 = vpack.c.bf16 %v328, %v325
        %v380 = vpack.c.bf16 %v329, %v326
        %v381 = vpack.c.bf16 %v330, %v327
        %v382 = vpack.c.bf16 %v334, %v331
        %v383 = vpack.c.bf16 %v335, %v332
        %v384 = vpack.c.bf16 %v336, %v333
        %v385 = vld [vmem:[%s230] sm:$0xf]
        %v386 = vld [vmem:[%s230 + $0x4] sm:$0xf]
        %v387 = vld [vmem:[%s230 + $0x8] sm:$0xf]
        %v388 = vld [vmem:[%s230 + $0xc] sm:$0xf]
        %v389 = vld [vmem:[%s230 + $0x10] sm:$0xf]
        %v390 = vld [vmem:[%s230 + $0x14] sm:$0xf]
        %v391 = vld [vmem:[%s230 + $0x18] sm:$0xf]
        %v392 = vld [vmem:[%s230 + $0x1c] sm:$0xf]
        %v393 = vld [vmem:[%s230 + $0x20] sm:$0xf]
        %v394 = vld [vmem:[%s230 + $0x24] sm:$0xf]
        %v395 = vld [vmem:[%s230 + $0x28] sm:$0xf]
        %v396 = vld [vmem:[%s230 + $0x2c] sm:$0xf]
        %v397 = vld [vmem:[%s230 + $0x30] sm:$0xf]
        %v398 = vld [vmem:[%s230 + $0x34] sm:$0xf]
        %v399 = vld [vmem:[%s230 + $0x38] sm:$0xf]
        %v400 = vld [vmem:[%s230 + $0x3c] sm:$0xf]
        %v401 = vld [vmem:[%s230 + $0x40] sm:$0xf]
        %v402 = vld [vmem:[%s230 + $0x44] sm:$0xf]
        %v403 = vld [vmem:[%s230 + $0x48] sm:$0xf]
        %v404 = vld [vmem:[%s230 + $0x4c] sm:$0xf]
        %v405 = vld [vmem:[%s230 + $0x50] sm:$0xf]
        %v406 = vld [vmem:[%s230 + $0x54] sm:$0xf]
        %v407 = vld [vmem:[%s230 + $0x58] sm:$0xf]
        %v408 = vld [vmem:[%s230 + $0x5c] sm:$0xf]
        %v409 = vld [vmem:[%s230 + $0x60] sm:$0xf]
        %v410 = vld [vmem:[%s230 + $0x64] sm:$0xf]
        %v411 = vld [vmem:[%s230 + $0x68] sm:$0xf]
        %v412 = vld [vmem:[%s230 + $0x6c] sm:$0xf]
        %v413 = vld [vmem:[%s230 + $0x70] sm:$0xf]
        %v414 = vld [vmem:[%s230 + $0x74] sm:$0xf]
        %v415 = vld [vmem:[%s230 + $0x78] sm:$0xf]
        %v416 = vld [vmem:[%s230 + $0x7c] sm:$0xf]
        %v417 = vld [vmem:[%s230 + $0x80] sm:$0xf]
        %v418 = vld [vmem:[%s230 + $0x84] sm:$0xf]
        %v419 = vld [vmem:[%s230 + $0x88] sm:$0xf]
        %v420 = vld [vmem:[%s230 + $0x8c] sm:$0xf]
        %v421 = vld [vmem:[%s230 + $0x90] sm:$0xf]
        %v422 = vld [vmem:[%s230 + $0x94] sm:$0xf]
        %v423 = vld [vmem:[%s230 + $0x98] sm:$0xf]
        %v424 = vld [vmem:[%s230 + $0x9c] sm:$0xf]
        %v425 = vld [vmem:[%s230 + $0xa0] sm:$0xf]
        %v426 = vld [vmem:[%s230 + $0xa4] sm:$0xf]
        %v427 = vld [vmem:[%s230 + $0xa8] sm:$0xf]
        %v428 = vld [vmem:[%s230 + $0xac] sm:$0xf]
        %v429 = vld [vmem:[%s230 + $0xb0] sm:$0xf]
        %v430 = vld [vmem:[%s230 + $0xb4] sm:$0xf]
        %v431 = vld [vmem:[%s230 + $0xb8] sm:$0xf]
        %v432 = vld [vmem:[%s230 + $0xbc] sm:$0xf]
        %v481 = vunpack.c.l.b16 %v385
        %v482 = vunpack.c.l.b16 %v386
        %v483 = vunpack.c.l.b16 %v387
        %v484 = vunpack.c.l.b16 %v388
        %v485 = vunpack.c.l.b16 %v389
        %v486 = vunpack.c.l.b16 %v390
        %v487 = vunpack.c.l.b16 %v391
        %v488 = vunpack.c.l.b16 %v392
        %v489 = vunpack.c.l.b16 %v393
        %v490 = vunpack.c.l.b16 %v394
        %v491 = vunpack.c.l.b16 %v395
        %v492 = vunpack.c.l.b16 %v396
        %v493 = vunpack.c.l.b16 %v397
        %v494 = vunpack.c.l.b16 %v398
        %v495 = vunpack.c.l.b16 %v399
        %v496 = vunpack.c.l.b16 %v400
        %v497 = vunpack.c.l.b16 %v401
        %v498 = vunpack.c.l.b16 %v402
        %v499 = vunpack.c.l.b16 %v403
        %v500 = vunpack.c.l.b16 %v404
        %v501 = vunpack.c.l.b16 %v405
        %v502 = vunpack.c.l.b16 %v406
        %v503 = vunpack.c.l.b16 %v407
        %v504 = vunpack.c.l.b16 %v408
        %v505 = vunpack.c.l.b16 %v409
        %v506 = vunpack.c.l.b16 %v410
        %v507 = vunpack.c.l.b16 %v411
        %v508 = vunpack.c.l.b16 %v412
        %v509 = vunpack.c.l.b16 %v413
        %v510 = vunpack.c.l.b16 %v414
        %v511 = vunpack.c.l.b16 %v415
        %v512 = vunpack.c.l.b16 %v416
        %v513 = vunpack.c.l.b16 %v417
        %v514 = vunpack.c.l.b16 %v418
        %v515 = vunpack.c.l.b16 %v419
        %v516 = vunpack.c.l.b16 %v420
        %v517 = vunpack.c.l.b16 %v421
        %v518 = vunpack.c.l.b16 %v422
        %v519 = vunpack.c.l.b16 %v423
        %v520 = vunpack.c.l.b16 %v424
        %v521 = vunpack.c.l.b16 %v425
        %v522 = vunpack.c.l.b16 %v426
        %v523 = vunpack.c.l.b16 %v427
        %v524 = vunpack.c.l.b16 %v428
        %v525 = vunpack.c.l.b16 %v429
        %v526 = vunpack.c.l.b16 %v430
        %v527 = vunpack.c.l.b16 %v431
        %v528 = vunpack.c.l.b16 %v432
        %v529 = vpack.c.b16 %v482, %v481
        %v530 = vpack.c.b16 %v484, %v483
        %v531 = vpack.c.b16 %v486, %v485
        %v532 = vpack.c.b16 %v488, %v487
        %v533 = vpack.c.b16 %v490, %v489
        %v534 = vpack.c.b16 %v492, %v491
        %v535 = vpack.c.b16 %v494, %v493
        %v536 = vpack.c.b16 %v496, %v495
        %v537 = vpack.c.b16 %v498, %v497
        %v538 = vpack.c.b16 %v500, %v499
        %v539 = vpack.c.b16 %v502, %v501
        %v540 = vpack.c.b16 %v504, %v503
        %v541 = vpack.c.b16 %v506, %v505
        %v542 = vpack.c.b16 %v508, %v507
        %v543 = vpack.c.b16 %v510, %v509
        %v544 = vpack.c.b16 %v512, %v511
        %v545 = vpack.c.b16 %v514, %v513
        %v546 = vpack.c.b16 %v516, %v515
        %v547 = vpack.c.b16 %v518, %v517
        %v548 = vpack.c.b16 %v520, %v519
        %v549 = vpack.c.b16 %v522, %v521
        %v550 = vpack.c.b16 %v524, %v523
        %v551 = vpack.c.b16 %v526, %v525
        %v552 = vpack.c.b16 %v528, %v527
        %577 = vmatprep.subr.bf16.mxu0 0
        %578 = vmatpush1.bf16.msra.mxu0 %v536
        %579 = vmatprep.subr.bf16.mxu0 0
        %580 = vmatpush1.bf16.msra.mxu0 %v535
        %581 = vmatprep.subr.bf16.mxu0 0
        %582 = vmatpush1.bf16.msra.mxu0 %v534
        %583 = vmatprep.subr.bf16.mxu0 0
        %584 = vmatpush1.bf16.msra.mxu0 %v533
        %585 = vmatprep.subr.bf16.mxu0 0
        %586 = vmatpush1.bf16.msra.mxu0 %v532
        %587 = vmatprep.subr.bf16.mxu0 0
        %588 = vmatpush1.bf16.msra.mxu0 %v531
        %589 = vmatprep.subr.bf16.mxu0 0
        %590 = vmatpush1.bf16.msra.mxu0 %v530
        %591 = vmatprep.subr.bf16.mxu0 0
        %592 = vmatpush1.bf16.msra.mxu0 %v529
        %593 = vmatprep.subr.bf16.mxu0 0
        %594 = vmatpush2.bf16.msra.mxu0 %v544
        %595 = vmatprep.subr.bf16.mxu0 0
        %596 = vmatpush2.bf16.msra.mxu0 %v543
        %597 = vmatprep.subr.bf16.mxu0 0
        %598 = vmatpush2.bf16.msra.mxu0 %v542
        %599 = vmatprep.subr.bf16.mxu0 0
        %600 = vmatpush2.bf16.msra.mxu0 %v541
        %601 = vmatprep.subr.bf16.mxu0 0
        %602 = vmatpush2.bf16.msra.mxu0 %v540
        %603 = vmatprep.subr.bf16.mxu0 0
        %604 = vmatpush2.bf16.msra.mxu0 %v539
        %605 = vmatprep.subr.bf16.mxu0 0
        %606 = vmatpush2.bf16.msra.mxu0 %v538
        %607 = vmatprep.subr.bf16.mxu0 0
        %608 = vmatpush2.bf16.msra.mxu0 %v537
        %609 = vmatprep.mubr.bf16.mxu0 %v338
        %610 = vmatmul.mubr.bf16.gmra.mxu0 %v337
        %v611 = vpop.f32.mrf.mxu0
        %v612 = vadd.f32 0.0, %v611
        %v613 = vpop.f32.mrf.mxu0
        %v614 = vpop.f32.mrf.mxu0
        %v615 = vadd.f32 0.0, %v614
        %v616 = vpop.f32.mrf.mxu0
        %617 = vmatprep.mubr.bf16.mxu0 %v341
        %618 = vmatmul.mubr.bf16.gmra.mxu0 %v340
        %v619 = vpop.f32.mrf.mxu0
        %v620 = vadd.f32 0.0, %v619
        %v621 = vpop.f32.mrf.mxu0
        %v622 = vpop.f32.mrf.mxu0
        %v623 = vadd.f32 0.0, %v622
        %v624 = vpop.f32.mrf.mxu0
        %625 = vmatprep.mubr.bf16.mxu0 %v344
        %626 = vmatmul.mubr.bf16.gmra.mxu0 %v343
        %v627 = vpop.f32.mrf.mxu0
        %v628 = vadd.f32 0.0, %v627
        %v629 = vpop.f32.mrf.mxu0
        %v630 = vpop.f32.mrf.mxu0
        %v631 = vadd.f32 0.0, %v630
        %v632 = vpop.f32.mrf.mxu0
        %633 = vmatprep.mubr.bf16.mxu0 %v347
        %634 = vmatmul.mubr.bf16.gmra.mxu0 %v346
        %v635 = vpop.f32.mrf.mxu0
        %v636 = vadd.f32 0.0, %v635
        %v637 = vpop.f32.mrf.mxu0
        %v638 = vpop.f32.mrf.mxu0
        %v639 = vadd.f32 0.0, %v638
        %v640 = vpop.f32.mrf.mxu0
        %641 = vmatprep.mubr.bf16.mxu0 %v350
        %642 = vmatmul.mubr.bf16.gmra.mxu0 %v349
        %v643 = vpop.f32.mrf.mxu0
        %v644 = vadd.f32 0.0, %v643
        %v645 = vpop.f32.mrf.mxu0
        %v646 = vpop.f32.mrf.mxu0
        %v647 = vadd.f32 0.0, %v646
        %v648 = vpop.f32.mrf.mxu0
        %649 = vmatprep.mubr.bf16.mxu0 %v353
        %650 = vmatmul.mubr.bf16.gmra.mxu0 %v352
        %v651 = vpop.f32.mrf.mxu0
        %v652 = vadd.f32 0.0, %v651
        %v653 = vpop.f32.mrf.mxu0
        %v654 = vpop.f32.mrf.mxu0
        %v655 = vadd.f32 0.0, %v654
        %v656 = vpop.f32.mrf.mxu0
        %657 = vmatprep.mubr.bf16.mxu0 %v356
        %658 = vmatmul.mubr.bf16.gmra.mxu0 %v355
        %v659 = vpop.f32.mrf.mxu0
        %v660 = vadd.f32 0.0, %v659
        %v661 = vpop.f32.mrf.mxu0
        %v662 = vpop.f32.mrf.mxu0
        %v663 = vadd.f32 0.0, %v662
        %v664 = vpop.f32.mrf.mxu0
        %665 = vmatprep.mubr.bf16.mxu0 %v359
        %666 = vmatmul.mubr.bf16.gmra.mxu0 %v358
        %v667 = vpop.f32.mrf.mxu0
        %v668 = vadd.f32 0.0, %v667
        %v669 = vpop.f32.mrf.mxu0
        %v670 = vpop.f32.mrf.mxu0
        %v671 = vadd.f32 0.0, %v670
        %v672 = vpop.f32.mrf.mxu0
        %673 = vmatprep.mubr.bf16.mxu0 %v362
        %674 = vmatmul.mubr.bf16.gmra.mxu0 %v361
        %v675 = vpop.f32.mrf.mxu0
        %v676 = vadd.f32 0.0, %v675
        %v677 = vpop.f32.mrf.mxu0
        %v678 = vpop.f32.mrf.mxu0
        %v679 = vadd.f32 0.0, %v678
        %v680 = vpop.f32.mrf.mxu0
        %681 = vmatprep.mubr.bf16.mxu0 %v365
        %682 = vmatmul.mubr.bf16.gmra.mxu0 %v364
        %v683 = vpop.f32.mrf.mxu0
        %v684 = vadd.f32 0.0, %v683
        %v685 = vpop.f32.mrf.mxu0
        %v686 = vpop.f32.mrf.mxu0
        %v687 = vadd.f32 0.0, %v686
        %v688 = vpop.f32.mrf.mxu0
        %689 = vmatprep.mubr.bf16.mxu0 %v368
        %690 = vmatmul.mubr.bf16.gmra.mxu0 %v367
        %v691 = vpop.f32.mrf.mxu0
        %v692 = vadd.f32 0.0, %v691
        %v693 = vpop.f32.mrf.mxu0
        %v694 = vpop.f32.mrf.mxu0
        %v695 = vadd.f32 0.0, %v694
        %v696 = vpop.f32.mrf.mxu0
        %697 = vmatprep.mubr.bf16.mxu0 %v371
        %698 = vmatmul.mubr.bf16.gmra.mxu0 %v370
        %v699 = vpop.f32.mrf.mxu0
        %v700 = vadd.f32 0.0, %v699
        %v701 = vpop.f32.mrf.mxu0
        %v702 = vpop.f32.mrf.mxu0
        %v703 = vadd.f32 0.0, %v702
        %v704 = vpop.f32.mrf.mxu0
        %705 = vmatprep.mubr.bf16.mxu0 %v374
        %706 = vmatmul.mubr.bf16.gmra.mxu0 %v373
        %v707 = vpop.f32.mrf.mxu0
        %v708 = vadd.f32 0.0, %v707
        %v709 = vpop.f32.mrf.mxu0
        %v710 = vpop.f32.mrf.mxu0
        %v711 = vadd.f32 0.0, %v710
        %v712 = vpop.f32.mrf.mxu0
        %713 = vmatprep.mubr.bf16.mxu0 %v377
        %714 = vmatmul.mubr.bf16.gmra.mxu0 %v376
        %v715 = vpop.f32.mrf.mxu0
        %v716 = vadd.f32 0.0, %v715
        %v717 = vpop.f32.mrf.mxu0
        %v718 = vpop.f32.mrf.mxu0
        %v719 = vadd.f32 0.0, %v718
        %v720 = vpop.f32.mrf.mxu0
        %721 = vmatprep.mubr.bf16.mxu0 %v380
        %722 = vmatmul.mubr.bf16.gmra.mxu0 %v379
        %v723 = vpop.f32.mrf.mxu0
        %v724 = vadd.f32 0.0, %v723
        %v725 = vpop.f32.mrf.mxu0
        %v726 = vpop.f32.mrf.mxu0
        %v727 = vadd.f32 0.0, %v726
        %v728 = vpop.f32.mrf.mxu0
        %729 = vmatprep.mubr.bf16.mxu0 %v383
        %730 = vmatmul.mubr.bf16.gmra.mxu0 %v382
        %v731 = vpop.f32.mrf.mxu0
        %v732 = vadd.f32 0.0, %v731
        %v733 = vpop.f32.mrf.mxu0
        %v734 = vpop.f32.mrf.mxu0
        %v735 = vadd.f32 0.0, %v734
        %v736 = vpop.f32.mrf.mxu0
        %737 = vdwg.mxu0
        %738 = vmatprep.subr.bf16.mxu0 0
        %739 = vmatpush1.bf16.msra.mxu0 %v552
        %740 = vmatprep.subr.bf16.mxu0 0
        %741 = vmatpush1.bf16.msra.mxu0 %v551
        %742 = vmatprep.subr.bf16.mxu0 0
        %743 = vmatpush1.bf16.msra.mxu0 %v550
        %744 = vmatprep.subr.bf16.mxu0 0
        %745 = vmatpush1.bf16.msra.mxu0 %v549
        %746 = vmatprep.subr.bf16.mxu0 0
        %747 = vmatpush1.bf16.msra.mxu0 %v548
        %748 = vmatprep.subr.bf16.mxu0 0
        %749 = vmatpush1.bf16.msra.mxu0 %v547
        %750 = vmatprep.subr.bf16.mxu0 0
        %751 = vmatpush1.bf16.msra.mxu0 %v546
        %752 = vmatprep.subr.bf16.mxu0 0
        %753 = vmatpush1.bf16.msra.mxu0 %v545
        %754 = vmatprep.subr.bf16.mxu0 0
        %755 = vmatpush2.bf16.msra.mxu0 0
        %756 = vmatprep.subr.bf16.mxu0 0
        %757 = vmatpush2.bf16.msra.mxu0 0
        %758 = vmatprep.subr.bf16.mxu0 0
        %759 = vmatpush2.bf16.msra.mxu0 0
        %760 = vmatprep.subr.bf16.mxu0 0
        %761 = vmatpush2.bf16.msra.mxu0 0
        %762 = vmatprep.subr.bf16.mxu0 0
        %763 = vmatpush2.bf16.msra.mxu0 0
        %764 = vmatprep.subr.bf16.mxu0 0
        %765 = vmatpush2.bf16.msra.mxu0 0
        %766 = vmatprep.subr.bf16.mxu0 0
        %767 = vmatpush2.bf16.msra.mxu0 0
        %768 = vmatprep.subr.bf16.mxu0 0
        %769 = vmatpush2.bf16.msra.mxu0 0
        %770 = vmatprep.mubr.bf16.mxu0 0
        %771 = vmatmul.mubr.bf16.gmra.mxu0 %v339
        %v772 = vpop.f32.mrf.mxu0
        %v773 = vadd.f32 %v612, %v772
        %v774 = vpop.f32.mrf.mxu0
        %v775 = vpop.f32.mrf.mxu0
        %v776 = vadd.f32 %v615, %v775
        %v777 = vpop.f32.mrf.mxu0
        %778 = vmatprep.mubr.bf16.mxu0 0
        %779 = vmatmul.mubr.bf16.gmra.mxu0 %v342
        %v780 = vpop.f32.mrf.mxu0
        %v781 = vadd.f32 %v620, %v780
        %v782 = vpop.f32.mrf.mxu0
        %v783 = vpop.f32.mrf.mxu0
        %v784 = vadd.f32 %v623, %v783
        %v785 = vpop.f32.mrf.mxu0
        %786 = vmatprep.mubr.bf16.mxu0 0
        %787 = vmatmul.mubr.bf16.gmra.mxu0 %v345
        %v788 = vpop.f32.mrf.mxu0
        %v789 = vadd.f32 %v628, %v788
        %v790 = vpop.f32.mrf.mxu0
        %v791 = vpop.f32.mrf.mxu0
        %v792 = vadd.f32 %v631, %v791
        %v793 = vpop.f32.mrf.mxu0
        %794 = vmatprep.mubr.bf16.mxu0 0
        %795 = vmatmul.mubr.bf16.gmra.mxu0 %v348
        %v796 = vpop.f32.mrf.mxu0
        %v797 = vadd.f32 %v636, %v796
        %v798 = vpop.f32.mrf.mxu0
        %v799 = vpop.f32.mrf.mxu0
        %v800 = vadd.f32 %v639, %v799
        %v801 = vpop.f32.mrf.mxu0
        %802 = vmatprep.mubr.bf16.mxu0 0
        %803 = vmatmul.mubr.bf16.gmra.mxu0 %v351
        %v804 = vpop.f32.mrf.mxu0
        %v805 = vadd.f32 %v644, %v804
        %v806 = vpop.f32.mrf.mxu0
        %v807 = vpop.f32.mrf.mxu0
        %v808 = vadd.f32 %v647, %v807
        %v809 = vpop.f32.mrf.mxu0
        %810 = vmatprep.mubr.bf16.mxu0 0
        %811 = vmatmul.mubr.bf16.gmra.mxu0 %v354
        %v812 = vpop.f32.mrf.mxu0
        %v813 = vadd.f32 %v652, %v812
        %v814 = vpop.f32.mrf.mxu0
        %v815 = vpop.f32.mrf.mxu0
        %v816 = vadd.f32 %v655, %v815
        %v817 = vpop.f32.mrf.mxu0
        %818 = vmatprep.mubr.bf16.mxu0 0
        %819 = vmatmul.mubr.bf16.gmra.mxu0 %v357
        %v820 = vpop.f32.mrf.mxu0
        %v821 = vadd.f32 %v660, %v820
        %v822 = vpop.f32.mrf.mxu0
        %v823 = vpop.f32.mrf.mxu0
        %v824 = vadd.f32 %v663, %v823
        %v825 = vpop.f32.mrf.mxu0
        %826 = vmatprep.mubr.bf16.mxu0 0
        %827 = vmatmul.mubr.bf16.gmra.mxu0 %v360
        %v828 = vpop.f32.mrf.mxu0
        %v829 = vadd.f32 %v668, %v828
        %v830 = vpop.f32.mrf.mxu0
        %v831 = vpop.f32.mrf.mxu0
        %v832 = vadd.f32 %v671, %v831
        %v833 = vpop.f32.mrf.mxu0
        %834 = vmatprep.mubr.bf16.mxu0 0
        %835 = vmatmul.mubr.bf16.gmra.mxu0 %v363
        %v836 = vpop.f32.mrf.mxu0
        %v837 = vadd.f32 %v676, %v836
        %v838 = vpop.f32.mrf.mxu0
        %v839 = vpop.f32.mrf.mxu0
        %v840 = vadd.f32 %v679, %v839
        %v841 = vpop.f32.mrf.mxu0
        %842 = vmatprep.mubr.bf16.mxu0 0
        %843 = vmatmul.mubr.bf16.gmra.mxu0 %v366
        %v844 = vpop.f32.mrf.mxu0
        %v845 = vadd.f32 %v684, %v844
        %v846 = vpop.f32.mrf.mxu0
        %v847 = vpop.f32.mrf.mxu0
        %v848 = vadd.f32 %v687, %v847
        %v849 = vpop.f32.mrf.mxu0
        %850 = vmatprep.mubr.bf16.mxu0 0
        %851 = vmatmul.mubr.bf16.gmra.mxu0 %v369
        %v852 = vpop.f32.mrf.mxu0
        %v853 = vadd.f32 %v692, %v852
        %v854 = vpop.f32.mrf.mxu0
        %v855 = vpop.f32.mrf.mxu0
        %v856 = vadd.f32 %v695, %v855
        %v857 = vpop.f32.mrf.mxu0
        %858 = vmatprep.mubr.bf16.mxu0 0
        %859 = vmatmul.mubr.bf16.gmra.mxu0 %v372
        %v860 = vpop.f32.mrf.mxu0
        %v861 = vadd.f32 %v700, %v860
        %v862 = vpop.f32.mrf.mxu0
        %v863 = vpop.f32.mrf.mxu0
        %v864 = vadd.f32 %v703, %v863
        %v865 = vpop.f32.mrf.mxu0
        %866 = vmatprep.mubr.bf16.mxu0 0
        %867 = vmatmul.mubr.bf16.gmra.mxu0 %v375
        %v868 = vpop.f32.mrf.mxu0
        %v869 = vadd.f32 %v708, %v868
        %v870 = vpop.f32.mrf.mxu0
        %v871 = vpop.f32.mrf.mxu0
        %v872 = vadd.f32 %v711, %v871
        %v873 = vpop.f32.mrf.mxu0
        %874 = vmatprep.mubr.bf16.mxu0 0
        %875 = vmatmul.mubr.bf16.gmra.mxu0 %v378
        %v876 = vpop.f32.mrf.mxu0
        %v877 = vadd.f32 %v716, %v876
        %v878 = vpop.f32.mrf.mxu0
        %v879 = vpop.f32.mrf.mxu0
        %v880 = vadd.f32 %v719, %v879
        %v881 = vpop.f32.mrf.mxu0
        %882 = vmatprep.mubr.bf16.mxu0 0
        %883 = vmatmul.mubr.bf16.gmra.mxu0 %v381
        %v884 = vpop.f32.mrf.mxu0
        %v885 = vadd.f32 %v724, %v884
        %v886 = vpop.f32.mrf.mxu0
        %v887 = vpop.f32.mrf.mxu0
        %v888 = vadd.f32 %v727, %v887
        %v889 = vpop.f32.mrf.mxu0
        %890 = vmatprep.mubr.bf16.mxu0 0
        %891 = vmatmul.mubr.bf16.gmra.mxu0 %v384
        %v892 = vpop.f32.mrf.mxu0
        %v893 = vadd.f32 %v732, %v892
        %v894 = vpop.f32.mrf.mxu0
        %v895 = vpop.f32.mrf.mxu0
        %v896 = vadd.f32 %v735, %v895
        %v897 = vpop.f32.mrf.mxu0
        %898 = vdwg.mxu0
        %899 = vst [vmem:[%s204] sm:$0xff] %v773
        %900 = vst [vmem:[%s204 + $0x8] sm:$0xff] %v776
        %901 = vst [vmem:[%s204 + $0x10] sm:$0xff] %v781
        %902 = vst [vmem:[%s204 + $0x18] sm:$0xff] %v784
        %903 = vst [vmem:[%s204 + $0x20] sm:$0xff] %v789
        %904 = vst [vmem:[%s204 + $0x28] sm:$0xff] %v792
        %905 = vst [vmem:[%s204 + $0x30] sm:$0xff] %v797
        %906 = vst [vmem:[%s204 + $0x38] sm:$0xff] %v800
        %907 = vst [vmem:[%s204 + $0x40] sm:$0xff] %v805
        %908 = vst [vmem:[%s204 + $0x48] sm:$0xff] %v808
        %909 = vst [vmem:[%s204 + $0x50] sm:$0xff] %v813
        %910 = vst [vmem:[%s204 + $0x58] sm:$0xff] %v816
        %911 = vst [vmem:[%s204 + $0x60] sm:$0xff] %v821
        %912 = vst [vmem:[%s204 + $0x68] sm:$0xff] %v824
        %913 = vst [vmem:[%s204 + $0x70] sm:$0xff] %v829
        %914 = vst [vmem:[%s204 + $0x78] sm:$0xff] %v832
        %915 = vst [vmem:[%s204 + $0x80] sm:$0xff] %v837
        %916 = vst [vmem:[%s204 + $0x88] sm:$0xff] %v840
        %917 = vst [vmem:[%s204 + $0x90] sm:$0xff] %v845
        %918 = vst [vmem:[%s204 + $0x98] sm:$0xff] %v848
        %919 = vst [vmem:[%s204 + $0xa0] sm:$0xff] %v853
        %920 = vst [vmem:[%s204 + $0xa8] sm:$0xff] %v856
        %921 = vst [vmem:[%s204 + $0xb0] sm:$0xff] %v861
        %922 = vst [vmem:[%s204 + $0xb8] sm:$0xff] %v864
        %923 = vst [vmem:[%s204 + $0xc0] sm:$0xff] %v869
        %924 = vst [vmem:[%s204 + $0xc8] sm:$0xff] %v872
        %925 = vst [vmem:[%s204 + $0xd0] sm:$0xff] %v877
        %926 = vst [vmem:[%s204 + $0xd8] sm:$0xff] %v880
        %927 = vst [vmem:[%s204 + $0xe0] sm:$0xff] %v885
        %928 = vst [vmem:[%s204 + $0xe8] sm:$0xff] %v888
        %929 = vst [vmem:[%s204 + $0xf0] sm:$0xff] %v893
        %930 = vst [vmem:[%s204 + $0xf8] sm:$0xff] %v896
        %v931 = vadd.f32 %v773, %v776
        %v932 = vadd.f32 %v931, %v781
        %v933 = vadd.f32 %v932, %v784
        %v934 = vadd.f32 %v933, %v789
        %v935 = vadd.f32 %v934, %v792
        %v936 = vadd.f32 %v935, %v797
        %v937 = vadd.f32 %v936, %v800
        %v938 = vadd.f32 %v937, %v805
        %v939 = vadd.f32 %v938, %v808
        %v940 = vadd.f32 %v939, %v813
        %v941 = vadd.f32 %v940, %v816
        %v942 = vadd.f32 %v941, %v821
        %v943 = vadd.f32 %v942, %v824
        %v944 = vadd.f32 %v943, %v829
        %v945 = vadd.f32 %v944, %v832
        %v946 = vadd.f32 %v945, %v837
        %v947 = vadd.f32 %v946, %v840
        %v948 = vadd.f32 %v947, %v845
        %v949 = vadd.f32 %v948, %v848
        %v950 = vadd.f32 %v949, %v853
        %v951 = vadd.f32 %v950, %v856
        %v952 = vadd.f32 %v951, %v861
        %v953 = vadd.f32 %v952, %v864
        %v954 = vadd.f32 %v953, %v869
        %v955 = vadd.f32 %v954, %v872
        %v956 = vadd.f32 %v955, %v877
        %v957 = vadd.f32 %v956, %v880
        %v958 = vadd.f32 %v957, %v885
        %v959 = vadd.f32 %v958, %v888
        %v960 = vadd.f32 %v959, %v893
        %v961 = vadd.f32 %v960, %v896
        %v962 = vrot.slane %v961, 4
        %v963 = vadd.f32 %v961, %v962
        %v964 = vrot.slane %v963, 2
        %v965 = vadd.f32 %v963, %v964
        %v966 = vrot.slane %v965, 1
        %v967 = vadd.f32 %v965, %v966
        %968 = vst [vmem:[%s239] sm:$0xff] %v967
        %s969 = sand.u32 %s91, 1
        %s970 = sand.u32 %s91, 1
        %s971 = smul.addr %s970, 256
        %s972 = scalar_lea.vmem [#allocation2], %s971
        %p973 = scmp.lt.s32.totalorder %s20, 0
        %s974 = scalar_select %p973, %s20, 0
        %p975 = scmp.lt.s32.totalorder %s19, 1
        %s976 = scalar_select %p975, %s19, 1
        %s977 = smul.addr %s974, 2
        %s978 = sadd.s32 %s976, %s977
        %s979 = smul.addr %s978, 8
        %s980 = scalar_lea.vmem %s3, %s979
        // Predicated region
        $region29: #{stack_gcn_encoder_forward.8} parent=27 // pred_check
          %p981 = pneg %p101
        $region30: #{stack_gcn_encoder_forward.8} parent=27 // pred_check_branch
          %983 = sbr.rel (%p981) target = $region32
        $region31: #{stack_gcn_encoder_forward.8} parent=27 // pred_region
          %s984 = smul.u32 32, %s20
          %s985 = smul.addr %s984, 2
          %s986 = sadd.s32 %s19, %s985
          %s987 = smul.addr %s986, 8
          %s988 = scalar_lea.vmem %s2, %s987
          // Predicated region
          $region33: #{stack_gcn_encoder_forward.8} parent=31 // pred_check
            _
          $region34: #{stack_gcn_encoder_forward.8} parent=31 // pred_check_branch
            %990 = sbr.rel (0) target = $region36
          $region35: #{stack_gcn_encoder_forward.8} parent=31 // pred_region
            // Predicated region
            $region37: #{stack_gcn_encoder_forward.8} parent=35 // pred_check
              _
            $region38: #{stack_gcn_encoder_forward.8} parent=35 // pred_check_branch
              %992 = sbr.rel (0) target = $region40
            $region39: #{stack_gcn_encoder_forward.8} parent=35 // pred_region
              // Predicated region
              $region52: #{stack_gcn_encoder_forward.8} parent=39 // pred_check
                _
              $region53: #{stack_gcn_encoder_forward.8} parent=39 // pred_check_branch
                %1070 = sbr.rel (0) target = $region55
              $region54: #{stack_gcn_encoder_forward.8} parent=39 // pred_region
                loop: start=0, step=1, limit=1
                $region56: #{stack_gcn_encoder_forward.8} parent=54 // loop_pre_header
                  _
                $region57: #{stack_gcn_encoder_forward.8} parent=54 // loop_header
                  %s1072 = sphi 0, %s1076
                  %p1073 = scmp.ge.s32.totalorder %s1072, 1
                  %s1077 = sphi %s972, %s972
                  %s1078 = sphi %s988, %s988
                $region58: #{stack_gcn_encoder_forward.8} parent=54 // loop_header_branch
                  %1075 = sbr.rel (%p1073) target = $region62
                $region59: #{stack_gcn_encoder_forward.8} parent=54 // loop_body
                  %v1079 = vld [vmem:[%s1077] sm:$0xff]
                  %1080 = vst [vmem:[%s1078] sm:$0xff] %v1079
                  %v1081 = vld [vmem:[%s1077 + $0x8] sm:$0xff]
                  %1082 = vst [vmem:[%s1078 + $0x10] sm:$0xff] %v1081
                  %v1083 = vld [vmem:[%s1077 + $0x10] sm:$0xff]
                  %1084 = vst [vmem:[%s1078 + $0x20] sm:$0xff] %v1083
                  %v1085 = vld [vmem:[%s1077 + $0x18] sm:$0xff]
                  %1086 = vst [vmem:[%s1078 + $0x30] sm:$0xff] %v1085
                  %v1087 = vld [vmem:[%s1077 + $0x20] sm:$0xff]
                  %1088 = vst [vmem:[%s1078 + $0x40] sm:$0xff] %v1087
                  %v1089 = vld [vmem:[%s1077 + $0x28] sm:$0xff]
                  %1090 = vst [vmem:[%s1078 + $0x50] sm:$0xff] %v1089
                  %v1091 = vld [vmem:[%s1077 + $0x30] sm:$0xff]
                  %1092 = vst [vmem:[%s1078 + $0x60] sm:$0xff] %v1091
                  %v1093 = vld [vmem:[%s1077 + $0x38] sm:$0xff]
                  %1094 = vst [vmem:[%s1078 + $0x70] sm:$0xff] %v1093
                  %v1095 = vld [vmem:[%s1077 + $0x40] sm:$0xff]
                  %1096 = vst [vmem:[%s1078 + $0x80] sm:$0xff] %v1095
                  %v1097 = vld [vmem:[%s1077 + $0x48] sm:$0xff]
                  %1098 = vst [vmem:[%s1078 + $0x90] sm:$0xff] %v1097
                  %v1099 = vld [vmem:[%s1077 + $0x50] sm:$0xff]
                  %1100 = vst [vmem:[%s1078 + $0xa0] sm:$0xff] %v1099
                  %v1101 = vld [vmem:[%s1077 + $0x58] sm:$0xff]
                  %1102 = vst [vmem:[%s1078 + $0xb0] sm:$0xff] %v1101
                  %v1103 = vld [vmem:[%s1077 + $0x60] sm:$0xff]
                  %1104 = vst [vmem:[%s1078 + $0xc0] sm:$0xff] %v1103
                  %v1105 = vld [vmem:[%s1077 + $0x68] sm:$0xff]
                  %1106 = vst [vmem:[%s1078 + $0xd0] sm:$0xff] %v1105
                  %v1107 = vld [vmem:[%s1077 + $0x70] sm:$0xff]
                  %1108 = vst [vmem:[%s1078 + $0xe0] sm:$0xff] %v1107
                  %v1109 = vld [vmem:[%s1077 + $0x78] sm:$0xff]
                  %1110 = vst [vmem:[%s1078 + $0xf0] sm:$0xff] %v1109
                  %v1111 = vld [vmem:[%s1077 + $0x80] sm:$0xff]
                  %1112 = vst [vmem:[%s1078 + $0x100] sm:$0xff] %v1111
                  %v1113 = vld [vmem:[%s1077 + $0x88] sm:$0xff]
                  %1114 = vst [vmem:[%s1078 + $0x110] sm:$0xff] %v1113
                  %v1115 = vld [vmem:[%s1077 + $0x90] sm:$0xff]
                  %1116 = vst [vmem:[%s1078 + $0x120] sm:$0xff] %v1115
                  %v1117 = vld [vmem:[%s1077 + $0x98] sm:$0xff]
                  %1118 = vst [vmem:[%s1078 + $0x130] sm:$0xff] %v1117
                  %v1119 = vld [vmem:[%s1077 + $0xa0] sm:$0xff]
                  %1120 = vst [vmem:[%s1078 + $0x140] sm:$0xff] %v1119
                  %v1121 = vld [vmem:[%s1077 + $0xa8] sm:$0xff]
                  %1122 = vst [vmem:[%s1078 + $0x150] sm:$0xff] %v1121
                  %v1123 = vld [vmem:[%s1077 + $0xb0] sm:$0xff]
                  %1124 = vst [vmem:[%s1078 + $0x160] sm:$0xff] %v1123
                  %v1125 = vld [vmem:[%s1077 + $0xb8] sm:$0xff]
                  %1126 = vst [vmem:[%s1078 + $0x170] sm:$0xff] %v1125
                  %v1127 = vld [vmem:[%s1077 + $0xc0] sm:$0xff]
                  %1128 = vst [vmem:[%s1078 + $0x180] sm:$0xff] %v1127
                  %v1129 = vld [vmem:[%s1077 + $0xc8] sm:$0xff]
                  %1130 = vst [vmem:[%s1078 + $0x190] sm:$0xff] %v1129
                  %v1131 = vld [vmem:[%s1077 + $0xd0] sm:$0xff]
                  %1132 = vst [vmem:[%s1078 + $0x1a0] sm:$0xff] %v1131
                  %v1133 = vld [vmem:[%s1077 + $0xd8] sm:$0xff]
                  %1134 = vst [vmem:[%s1078 + $0x1b0] sm:$0xff] %v1133
                  %v1135 = vld [vmem:[%s1077 + $0xe0] sm:$0xff]
                  %1136 = vst [vmem:[%s1078 + $0x1c0] sm:$0xff] %v1135
                  %v1137 = vld [vmem:[%s1077 + $0xe8] sm:$0xff]
                  %1138 = vst [vmem:[%s1078 + $0x1d0] sm:$0xff] %v1137
                  %v1139 = vld [vmem:[%s1077 + $0xf0] sm:$0xff]
                  %1140 = vst [vmem:[%s1078 + $0x1e0] sm:$0xff] %v1139
                  %v1141 = vld [vmem:[%s1077 + $0xf8] sm:$0xff]
                  %1142 = vst [vmem:[%s1078 + $0x1f0] sm:$0xff] %v1141
                $region60: #{stack_gcn_encoder_forward.8} parent=54 // loop_footer
                  %s1076 = sadd.s32 1, %s1072
                $region61: #{stack_gcn_encoder_forward.8} parent=54 // loop_footer_branch
                  %1071 = sbr.rel target = $region57
                $region62: #{stack_gcn_encoder_forward.8} parent=54 // loop_exit
                  _
              $region55: #{stack_gcn_encoder_forward.8} parent=39 // pred_fallthru
                _
              // Predicated region
              $region63: #{stack_gcn_encoder_forward.8} parent=39 // pred_check
                _
              $region64: #{stack_gcn_encoder_forward.8} parent=39 // pred_check_branch
                %1144 = sbr.rel target = $region66
              $region65: #{stack_gcn_encoder_forward.8} parent=39 // pred_region
                _
              $region66: #{stack_gcn_encoder_forward.8} parent=39 // pred_fallthru
                _
            $region40: #{stack_gcn_encoder_forward.8} parent=35 // pred_fallthru
              _
            // Predicated region
            $region41: #{stack_gcn_encoder_forward.8} parent=35 // pred_check
              _
            $region42: #{stack_gcn_encoder_forward.8} parent=35 // pred_check_branch
              %994 = sbr.rel target = $region44
            $region43: #{stack_gcn_encoder_forward.8} parent=35 // pred_region
              %s996 = ssub.s32 256, 1
              loop: start=0, step=1, limit=1
              $region45: #{stack_gcn_encoder_forward.8} parent=43 // loop_pre_header
                _
              $region46: #{stack_gcn_encoder_forward.8} parent=43 // loop_header
                %s998 = sphi 0, %s1002
                %p999 = scmp.ge.s32.totalorder %s998, 1
                %s1003 = sphi %s972, %s972
                %s1004 = sphi %s988, %s988
              $region47: #{stack_gcn_encoder_forward.8} parent=43 // loop_header_branch
                %1001 = sbr.rel (%p999) target = $region51
              $region48: #{stack_gcn_encoder_forward.8} parent=43 // loop_body
                %v1005 = vld [vmem:[%s1003] sm:%s996]
                %1006 = vst [vmem:[%s1004] sm:%s996] %v1005
                %v1007 = vld [vmem:[%s1003 + $0x8] sm:%s996]
                %1008 = vst [vmem:[%s1004 + $0x10] sm:%s996] %v1007
                %v1009 = vld [vmem:[%s1003 + $0x10] sm:%s996]
                %1010 = vst [vmem:[%s1004 + $0x20] sm:%s996] %v1009
                %v1011 = vld [vmem:[%s1003 + $0x18] sm:%s996]
                %1012 = vst [vmem:[%s1004 + $0x30] sm:%s996] %v1011
                %v1013 = vld [vmem:[%s1003 + $0x20] sm:%s996]
                %1014 = vst [vmem:[%s1004 + $0x40] sm:%s996] %v1013
                %v1015 = vld [vmem:[%s1003 + $0x28] sm:%s996]
                %1016 = vst [vmem:[%s1004 + $0x50] sm:%s996] %v1015
                %v1017 = vld [vmem:[%s1003 + $0x30] sm:%s996]
                %1018 = vst [vmem:[%s1004 + $0x60] sm:%s996] %v1017
                %v1019 = vld [vmem:[%s1003 + $0x38] sm:%s996]
                %1020 = vst [vmem:[%s1004 + $0x70] sm:%s996] %v1019
                %v1021 = vld [vmem:[%s1003 + $0x40] sm:%s996]
                %1022 = vst [vmem:[%s1004 + $0x80] sm:%s996] %v1021
                %v1023 = vld [vmem:[%s1003 + $0x48] sm:%s996]
                %1024 = vst [vmem:[%s1004 + $0x90] sm:%s996] %v1023
                %v1025 = vld [vmem:[%s1003 + $0x50] sm:%s996]
                %1026 = vst [vmem:[%s1004 + $0xa0] sm:%s996] %v1025
                %v1027 = vld [vmem:[%s1003 + $0x58] sm:%s996]
                %1028 = vst [vmem:[%s1004 + $0xb0] sm:%s996] %v1027
                %v1029 = vld [vmem:[%s1003 + $0x60] sm:%s996]
                %1030 = vst [vmem:[%s1004 + $0xc0] sm:%s996] %v1029
                %v1031 = vld [vmem:[%s1003 + $0x68] sm:%s996]
                %1032 = vst [vmem:[%s1004 + $0xd0] sm:%s996] %v1031
                %v1033 = vld [vmem:[%s1003 + $0x70] sm:%s996]
                %1034 = vst [vmem:[%s1004 + $0xe0] sm:%s996] %v1033
                %v1035 = vld [vmem:[%s1003 + $0x78] sm:%s996]
                %1036 = vst [vmem:[%s1004 + $0xf0] sm:%s996] %v1035
                %v1037 = vld [vmem:[%s1003 + $0x80] sm:%s996]
                %1038 = vst [vmem:[%s1004 + $0x100] sm:%s996] %v1037
                %v1039 = vld [vmem:[%s1003 + $0x88] sm:%s996]
                %1040 = vst [vmem:[%s1004 + $0x110] sm:%s996] %v1039
                %v1041 = vld [vmem:[%s1003 + $0x90] sm:%s996]
                %1042 = vst [vmem:[%s1004 + $0x120] sm:%s996] %v1041
                %v1043 = vld [vmem:[%s1003 + $0x98] sm:%s996]
                %1044 = vst [vmem:[%s1004 + $0x130] sm:%s996] %v1043
                %v1045 = vld [vmem:[%s1003 + $0xa0] sm:%s996]
                %1046 = vst [vmem:[%s1004 + $0x140] sm:%s996] %v1045
                %v1047 = vld [vmem:[%s1003 + $0xa8] sm:%s996]
                %1048 = vst [vmem:[%s1004 + $0x150] sm:%s996] %v1047
                %v1049 = vld [vmem:[%s1003 + $0xb0] sm:%s996]
                %1050 = vst [vmem:[%s1004 + $0x160] sm:%s996] %v1049
                %v1051 = vld [vmem:[%s1003 + $0xb8] sm:%s996]
                %1052 = vst [vmem:[%s1004 + $0x170] sm:%s996] %v1051
                %v1053 = vld [vmem:[%s1003 + $0xc0] sm:%s996]
                %1054 = vst [vmem:[%s1004 + $0x180] sm:%s996] %v1053
                %v1055 = vld [vmem:[%s1003 + $0xc8] sm:%s996]
                %1056 = vst [vmem:[%s1004 + $0x190] sm:%s996] %v1055
                %v1057 = vld [vmem:[%s1003 + $0xd0] sm:%s996]
                %1058 = vst [vmem:[%s1004 + $0x1a0] sm:%s996] %v1057
                %v1059 = vld [vmem:[%s1003 + $0xd8] sm:%s996]
                %1060 = vst [vmem:[%s1004 + $0x1b0] sm:%s996] %v1059
                %v1061 = vld [vmem:[%s1003 + $0xe0] sm:%s996]
                %1062 = vst [vmem:[%s1004 + $0x1c0] sm:%s996] %v1061
                %v1063 = vld [vmem:[%s1003 + $0xe8] sm:%s996]
                %1064 = vst [vmem:[%s1004 + $0x1d0] sm:%s996] %v1063
                %v1065 = vld [vmem:[%s1003 + $0xf0] sm:%s996]
                %1066 = vst [vmem:[%s1004 + $0x1e0] sm:%s996] %v1065
                %v1067 = vld [vmem:[%s1003 + $0xf8] sm:%s996]
                %1068 = vst [vmem:[%s1004 + $0x1f0] sm:%s996] %v1067
              $region49: #{stack_gcn_encoder_forward.8} parent=43 // loop_footer
                %s1002 = sadd.s32 1, %s998
              $region50: #{stack_gcn_encoder_forward.8} parent=43 // loop_footer_branch
                %997 = sbr.rel target = $region46
              $region51: #{stack_gcn_encoder_forward.8} parent=43 // loop_exit
                _
            $region44: #{stack_gcn_encoder_forward.8} parent=35 // pred_fallthru
              _
          $region36: #{stack_gcn_encoder_forward.8} parent=31 // pred_fallthru
            _
          %1145 = vnop
        $region32: #{stack_gcn_encoder_forward.8} parent=27 // pred_fallthru
          _
        // Predicated region
        $region67: #{stack_gcn_encoder_forward.8} parent=27 // pred_check
          %p1146 = pneg %p129
        $region68: #{stack_gcn_encoder_forward.8} parent=27 // pred_check_branch
          %1148 = sbr.rel (%p1146) target = $region70
        $region69: #{stack_gcn_encoder_forward.8} parent=27 // pred_region
          _
        $region70: #{stack_gcn_encoder_forward.8} parent=27 // pred_fallthru
          _
      $region28: #{stack_gcn_encoder_forward.8} parent=5 // pred_fallthru
        _
      %p1149 = scmp.le.s32.totalorder 2, %s10
      // Predicated region
      $region71: #{stack_gcn_encoder_forward.8} parent=5 // pred_check
        %p1150 = pneg %p1149
      $region72: #{stack_gcn_encoder_forward.8} parent=5 // pred_check_branch
        %1152 = sbr.rel (%p1150) target = $region74
      $region73: #{stack_gcn_encoder_forward.8} parent=5 // pred_region
        %s1153 = ssub.s32 %s10, 2
        // Predicated region
        $region75: #{stack_gcn_encoder_forward.8} parent=73 // pred_check
          %p1154 = pneg %p107
        $region76: #{stack_gcn_encoder_forward.8} parent=73 // pred_check_branch
          %1156 = sbr.rel (%p1154) target = $region78
        $region77: #{stack_gcn_encoder_forward.8} parent=73 // pred_region
          %s1157 = sand.u32 %s92, 1
          %s1158 = sand.u32 %s92, 1
          %s1159 = smul.addr %s1158, 256
          %s1160 = scalar_lea.vmem [#allocation2], %s1159
        $region78: #{stack_gcn_encoder_forward.8} parent=73 // pred_fallthru
          _
        // Predicated region
        $region79: #{stack_gcn_encoder_forward.8} parent=73 // pred_check
          %p1161 = pneg %p135
        $region80: #{stack_gcn_encoder_forward.8} parent=73 // pred_check_branch
          %1163 = sbr.rel (%p1161) target = $region82
        $region81: #{stack_gcn_encoder_forward.8} parent=73 // pred_region
          %p1164 = scmp.lt.s32.totalorder %s22, 0
          %s1165 = scalar_select %p1164, %s22, 0
          %p1166 = scmp.lt.s32.totalorder %s21, 1
          %s1167 = scalar_select %p1166, %s21, 1
          %s1168 = smul.addr %s1165, 2
          %s1169 = sadd.s32 %s1167, %s1168
          %s1170 = smul.addr %s1169, 8
          %s1171 = scalar_lea.vmem %s3, %s1170
        $region82: #{stack_gcn_encoder_forward.8} parent=73 // pred_fallthru
          _
      $region74: #{stack_gcn_encoder_forward.8} parent=5 // pred_fallthru
        _
    $region6: #{stack_gcn_encoder_forward.8} parent=1 // loop_footer
      %s14 = sadd.s32 1, %s10
    $region7: #{stack_gcn_encoder_forward.8} parent=1 // loop_footer_branch
      %9 = sbr.rel target = $region3
    $region8: #{stack_gcn_encoder_forward.8} parent=1 // loop_exit
      _

</llo_original>
